<compile_context>
chip_gen: v6e
topology: v6e:2x2x1
jax: 0.10.0
libtpu: 0.0.40
codegen_flags: <defaults>
</compile_context>

<pallas_src>
import functools

import jax
import jax.numpy as jnp
from jax.experimental import pallas as pl
from jax.experimental.pallas import tpu as pltpu


def _pick_row_tile(h_out, w_out, batch, target_m=4096):
    """Largest divisor of h_out such that the per-step matmul M (= th*w_out)
    stays near target_m, the output block is (8,128)-legal, and (for batch==1)
    there are >= 2 parallel grid steps for 2-TensorCore chips."""
    cap = max(1, min(h_out, max(1, target_m // max(1, w_out))))
    if batch == 1 and h_out >= 2:
        cap = min(cap, h_out // 2)
    for th in range(cap, 0, -1):
        if h_out % th == 0 and ((th * w_out) % 8 == 0 or th == h_out):
            return th
    return h_out


def _conv3x3_bn_relu_kernel(x_ref, w_ref, b_ref, o_ref, *,
                            th, W_out, C_in, C_out, stride):
    """One (image, row-tile) grid step.

    x_ref: (Hp, Wp, C_in)   bf16  whole padded image (resident across row tiles)
    w_ref: (9, C_in, C_out) bf16  BN-scale-folded conv weights (grid resident)
    b_ref: (1, C_out)       f32   folded BN bias (grid resident)
    o_ref: (th*W_out, C_out)      output row tile (flattened spatial)
    """
    r = pl.program_id(1)
    h0 = r * (th * stride)            # first padded input row of this tile
    acc = jnp.zeros((th * W_out, C_out), jnp.float32)
    for di in range(3):
        for dj in range(3):
            if stride == 1:
                xt = x_ref[pl.ds(h0 + di, th), dj:dj + W_out, :]
            else:
                xt = x_ref[pl.ds(h0 + di, th, stride=stride),
                           pl.ds(dj, W_out, stride=stride), :]
            p = xt.reshape(th * W_out, C_in)
            acc = acc + jnp.dot(p, w_ref[di * 3 + dj],
                                preferred_element_type=jnp.float32)
    y = jnp.maximum(acc + b_ref[...], 0.0)
    o_ref[...] = y.astype(o_ref.dtype)


def mobilenetv1_block_nhwc(x_nhwc, weight, gamma, beta, running_mean,
                           running_var, *, stride=1, eps=1e-5,
                           compute_dtype=jnp.bfloat16, out_dtype=None,
                           target_rows_per_step=4096):
    """Conv2d(k=3, stride, pad=1, bias=False) + BatchNorm2d(eval) + ReLU.

    NHWC in / NHWC out.  Use directly when chaining blocks to avoid per-block
    layout transposes (output defaults to bf16 on this path).
    """
    N, H, W, C_in = x_nhwc.shape
    C_out = weight.shape[0]
    k, pad = 3, 1
    H_out = (H + 2 * pad - k) // stride + 1
    W_out = (W + 2 * pad - k) // stride + 1
    Hp, Wp = H + 2 * pad, W + 2 * pad
    if out_dtype is None:
        out_dtype = jnp.bfloat16     # cheap writeback / chaining default

    # Cast first (halves pad + DMA bytes), then zero-pad spatially.
    x_pad = jnp.pad(x_nhwc.astype(compute_dtype),
                    ((0, 0), (pad, pad), (pad, pad), (0, 0)))

    # Fold inference BatchNorm into the conv weight / bias.
    inv_std = 1.0 / jnp.sqrt(running_var.astype(jnp.float32) + eps)
    scale = gamma.astype(jnp.float32) * inv_std
    bias = beta.astype(jnp.float32) - running_mean.astype(jnp.float32) * scale
    # (C_out, C_in, kh, kw) -> (kh*kw, C_in, C_out), scaled per output channel.
    w9 = jnp.transpose(weight.astype(jnp.float32), (2, 3, 1, 0)).reshape(
        k * k, C_in, C_out)
    w9 = (w9 * scale[None, None, :]).astype(compute_dtype)
    bias2d = bias.reshape(1, C_out)

    th = _pick_row_tile(H_out, W_out, N, target_m=target_rows_per_step)
    n_row_tiles = H_out // th

    kernel = functools.partial(_conv3x3_bn_relu_kernel, th=th, W_out=W_out,
                               C_in=C_in, C_out=C_out, stride=stride)

    # VMEM budget derived from the actual resident buffers (+ slack for the
    # tap-slice copies and the f32 accumulator), clamped under v7x's 64 MiB.
    x_blk = Hp * Wp * C_in * 2
    w_blk = k * k * C_in * C_out * 2
    o_blk = th * W_out * C_out * jnp.dtype(out_dtype).itemsize
    acc_blk = th * W_out * C_out * 4
    tap_blk = th * W_out * C_in * 2
    needed = 2 * x_blk + w_blk + 2 * o_blk + acc_blk + 2 * tap_blk + C_out * 4
    vmem_limit = int(min(56 * 2**20, max(32 * 2**20, 2 * needed + 8 * 2**20)))

    out = pl.pallas_call(
        kernel,
        out_shape=jax.ShapeDtypeStruct((N, H_out * W_out, C_out), out_dtype),
        grid_spec=pltpu.PrefetchScalarGridSpec(
            num_scalar_prefetch=0,
            grid=(N, n_row_tiles),
            in_specs=[
                # Whole padded image; block index constant along the row-tile
                # axis -> fetched from HBM exactly once per image.
                pl.BlockSpec((None, Hp, Wp, C_in), lambda n, r: (n, 0, 0, 0)),
                # Entire folded weight / bias resident in VMEM for the grid.
                pl.BlockSpec((k * k, C_in, C_out), lambda n, r: (0, 0, 0)),
                pl.BlockSpec((1, C_out), lambda n, r: (0, 0)),
            ],
            out_specs=pl.BlockSpec((None, th * W_out, C_out),
                                   lambda n, r: (n, r, 0)),
        ),
        compiler_params=pltpu.CompilerParams(
            dimension_semantics=("parallel", "parallel"),
            vmem_limit_bytes=vmem_limit,
        ),
    )(x_pad, w9, bias2d)

    return out.reshape(N, H_out, W_out, C_out)


def mobilenetv1_block(x, weight, gamma, beta, running_mean, running_var,
                      stride=1, eps=1e-5, **kwargs):
    """PyTorch-layout (NCHW) wrapper around the NHWC kernel."""
    kwargs.setdefault("out_dtype", x.dtype)   # module-faithful output dtype
    x_nhwc = jnp.transpose(x, (0, 2, 3, 1))   # NCHW -> NHWC
    y = mobilenetv1_block_nhwc(x_nhwc, weight, gamma, beta, running_mean,
                               running_var, stride=stride, eps=eps, **kwargs)
    return jnp.transpose(y, (0, 3, 1, 2))     # NHWC -> NCHW


def _reference(x, weight, gamma, beta, running_mean, running_var,
               stride=1, eps=1e-5):
    """Module-faithful f32 reference: conv -> BN(eval) -> ReLU."""
    y = jax.lax.conv_general_dilated(
        x.astype(jnp.float32), weight.astype(jnp.float32),
        window_strides=(stride, stride), padding=((1, 1), (1, 1)),
        dimension_numbers=("NCHW", "OIHW", "NCHW"),
        precision=jax.lax.Precision.HIGHEST)
    inv_std = 1.0 / jnp.sqrt(running_var + eps)
    y = (y - running_mean[None, :, None, None]) * inv_std[None, :, None, None]
    y = y * gamma[None, :, None, None] + beta[None, :, None, None]
    return jnp.maximum(y, 0.0)


def _reference_bf16_operands(x, weight, gamma, beta, running_mean, running_var,
                             stride=1, eps=1e-5):
    """Reference using the same bf16-rounded operands the kernel consumes."""
    inv_std = 1.0 / jnp.sqrt(running_var + eps)
    scale = gamma * inv_std
    bias = beta - running_mean * scale
    xr = x.astype(jnp.bfloat16).astype(jnp.float32)
    wr = (weight.astype(jnp.float32) * scale[:, None, None, None]
          ).astype(jnp.bfloat16).astype(jnp.float32)
    y = jax.lax.conv_general_dilated(
        xr, wr, window_strides=(stride, stride), padding=((1, 1), (1, 1)),
        dimension_numbers=("NCHW", "OIHW", "NCHW"),
        precision=jax.lax.Precision.HIGHEST)
    return jnp.maximum(y + bias[None, :, None, None], 0.0)


if __name__ == "__main__":
    # Small shapes consistent with the module: in_channels=4, out_channels=8.
    N, C_in, H, W = 2, 4, 16, 16
    C_out, stride = 8, 1

    key = jax.random.PRNGKey(0)
    kx, kw, kg, kb, km, kv = jax.random.split(key, 6)

    x = jax.random.normal(kx, (N, C_in, H, W), dtype=jnp.float32)
    weight = jax.random.normal(kw, (C_out, C_in, 3, 3), dtype=jnp.float32) * 0.1
    gamma = jax.random.uniform(kg, (C_out,), minval=0.5, maxval=1.5, dtype=jnp.float32)
    beta = jax.random.normal(kb, (C_out,), dtype=jnp.float32) * 0.1
    running_mean = jax.random.normal(km, (C_out,), dtype=jnp.float32) * 0.1
    running_var = jax.random.uniform(kv, (C_out,), minval=0.5, maxval=1.5, dtype=jnp.float32)

    fn = jax.jit(functools.partial(mobilenetv1_block, stride=stride))
    out = jax.block_until_ready(fn(x, weight, gamma, beta, running_mean, running_var))
    assert out.shape == (N, C_out, H, W)

    # Tight check: identical (bf16-rounded) operands -> only f32 summation-order noise.
    ref_tight = _reference_bf16_operands(x, weight, gamma, beta,
                                         running_mean, running_var, stride=stride)
    assert jnp.allclose(out, ref_tight, atol=2e-3, rtol=2e-3), \
        float(jnp.max(jnp.abs(out - ref_tight)))

    # Module-faithful f32 reference: loose tolerance accounts for bf16 operand rounding.
    ref = _reference(x, weight, gamma, beta, running_mean, running_var, stride=stride)
    assert jnp.allclose(out, ref, atol=5e-2, rtol=5e-2), \
        float(jnp.max(jnp.abs(out - ref)))

    print("KERNEL_OK")
</pallas_src>

<mosaic_0001>
module attributes {stable_mosaic.version = 11 : i64} {
  func.func @_conv3x3_bn_relu_kernel(%arg0: i32, %arg1: i32, %arg2: memref<1x18x18x4xbf16, #tpu.memory_space<vmem>>, %arg3: memref<9x4x8xbf16, #tpu.memory_space<vmem>>, %arg4: memref<1x8xf32, #tpu.memory_space<vmem>>, %arg5: memref<1x256x8xf32, #tpu.memory_space<vmem>>) attributes {dimension_semantics = [#tpu.dimension_semantics<parallel>, #tpu.dimension_semantics<parallel>], iteration_bounds = array<i64: 2, 1>, scalar_prefetch = 0 : i64, scratch_operands = 0 : i64, tpu.core_type = #tpu.core_type<tc>, window_params = [{transform_indices = @transform_0, window_bounds = array<i64: 1, 18, 18, 4>}, {pipeline_mode = #tpu.pipeline_mode<synchronous>, transform_indices = @transform_1, window_bounds = array<i64: 9, 4, 8>}, {pipeline_mode = #tpu.pipeline_mode<synchronous>, transform_indices = @transform_2, window_bounds = array<i64: 1, 8>}, {transform_indices = @transform_3, window_bounds = array<i64: 1, 256, 8>}]} {
    %c16_i32 = arith.constant 16 : i32
    %0 = arith.muli %arg1, %c16_i32 : i32
    %cst = arith.constant 0.000000e+00 : f32
    %1 = vector.broadcast %cst : f32 to vector<256x8xf32>
    %c0_i32 = arith.constant 0 : i32
    %2 = arith.addi %0, %c0_i32 : i32
    %c0 = arith.constant 0 : index
    %3 = arith.index_cast %2 : i32 to index
    %c0_0 = arith.constant 0 : index
    %c0_1 = arith.constant 0 : index
    %4 = vector.load %arg2[%c0, %3, %c0_0, %c0_1] : memref<1x18x18x4xbf16, #tpu.memory_space<vmem>>, vector<1x16x16x4xbf16>
    %5 = vector.shape_cast %4 : vector<1x16x16x4xbf16> to vector<16x16x4xbf16>
    %6 = vector.shape_cast %5 : vector<16x16x4xbf16> to vector<256x4xbf16>
    %c0_2 = arith.constant 0 : index
    %c0_3 = arith.constant 0 : index
    %c0_4 = arith.constant 0 : index
    %7 = vector.load %arg3[%c0_2, %c0_3, %c0_4] : memref<9x4x8xbf16, #tpu.memory_space<vmem>>, vector<1x4x8xbf16>
    %8 = vector.shape_cast %7 : vector<1x4x8xbf16> to vector<4x8xbf16>
    %cst_5 = arith.constant dense<0.000000e+00> : vector<256x8xf32>
    %9 = tpu.matmul %6, %8, %cst_5 {dimension_numbers = #tpu.dot_dimension_numbers<[1], [0], [0], [1], [0, 0, 1, 1], [], []>} : vector<256x4xbf16>, vector<4x8xbf16>, vector<256x8xf32> -> vector<256x8xf32>
    %10 = arith.addf %1, %9 : vector<256x8xf32>
    %c0_i32_6 = arith.constant 0 : i32
    %11 = arith.addi %0, %c0_i32_6 : i32
    %c0_7 = arith.constant 0 : index
    %12 = arith.index_cast %11 : i32 to index
    %c1 = arith.constant 1 : index
    %c0_8 = arith.constant 0 : index
    %13 = vector.load %arg2[%c0_7, %12, %c1, %c0_8] : memref<1x18x18x4xbf16, #tpu.memory_space<vmem>>, vector<1x16x16x4xbf16>
    %14 = vector.shape_cast %13 : vector<1x16x16x4xbf16> to vector<16x16x4xbf16>
    %15 = vector.shape_cast %14 : vector<16x16x4xbf16> to vector<256x4xbf16>
    %c1_9 = arith.constant 1 : index
    %c0_10 = arith.constant 0 : index
    %c0_11 = arith.constant 0 : index
    %16 = vector.load %arg3[%c1_9, %c0_10, %c0_11] : memref<9x4x8xbf16, #tpu.memory_space<vmem>>, vector<1x4x8xbf16>
    %17 = vector.shape_cast %16 : vector<1x4x8xbf16> to vector<4x8xbf16>
    %cst_12 = arith.constant dense<0.000000e+00> : vector<256x8xf32>
    %18 = tpu.matmul %15, %17, %cst_12 {dimension_numbers = #tpu.dot_dimension_numbers<[1], [0], [0], [1], [0, 0, 1, 1], [], []>} : vector<256x4xbf16>, vector<4x8xbf16>, vector<256x8xf32> -> vector<256x8xf32>
    %19 = arith.addf %10, %18 : vector<256x8xf32>
    %c0_i32_13 = arith.constant 0 : i32
    %20 = arith.addi %0, %c0_i32_13 : i32
    %c0_14 = arith.constant 0 : index
    %21 = arith.index_cast %20 : i32 to index
    %c2 = arith.constant 2 : index
    %c0_15 = arith.constant 0 : index
    %22 = vector.load %arg2[%c0_14, %21, %c2, %c0_15] : memref<1x18x18x4xbf16, #tpu.memory_space<vmem>>, vector<1x16x16x4xbf16>
    %23 = vector.shape_cast %22 : vector<1x16x16x4xbf16> to vector<16x16x4xbf16>
    %24 = vector.shape_cast %23 : vector<16x16x4xbf16> to vector<256x4xbf16>
    %c2_16 = arith.constant 2 : index
    %c0_17 = arith.constant 0 : index
    %c0_18 = arith.constant 0 : index
    %25 = vector.load %arg3[%c2_16, %c0_17, %c0_18] : memref<9x4x8xbf16, #tpu.memory_space<vmem>>, vector<1x4x8xbf16>
    %26 = vector.shape_cast %25 : vector<1x4x8xbf16> to vector<4x8xbf16>
    %cst_19 = arith.constant dense<0.000000e+00> : vector<256x8xf32>
    %27 = tpu.matmul %24, %26, %cst_19 {dimension_numbers = #tpu.dot_dimension_numbers<[1], [0], [0], [1], [0, 0, 1, 1], [], []>} : vector<256x4xbf16>, vector<4x8xbf16>, vector<256x8xf32> -> vector<256x8xf32>
    %28 = arith.addf %19, %27 : vector<256x8xf32>
    %c1_i32 = arith.constant 1 : i32
    %29 = arith.addi %0, %c1_i32 : i32
    %c0_20 = arith.constant 0 : index
    %30 = arith.index_cast %29 : i32 to index
    %c0_21 = arith.constant 0 : index
    %c0_22 = arith.constant 0 : index
    %31 = vector.load %arg2[%c0_20, %30, %c0_21, %c0_22] : memref<1x18x18x4xbf16, #tpu.memory_space<vmem>>, vector<1x16x16x4xbf16>
    %32 = vector.shape_cast %31 : vector<1x16x16x4xbf16> to vector<16x16x4xbf16>
    %33 = vector.shape_cast %32 : vector<16x16x4xbf16> to vector<256x4xbf16>
    %c3 = arith.constant 3 : index
    %c0_23 = arith.constant 0 : index
    %c0_24 = arith.constant 0 : index
    %34 = vector.load %arg3[%c3, %c0_23, %c0_24] : memref<9x4x8xbf16, #tpu.memory_space<vmem>>, vector<1x4x8xbf16>
    %35 = vector.shape_cast %34 : vector<1x4x8xbf16> to vector<4x8xbf16>
    %cst_25 = arith.constant dense<0.000000e+00> : vector<256x8xf32>
    %36 = tpu.matmul %33, %35, %cst_25 {dimension_numbers = #tpu.dot_dimension_numbers<[1], [0], [0], [1], [0, 0, 1, 1], [], []>} : vector<256x4xbf16>, vector<4x8xbf16>, vector<256x8xf32> -> vector<256x8xf32>
    %37 = arith.addf %28, %36 : vector<256x8xf32>
    %c1_i32_26 = arith.constant 1 : i32
    %38 = arith.addi %0, %c1_i32_26 : i32
    %c0_27 = arith.constant 0 : index
    %39 = arith.index_cast %38 : i32 to index
    %c1_28 = arith.constant 1 : index
    %c0_29 = arith.constant 0 : index
    %40 = vector.load %arg2[%c0_27, %39, %c1_28, %c0_29] : memref<1x18x18x4xbf16, #tpu.memory_space<vmem>>, vector<1x16x16x4xbf16>
    %41 = vector.shape_cast %40 : vector<1x16x16x4xbf16> to vector<16x16x4xbf16>
    %42 = vector.shape_cast %41 : vector<16x16x4xbf16> to vector<256x4xbf16>
    %c4 = arith.constant 4 : index
    %c0_30 = arith.constant 0 : index
    %c0_31 = arith.constant 0 : index
    %43 = vector.load %arg3[%c4, %c0_30, %c0_31] : memref<9x4x8xbf16, #tpu.memory_space<vmem>>, vector<1x4x8xbf16>
    %44 = vector.shape_cast %43 : vector<1x4x8xbf16> to vector<4x8xbf16>
    %cst_32 = arith.constant dense<0.000000e+00> : vector<256x8xf32>
    %45 = tpu.matmul %42, %44, %cst_32 {dimension_numbers = #tpu.dot_dimension_numbers<[1], [0], [0], [1], [0, 0, 1, 1], [], []>} : vector<256x4xbf16>, vector<4x8xbf16>, vector<256x8xf32> -> vector<256x8xf32>
    %46 = arith.addf %37, %45 : vector<256x8xf32>
    %c1_i32_33 = arith.constant 1 : i32
    %47 = arith.addi %0, %c1_i32_33 : i32
    %c0_34 = arith.constant 0 : index
    %48 = arith.index_cast %47 : i32 to index
    %c2_35 = arith.constant 2 : index
    %c0_36 = arith.constant 0 : index
    %49 = vector.load %arg2[%c0_34, %48, %c2_35, %c0_36] : memref<1x18x18x4xbf16, #tpu.memory_space<vmem>>, vector<1x16x16x4xbf16>
    %50 = vector.shape_cast %49 : vector<1x16x16x4xbf16> to vector<16x16x4xbf16>
    %51 = vector.shape_cast %50 : vector<16x16x4xbf16> to vector<256x4xbf16>
    %c5 = arith.constant 5 : index
    %c0_37 = arith.constant 0 : index
    %c0_38 = arith.constant 0 : index
    %52 = vector.load %arg3[%c5, %c0_37, %c0_38] : memref<9x4x8xbf16, #tpu.memory_space<vmem>>, vector<1x4x8xbf16>
    %53 = vector.shape_cast %52 : vector<1x4x8xbf16> to vector<4x8xbf16>
    %cst_39 = arith.constant dense<0.000000e+00> : vector<256x8xf32>
    %54 = tpu.matmul %51, %53, %cst_39 {dimension_numbers = #tpu.dot_dimension_numbers<[1], [0], [0], [1], [0, 0, 1, 1], [], []>} : vector<256x4xbf16>, vector<4x8xbf16>, vector<256x8xf32> -> vector<256x8xf32>
    %55 = arith.addf %46, %54 : vector<256x8xf32>
    %c2_i32 = arith.constant 2 : i32
    %56 = arith.addi %0, %c2_i32 : i32
    %c0_40 = arith.constant 0 : index
    %57 = arith.index_cast %56 : i32 to index
    %c0_41 = arith.constant 0 : index
    %c0_42 = arith.constant 0 : index
    %58 = vector.load %arg2[%c0_40, %57, %c0_41, %c0_42] : memref<1x18x18x4xbf16, #tpu.memory_space<vmem>>, vector<1x16x16x4xbf16>
    %59 = vector.shape_cast %58 : vector<1x16x16x4xbf16> to vector<16x16x4xbf16>
    %60 = vector.shape_cast %59 : vector<16x16x4xbf16> to vector<256x4xbf16>
    %c6 = arith.constant 6 : index
    %c0_43 = arith.constant 0 : index
    %c0_44 = arith.constant 0 : index
    %61 = vector.load %arg3[%c6, %c0_43, %c0_44] : memref<9x4x8xbf16, #tpu.memory_space<vmem>>, vector<1x4x8xbf16>
    %62 = vector.shape_cast %61 : vector<1x4x8xbf16> to vector<4x8xbf16>
    %cst_45 = arith.constant dense<0.000000e+00> : vector<256x8xf32>
    %63 = tpu.matmul %60, %62, %cst_45 {dimension_numbers = #tpu.dot_dimension_numbers<[1], [0], [0], [1], [0, 0, 1, 1], [], []>} : vector<256x4xbf16>, vector<4x8xbf16>, vector<256x8xf32> -> vector<256x8xf32>
    %64 = arith.addf %55, %63 : vector<256x8xf32>
    %c2_i32_46 = arith.constant 2 : i32
    %65 = arith.addi %0, %c2_i32_46 : i32
    %c0_47 = arith.constant 0 : index
    %66 = arith.index_cast %65 : i32 to index
    %c1_48 = arith.constant 1 : index
    %c0_49 = arith.constant 0 : index
    %67 = vector.load %arg2[%c0_47, %66, %c1_48, %c0_49] : memref<1x18x18x4xbf16, #tpu.memory_space<vmem>>, vector<1x16x16x4xbf16>
    %68 = vector.shape_cast %67 : vector<1x16x16x4xbf16> to vector<16x16x4xbf16>
    %69 = vector.shape_cast %68 : vector<16x16x4xbf16> to vector<256x4xbf16>
    %c7 = arith.constant 7 : index
    %c0_50 = arith.constant 0 : index
    %c0_51 = arith.constant 0 : index
    %70 = vector.load %arg3[%c7, %c0_50, %c0_51] : memref<9x4x8xbf16, #tpu.memory_space<vmem>>, vector<1x4x8xbf16>
    %71 = vector.shape_cast %70 : vector<1x4x8xbf16> to vector<4x8xbf16>
    %cst_52 = arith.constant dense<0.000000e+00> : vector<256x8xf32>
    %72 = tpu.matmul %69, %71, %cst_52 {dimension_numbers = #tpu.dot_dimension_numbers<[1], [0], [0], [1], [0, 0, 1, 1], [], []>} : vector<256x4xbf16>, vector<4x8xbf16>, vector<256x8xf32> -> vector<256x8xf32>
    %73 = arith.addf %64, %72 : vector<256x8xf32>
    %c2_i32_53 = arith.constant 2 : i32
    %74 = arith.addi %0, %c2_i32_53 : i32
    %c0_54 = arith.constant 0 : index
    %75 = arith.index_cast %74 : i32 to index
    %c2_55 = arith.constant 2 : index
    %c0_56 = arith.constant 0 : index
    %76 = vector.load %arg2[%c0_54, %75, %c2_55, %c0_56] : memref<1x18x18x4xbf16, #tpu.memory_space<vmem>>, vector<1x16x16x4xbf16>
    %77 = vector.shape_cast %76 : vector<1x16x16x4xbf16> to vector<16x16x4xbf16>
    %78 = vector.shape_cast %77 : vector<16x16x4xbf16> to vector<256x4xbf16>
    %c8 = arith.constant 8 : index
    %c0_57 = arith.constant 0 : index
    %c0_58 = arith.constant 0 : index
    %79 = vector.load %arg3[%c8, %c0_57, %c0_58] : memref<9x4x8xbf16, #tpu.memory_space<vmem>>, vector<1x4x8xbf16>
    %80 = vector.shape_cast %79 : vector<1x4x8xbf16> to vector<4x8xbf16>
    %cst_59 = arith.constant dense<0.000000e+00> : vector<256x8xf32>
    %81 = tpu.matmul %78, %80, %cst_59 {dimension_numbers = #tpu.dot_dimension_numbers<[1], [0], [0], [1], [0, 0, 1, 1], [], []>} : vector<256x4xbf16>, vector<4x8xbf16>, vector<256x8xf32> -> vector<256x8xf32>
    %82 = arith.addf %73, %81 : vector<256x8xf32>
    %c0_60 = arith.constant 0 : index
    %c0_61 = arith.constant 0 : index
    %83 = vector.load %arg4[%c0_60, %c0_61] : memref<1x8xf32, #tpu.memory_space<vmem>>, vector<1x8xf32>
    %84 = vector.broadcast %83 : vector<1x8xf32> to vector<256x8xf32>
    %85 = arith.addf %82, %84 : vector<256x8xf32>
    %cst_62 = arith.constant 0.000000e+00 : f32
    %86 = vector.broadcast %cst_62 : f32 to vector<256x8xf32>
    %87 = arith.maximumf %85, %86 : vector<256x8xf32>
    %c0_63 = arith.constant 0 : index
    %c0_64 = arith.constant 0 : index
    %c0_65 = arith.constant 0 : index
    %88 = vector.load %arg5[%c0_63, %c0_64, %c0_65] : memref<1x256x8xf32, #tpu.memory_space<vmem>>, vector<1x256x8xf32>
    %89 = vector.shape_cast %88 : vector<1x256x8xf32> to vector<256x8xf32>
    %90 = vector.shape_cast %87 : vector<256x8xf32> to vector<1x256x8xf32>
    tpu.vector_store %arg5[%c0_63, %c0_64, %c0_65], %90 {strides = array<i32>} : memref<1x256x8xf32, #tpu.memory_space<vmem>>, vector<1x256x8xf32>,
    return
  }
  func.func @transform_0(%arg0: i32, %arg1: i32) -> (i32, i32, i32, i32) {
    %c0_i32 = arith.constant 0 : i32
    %c0_i32_0 = arith.constant 0 : i32
    %c0_i32_1 = arith.constant 0 : i32
    %c0_i32_2 = arith.constant 0 : i32
    return %arg0, %c0_i32, %c0_i32_0, %c0_i32_1 : i32, i32, i32, i32
  }
  func.func @transform_1(%arg0: i32, %arg1: i32) -> (i32, i32, i32) {
    %c0_i32 = arith.constant 0 : i32
    %c0_i32_0 = arith.constant 0 : i32
    %c0_i32_1 = arith.constant 0 : i32
    %c0_i32_2 = arith.constant 0 : i32
    return %c0_i32, %c0_i32_0, %c0_i32_1 : i32, i32, i32
  }
  func.func @transform_2(%arg0: i32, %arg1: i32) -> (i32, i32) {
    %c0_i32 = arith.constant 0 : i32
    %c0_i32_0 = arith.constant 0 : i32
    %c0_i32_1 = arith.constant 0 : i32
    return %c0_i32, %c0_i32_0 : i32, i32
  }
  func.func @transform_3(%arg0: i32, %arg1: i32) -> (i32, i32, i32) {
    %c0_i32 = arith.constant 0 : i32
    %c0_i32_0 = arith.constant 0 : i32
    return %arg0, %arg1, %c0_i32 : i32, i32, i32
  }
}

</mosaic_0001>

<llo_original>
// kernel: mobilenetv1_block.1
$region0: #{mobilenetv1_block.1}
  #allocation0 [shape = 'u32[]', space=smem, size = 0x4, offset = 0x4, fixed_abs, tag = 'smem constant byte address 0x4 - core index']
  #allocation1 [shape = 'u32[144,128]{1,0:T(1,128)}', space=vmem, size = 0x12000, scoped, tag = 'internal scratch']
  %s0 = inlined_call_operand.vmem [shape: bf16[2,18,18,4], index: 0, kind: input, shape index: {}]
  %s1 = inlined_call_operand.vmem [shape: bf16[9,4,8], index: 1, kind: input, shape index: {}]
  %s2 = inlined_call_operand.vmem [shape: f32[1,8], index: 2, kind: input, shape index: {}]
  %s3 = inlined_call_operand.vmem [shape: f32[2,256,8], index: 3, kind: output, shape index: {}]
  %s4 = sld [smem:[#allocation0]]
  $region45: #{mobilenetv1_block.1} parent=0
    _
  %s6 = ssub.s32 1, %s4
  %s7 = scalar_select 0, %s6, %s4
  loop: start=0, step=1, limit=4
  $region2: #{mobilenetv1_block.1} parent=0 // loop_pre_header
    _
  $region3: #{mobilenetv1_block.1} parent=0 // loop_header
    %s9 = sphi 0, %s13
    %p10 = scmp.ge.s32.totalorder %s9, 4
    %s16 = sphi 0, %s28
    %s17 = sphi 0, %s24
    %s18 = sphi 0, %s16
    %s19 = sphi 0, %s17
    %s20 = sphi 0, %s18
    %s21 = sphi 0, %s19
    %s31 = sphi 0, %s33
    %s34 = sphi 0, %s31
    %s35 = sphi 0, %s34
    %s51 = sphi 0, %s35
    %s55 = sphi 0, %s55
    %s57 = sphi 0, %s55
    %s58 = sphi 0, %s57
    %s72 = sphi 0, %s58
    %s76 = sphi 0, %s76
    %s78 = sphi 0, %s76
    %s79 = sphi 0, %s78
    %s93 = sphi 0, %s79
    %s101 = sphi 0, %s103
    %s104 = sphi 0, %s101
    %s105 = sphi 0, %s104
    %s121 = sphi 0, %s105
  $region4: #{mobilenetv1_block.1} parent=0 // loop_header_branch
    %12 = sbr.rel (%p10) target = $region8
  $region5: #{mobilenetv1_block.1} parent=0 // loop_body
    %s14 = ssub.s32 %s9, 1
    %s15 = ssub.s32 %s9, 2
    %s22 = sadd.s32 1, %s17
    %p23 = scmp.ge.s32.totalorder %s22, 1
    %s24 = scalar_select %p23, 0, %s22
    %s25 = sadd.s32 1, %s16
    %s26 = scalar_select %p23, %s25, %s16
    %p27 = scmp.ge.s32.totalorder %s26, 2
    %s28 = scalar_select %p27, 0, %s26
    %s29 = ssub.s32 %s16, %s28
    %p30 = scmp.eq.s32.totalorder %s29, 0
    %s32 = sadd.s32 %s31, 1
    %s33 = scalar_select %p30, %s31, %s32
    %p36 = pneg %p30
    %p37 = scmp.eq.s32.totalorder %s9, 1
    %p38 = por %p36, %p37
    %p39 = scmp.ne.s32.totalorder %s31, %s34
    %p40 = scmp.eq.s32.totalorder %s9, 0
    %p41 = por %p39, %p40
    %p42 = scmp.ne.s32.totalorder %s31, %s34
    %p43 = scmp.eq.s32.totalorder %s14, 1
    %p44 = por %p42, %p43
    %p45 = scmp.ne.s32.totalorder %s34, %s35
    %p46 = scmp.eq.s32.totalorder %s14, 0
    %p47 = por %p45, %p46
    %p48 = scmp.ne.s32.totalorder %s34, %s35
    %p49 = scmp.eq.s32.totalorder %s15, 1
    %p50 = por %p48, %p49
    %p52 = scmp.ne.s32.totalorder %s35, %s51
    %p53 = scmp.eq.s32.totalorder %s15, 0
    %p54 = por %p52, %p53
    %s56 = sadd.s32 %s55, 1
    %p59 = scmp.eq.s32.totalorder %s9, 1
    %p60 = scmp.ne.s32.totalorder %s55, %s57
    %p61 = scmp.eq.s32.totalorder %s9, 0
    %p62 = por %p60, %p61
    %p63 = scmp.ne.s32.totalorder %s55, %s57
    %p64 = scmp.eq.s32.totalorder %s14, 1
    %p65 = por %p63, %p64
    %p66 = scmp.ne.s32.totalorder %s57, %s58
    %p67 = scmp.eq.s32.totalorder %s14, 0
    %p68 = por %p66, %p67
    %p69 = scmp.ne.s32.totalorder %s57, %s58
    %p70 = scmp.eq.s32.totalorder %s15, 1
    %p71 = por %p69, %p70
    %p73 = scmp.ne.s32.totalorder %s58, %s72
    %p74 = scmp.eq.s32.totalorder %s15, 0
    %p75 = por %p73, %p74
    %s77 = sadd.s32 %s76, 1
    %p80 = scmp.eq.s32.totalorder %s9, 1
    %p81 = scmp.ne.s32.totalorder %s76, %s78
    %p82 = scmp.eq.s32.totalorder %s9, 0
    %p83 = por %p81, %p82
    %p84 = scmp.ne.s32.totalorder %s76, %s78
    %p85 = scmp.eq.s32.totalorder %s14, 1
    %p86 = por %p84, %p85
    %p87 = scmp.ne.s32.totalorder %s78, %s79
    %p88 = scmp.eq.s32.totalorder %s14, 0
    %p89 = por %p87, %p88
    %p90 = scmp.ne.s32.totalorder %s78, %s79
    %p91 = scmp.eq.s32.totalorder %s15, 1
    %p92 = por %p90, %p91
    %p94 = scmp.ne.s32.totalorder %s79, %s93
    %p95 = scmp.eq.s32.totalorder %s15, 0
    %p96 = por %p94, %p95
    %s97 = ssub.s32 %s16, %s28
    %s98 = ssub.s32 %s17, %s24
    %s99 = sor.u32 %s97, %s98
    %p100 = scmp.eq.s32.totalorder %s99, 0
    %s102 = sadd.s32 %s101, 1
    %s103 = scalar_select %p100, %s101, %s102
    %p106 = pneg %p100
    %p107 = scmp.eq.s32.totalorder %s9, 1
    %p108 = por %p106, %p107
    %p109 = scmp.ne.s32.totalorder %s101, %s104
    %p110 = scmp.eq.s32.totalorder %s9, 0
    %p111 = por %p109, %p110
    %p112 = scmp.ne.s32.totalorder %s101, %s104
    %p113 = scmp.eq.s32.totalorder %s14, 1
    %p114 = por %p112, %p113
    %p115 = scmp.ne.s32.totalorder %s104, %s105
    %p116 = scmp.eq.s32.totalorder %s14, 0
    %p117 = por %p115, %p116
    %p118 = scmp.ne.s32.totalorder %s104, %s105
    %p119 = scmp.eq.s32.totalorder %s15, 1
    %p120 = por %p118, %p119
    %p122 = scmp.ne.s32.totalorder %s105, %s121
    %p123 = scmp.eq.s32.totalorder %s15, 0
    %p124 = por %p122, %p123
    %p125 = scmp.le.s32.totalorder 1, %s9
    %p126 = scmp.lt.s32.totalorder %s9, 3
    %p127 = pnand %p125, %p126
    %p128 = pneg %p127
    // Predicated region
    $region9: #{mobilenetv1_block.1} parent=5 // pred_check
      _
    $region10: #{mobilenetv1_block.1} parent=5 // pred_check_branch
      %130 = sbr.rel (%p127) target = $region12
    $region11: #{mobilenetv1_block.1} parent=5 // pred_region
      %s131 = ssub.s32 %s9, 1
      // Predicated region
      $region13: #{mobilenetv1_block.1} parent=11 // pred_check
        %p132 = pneg %p68
      $region14: #{mobilenetv1_block.1} parent=11 // pred_check_branch
        %134 = sbr.rel (%p132) target = $region16
      $region15: #{mobilenetv1_block.1} parent=11 // pred_region
        _
      $region16: #{mobilenetv1_block.1} parent=11 // pred_fallthru
        _
      // Predicated region
      $region17: #{mobilenetv1_block.1} parent=11 // pred_check
        %p135 = pneg %p89
      $region18: #{mobilenetv1_block.1} parent=11 // pred_check_branch
        %137 = sbr.rel (%p135) target = $region20
      $region19: #{mobilenetv1_block.1} parent=11 // pred_region
        _
      $region20: #{mobilenetv1_block.1} parent=11 // pred_fallthru
        _
    $region12: #{mobilenetv1_block.1} parent=5 // pred_fallthru
      _
    %p138 = scmp.lt.s32.totalorder %s9, 2
    // Predicated region
    $region21: #{mobilenetv1_block.1} parent=5 // pred_check
      %p139 = pneg %p138
    $region22: #{mobilenetv1_block.1} parent=5 // pred_check_branch
      %141 = sbr.rel (%p139) target = $region24
    $region23: #{mobilenetv1_block.1} parent=5 // pred_region
      // Predicated region
      $region25: #{mobilenetv1_block.1} parent=23 // pred_check
        %p142 = pneg %p41
      $region26: #{mobilenetv1_block.1} parent=23 // pred_check_branch
        %144 = sbr.rel (%p142) target = $region28
      $region27: #{mobilenetv1_block.1} parent=23 // pred_region
        %p145 = scmp.lt.s32.totalorder %s16, 1
        %s146 = scalar_select %p145, %s16, 1
        %s147 = smul.addr %s146, 54
        %s148 = smul.addr %s147, 4
        %s149 = scalar_lea.vmem %s0, %s148
      $region28: #{mobilenetv1_block.1} parent=23 // pred_fallthru
        _
    $region24: #{mobilenetv1_block.1} parent=5 // pred_fallthru
      _
    %p150 = scmp.le.s32.totalorder 1, %s9
    %p151 = scmp.lt.s32.totalorder %s9, 3
    %p152 = pnand %p150, %p151
    %p153 = pneg %p152
    // Predicated region
    $region29: #{mobilenetv1_block.1} parent=5 // pred_check
      _
    $region30: #{mobilenetv1_block.1} parent=5 // pred_check_branch
      %155 = sbr.rel (%p152) target = $region32
    $region31: #{mobilenetv1_block.1} parent=5 // pred_region
      %s156 = ssub.s32 %s9, 1
      %p157 = scmp.lt.s32.totalorder %s18, 1
      %s158 = scalar_select %p157, %s18, 1
      %s159 = smul.addr %s158, 54
      %s160 = smul.addr %s159, 4
      %s161 = scalar_lea.vmem %s0, %s160
      %p162 = pneg %p47
      %p163 = pneg %p44
      %p164 = pneg %p68
      %p165 = pneg %p65
      %p166 = pneg %p89
      %p167 = pneg %p86
      %p168 = pneg %p117
      %p169 = pneg %p114
      %s170 = smul.u32 32, %s19
      %p171 = scmp.lt.s32.totalorder %s18, 1
      %s172 = scalar_select %p171, %s18, 1
      %p173 = scmp.lt.s32.totalorder %s170, 31
      %s174 = scalar_select %p173, %s170, 31
      %s175 = smul.addr %s172, 32
      %s176 = sadd.s32 %s174, %s175
      %s177 = smul.addr %s176, 8
      %s178 = scalar_lea.vmem %s3, %s177
      %p179 = scmp.lt.s32.totalorder %s18, 1
      %s180 = scalar_select %p179, %s18, 1
      %s181 = smul.addr %s180, 54
      %s182 = smul.addr %s181, 4
      %s183 = scalar_lea.vmem %s0, %s182
      %s184 = smul.u32 32, %s19
      %p185 = scmp.lt.s32.totalorder %s18, 1
      %s186 = scalar_select %p185, %s18, 1
      %p187 = scmp.lt.s32.totalorder %s184, 31
      %s188 = scalar_select %p187, %s184, 31
      %s189 = smul.addr %s186, 32
      %s190 = sadd.s32 %s188, %s189
      %s191 = smul.addr %s190, 8
      %s192 = scalar_lea.vmem %s3, %s191
      %s193 = smul.u32 32, %s19
      %s195 = smul.u32 %s19, 16
      %s196 = smul.u32 %s195, 3
      %s197 = smul.addr %s196, 4
      %s198 = scalar_lea.vmem %s183, %s197
      %v199 = vld [vmem:[%s198] sm:$0xf]
      %v200 = vld [vmem:[%s198 + $0x4] sm:$0xf]
      %v201 = vld [vmem:[%s198 + $0xc] sm:$0xf]
      %v202 = vld [vmem:[%s198 + $0x10] sm:$0xf]
      %v203 = vld [vmem:[%s198 + $0x18] sm:$0xf]
      %v204 = vld [vmem:[%s198 + $0x1c] sm:$0xf]
      %v205 = vld [vmem:[%s198 + $0x24] sm:$0xf]
      %v206 = vld [vmem:[%s198 + $0x28] sm:$0xf]
      %v207 = vld [vmem:[%s198 + $0x30] sm:$0xf]
      %v208 = vld [vmem:[%s198 + $0x34] sm:$0xf]
      %v209 = vld [vmem:[%s198 + $0x3c] sm:$0xf]
      %v210 = vld [vmem:[%s198 + $0x40] sm:$0xf]
      %v211 = vld [vmem:[%s198 + $0x48] sm:$0xf]
      %v212 = vld [vmem:[%s198 + $0x4c] sm:$0xf]
      %v213 = vld [vmem:[%s198 + $0x54] sm:$0xf]
      %v214 = vld [vmem:[%s198 + $0x58] sm:$0xf]
      %v215 = vld [vmem:[%s198 + $0x60] sm:$0xf]
      %v216 = vld [vmem:[%s198 + $0x64] sm:$0xf]
      %v217 = vld [vmem:[%s198 + $0x6c] sm:$0xf]
      %v218 = vld [vmem:[%s198 + $0x70] sm:$0xf]
      %v219 = vld [vmem:[%s198 + $0x78] sm:$0xf]
      %v220 = vld [vmem:[%s198 + $0x7c] sm:$0xf]
      %v221 = vld [vmem:[%s198 + $0x84] sm:$0xf]
      %v222 = vld [vmem:[%s198 + $0x88] sm:$0xf]
      %v223 = vld [vmem:[%s198 + $0x90] sm:$0xf]
      %v224 = vld [vmem:[%s198 + $0x94] sm:$0xf]
      %v225 = vld [vmem:[%s198 + $0x9c] sm:$0xf]
      %v226 = vld [vmem:[%s198 + $0xa0] sm:$0xf]
      %v227 = vld [vmem:[%s198 + $0xa8] sm:$0xf]
      %v228 = vld [vmem:[%s198 + $0xac] sm:$0xf]
      %v229 = vld [vmem:[%s198 + $0xb4] sm:$0xf]
      %v230 = vld [vmem:[%s198 + $0xb8] sm:$0xf]
      %v231 = vld [vmem:[%s1] sm:$0x3]
      %v232 = vld [vmem:[%s198 + $0x8] sm:$0x1]
      %v233 = vld [vmem:[%s198 + $0x14] sm:$0x1]
      %v234 = vld [vmem:[%s198 + $0x20] sm:$0x1]
      %v235 = vld [vmem:[%s198 + $0x2c] sm:$0x1]
      %v236 = vld [vmem:[%s198 + $0x38] sm:$0x1]
      %v237 = vld [vmem:[%s198 + $0x44] sm:$0x1]
      %v238 = vld [vmem:[%s198 + $0x50] sm:$0x1]
      %v239 = vld [vmem:[%s198 + $0x5c] sm:$0x1]
      %v240 = vld [vmem:[%s198 + $0x68] sm:$0x1]
      %v241 = vld [vmem:[%s198 + $0x74] sm:$0x1]
      %v242 = vld [vmem:[%s198 + $0x80] sm:$0x1]
      %v243 = vld [vmem:[%s198 + $0x8c] sm:$0x1]
      %v244 = vld [vmem:[%s198 + $0x98] sm:$0x1]
      %v245 = vld [vmem:[%s198 + $0xa4] sm:$0x1]
      %v246 = vld [vmem:[%s198 + $0xb0] sm:$0x1]
      %v247 = vld [vmem:[%s198 + $0xbc] sm:$0x1]
      %vm248 = vsmask.f32 3328
      %vm249 = vsmask.f32 7440
      %vm250 = vmor %vm248, %vm249
      %v252 = vshrl.u32 %v199, 16
      %v254 = vrot.slane %v252, 4
      %v255 = vshll.u32 %v199, 16
      %v257 = vrot.slane %v255, 5
      %v258 = vor.u32 %v254, %v257
      %v259 = vrot.slane %v258, 4
      %v261 = vshll.u32 %v200, 16
      %v263 = vrot.slane %v261, 5
      %v264 = vsel %vm250, %v259, %v263
      %v265 = vshrl.u32 %v200, 16
      %v267 = vrot.slane %v265, 4
      %v268 = vor.u32 %v267, %v263
      %v269 = vrot.slane %v268, 4
      %v271 = vshll.u32 %v232, 16
      %v273 = vrot.slane %v271, 5
      %v274 = vsel %vm250, %v269, %v273
      %v276 = vshrl.u32 %v201, 16
      %v278 = vrot.slane %v276, 4
      %v279 = vshll.u32 %v201, 16
      %v281 = vrot.slane %v279, 5
      %v282 = vor.u32 %v278, %v281
      %v283 = vrot.slane %v282, 4
      %v285 = vshll.u32 %v202, 16
      %v287 = vrot.slane %v285, 5
      %v288 = vsel %vm250, %v283, %v287
      %v289 = vshrl.u32 %v202, 16
      %v291 = vrot.slane %v289, 4
      %v292 = vor.u32 %v291, %v287
      %v293 = vrot.slane %v292, 4
      %v295 = vshll.u32 %v233, 16
      %v297 = vrot.slane %v295, 5
      %v298 = vsel %vm250, %v293, %v297
      %v300 = vshrl.u32 %v203, 16
      %v302 = vrot.slane %v300, 4
      %v303 = vshll.u32 %v203, 16
      %v305 = vrot.slane %v303, 5
      %v306 = vor.u32 %v302, %v305
      %v307 = vrot.slane %v306, 4
      %v309 = vshll.u32 %v204, 16
      %v311 = vrot.slane %v309, 5
      %v312 = vsel %vm250, %v307, %v311
      %v313 = vshrl.u32 %v204, 16
      %v315 = vrot.slane %v313, 4
      %v316 = vor.u32 %v315, %v311
      %v317 = vrot.slane %v316, 4
      %v319 = vshll.u32 %v234, 16
      %v321 = vrot.slane %v319, 5
      %v322 = vsel %vm250, %v317, %v321
      %v324 = vshrl.u32 %v205, 16
      %v326 = vrot.slane %v324, 4
      %v327 = vshll.u32 %v205, 16
      %v329 = vrot.slane %v327, 5
      %v330 = vor.u32 %v326, %v329
      %v331 = vrot.slane %v330, 4
      %v333 = vshll.u32 %v206, 16
      %v335 = vrot.slane %v333, 5
      %v336 = vsel %vm250, %v331, %v335
      %v337 = vshrl.u32 %v206, 16
      %v339 = vrot.slane %v337, 4
      %v340 = vor.u32 %v339, %v335
      %v341 = vrot.slane %v340, 4
      %v343 = vshll.u32 %v235, 16
      %v345 = vrot.slane %v343, 5
      %v346 = vsel %vm250, %v341, %v345
      %v348 = vshrl.u32 %v207, 16
      %v350 = vrot.slane %v348, 4
      %v351 = vshll.u32 %v207, 16
      %v353 = vrot.slane %v351, 5
      %v354 = vor.u32 %v350, %v353
      %v355 = vrot.slane %v354, 4
      %v357 = vshll.u32 %v208, 16
      %v359 = vrot.slane %v357, 5
      %v360 = vsel %vm250, %v355, %v359
      %v361 = vshrl.u32 %v208, 16
      %v363 = vrot.slane %v361, 4
      %v364 = vor.u32 %v363, %v359
      %v365 = vrot.slane %v364, 4
      %v367 = vshll.u32 %v236, 16
      %v369 = vrot.slane %v367, 5
      %v370 = vsel %vm250, %v365, %v369
      %v372 = vshrl.u32 %v209, 16
      %v374 = vrot.slane %v372, 4
      %v375 = vshll.u32 %v209, 16
      %v377 = vrot.slane %v375, 5
      %v378 = vor.u32 %v374, %v377
      %v379 = vrot.slane %v378, 4
      %v381 = vshll.u32 %v210, 16
      %v383 = vrot.slane %v381, 5
      %v384 = vsel %vm250, %v379, %v383
      %v385 = vshrl.u32 %v210, 16
      %v387 = vrot.slane %v385, 4
      %v388 = vor.u32 %v387, %v383
      %v389 = vrot.slane %v388, 4
      %v391 = vshll.u32 %v237, 16
      %v393 = vrot.slane %v391, 5
      %v394 = vsel %vm250, %v389, %v393
      %v396 = vshrl.u32 %v211, 16
      %v398 = vrot.slane %v396, 4
      %v399 = vshll.u32 %v211, 16
      %v401 = vrot.slane %v399, 5
      %v402 = vor.u32 %v398, %v401
      %v403 = vrot.slane %v402, 4
      %v405 = vshll.u32 %v212, 16
      %v407 = vrot.slane %v405, 5
      %v408 = vsel %vm250, %v403, %v407
      %v409 = vshrl.u32 %v212, 16
      %v411 = vrot.slane %v409, 4
      %v412 = vor.u32 %v411, %v407
      %v413 = vrot.slane %v412, 4
      %v415 = vshll.u32 %v238, 16
      %v417 = vrot.slane %v415, 5
      %v418 = vsel %vm250, %v413, %v417
      %v420 = vshrl.u32 %v213, 16
      %v422 = vrot.slane %v420, 4
      %v423 = vshll.u32 %v213, 16
      %v425 = vrot.slane %v423, 5
      %v426 = vor.u32 %v422, %v425
      %v427 = vrot.slane %v426, 4
      %v429 = vshll.u32 %v214, 16
      %v431 = vrot.slane %v429, 5
      %v432 = vsel %vm250, %v427, %v431
      %v433 = vshrl.u32 %v214, 16
      %v435 = vrot.slane %v433, 4
      %v436 = vor.u32 %v435, %v431
      %v437 = vrot.slane %v436, 4
      %v439 = vshll.u32 %v239, 16
      %v441 = vrot.slane %v439, 5
      %v442 = vsel %vm250, %v437, %v441
      %v444 = vshrl.u32 %v215, 16
      %v446 = vrot.slane %v444, 4
      %v447 = vshll.u32 %v215, 16
      %v449 = vrot.slane %v447, 5
      %v450 = vor.u32 %v446, %v449
      %v451 = vrot.slane %v450, 4
      %v453 = vshll.u32 %v216, 16
      %v455 = vrot.slane %v453, 5
      %v456 = vsel %vm250, %v451, %v455
      %v457 = vshrl.u32 %v216, 16
      %v459 = vrot.slane %v457, 4
      %v460 = vor.u32 %v459, %v455
      %v461 = vrot.slane %v460, 4
      %v463 = vshll.u32 %v240, 16
      %v465 = vrot.slane %v463, 5
      %v466 = vsel %vm250, %v461, %v465
      %v468 = vshrl.u32 %v217, 16
      %v470 = vrot.slane %v468, 4
      %v471 = vshll.u32 %v217, 16
      %v473 = vrot.slane %v471, 5
      %v474 = vor.u32 %v470, %v473
      %v475 = vrot.slane %v474, 4
      %v477 = vshll.u32 %v218, 16
      %v479 = vrot.slane %v477, 5
      %v480 = vsel %vm250, %v475, %v479
      %v481 = vshrl.u32 %v218, 16
      %v483 = vrot.slane %v481, 4
      %v484 = vor.u32 %v483, %v479
      %v485 = vrot.slane %v484, 4
      %v487 = vshll.u32 %v241, 16
      %v489 = vrot.slane %v487, 5
      %v490 = vsel %vm250, %v485, %v489
      %v492 = vshrl.u32 %v219, 16
      %v494 = vrot.slane %v492, 4
      %v495 = vshll.u32 %v219, 16
      %v497 = vrot.slane %v495, 5
      %v498 = vor.u32 %v494, %v497
      %v499 = vrot.slane %v498, 4
      %v501 = vshll.u32 %v220, 16
      %v503 = vrot.slane %v501, 5
      %v504 = vsel %vm250, %v499, %v503
      %v505 = vshrl.u32 %v220, 16
      %v507 = vrot.slane %v505, 4
      %v508 = vor.u32 %v507, %v503
      %v509 = vrot.slane %v508, 4
      %v511 = vshll.u32 %v242, 16
      %v513 = vrot.slane %v511, 5
      %v514 = vsel %vm250, %v509, %v513
      %v516 = vshrl.u32 %v221, 16
      %v518 = vrot.slane %v516, 4
      %v519 = vshll.u32 %v221, 16
      %v521 = vrot.slane %v519, 5
      %v522 = vor.u32 %v518, %v521
      %v523 = vrot.slane %v522, 4
      %v525 = vshll.u32 %v222, 16
      %v527 = vrot.slane %v525, 5
      %v528 = vsel %vm250, %v523, %v527
      %v529 = vshrl.u32 %v222, 16
      %v531 = vrot.slane %v529, 4
      %v532 = vor.u32 %v531, %v527
      %v533 = vrot.slane %v532, 4
      %v535 = vshll.u32 %v243, 16
      %v537 = vrot.slane %v535, 5
      %v538 = vsel %vm250, %v533, %v537
      %v540 = vshrl.u32 %v223, 16
      %v542 = vrot.slane %v540, 4
      %v543 = vshll.u32 %v223, 16
      %v545 = vrot.slane %v543, 5
      %v546 = vor.u32 %v542, %v545
      %v547 = vrot.slane %v546, 4
      %v549 = vshll.u32 %v224, 16
      %v551 = vrot.slane %v549, 5
      %v552 = vsel %vm250, %v547, %v551
      %v553 = vshrl.u32 %v224, 16
      %v555 = vrot.slane %v553, 4
      %v556 = vor.u32 %v555, %v551
      %v557 = vrot.slane %v556, 4
      %v559 = vshll.u32 %v244, 16
      %v561 = vrot.slane %v559, 5
      %v562 = vsel %vm250, %v557, %v561
      %v564 = vshrl.u32 %v225, 16
      %v566 = vrot.slane %v564, 4
      %v567 = vshll.u32 %v225, 16
      %v569 = vrot.slane %v567, 5
      %v570 = vor.u32 %v566, %v569
      %v571 = vrot.slane %v570, 4
      %v573 = vshll.u32 %v226, 16
      %v575 = vrot.slane %v573, 5
      %v576 = vsel %vm250, %v571, %v575
      %v577 = vshrl.u32 %v226, 16
      %v579 = vrot.slane %v577, 4
      %v580 = vor.u32 %v579, %v575
      %v581 = vrot.slane %v580, 4
      %v583 = vshll.u32 %v245, 16
      %v585 = vrot.slane %v583, 5
      %v586 = vsel %vm250, %v581, %v585
      %v588 = vshrl.u32 %v227, 16
      %v590 = vrot.slane %v588, 4
      %v591 = vshll.u32 %v227, 16
      %v593 = vrot.slane %v591, 5
      %v594 = vor.u32 %v590, %v593
      %v595 = vrot.slane %v594, 4
      %v597 = vshll.u32 %v228, 16
      %v599 = vrot.slane %v597, 5
      %v600 = vsel %vm250, %v595, %v599
      %v601 = vshrl.u32 %v228, 16
      %v603 = vrot.slane %v601, 4
      %v604 = vor.u32 %v603, %v599
      %v605 = vrot.slane %v604, 4
      %v607 = vshll.u32 %v246, 16
      %v609 = vrot.slane %v607, 5
      %v610 = vsel %vm250, %v605, %v609
      %v612 = vshrl.u32 %v229, 16
      %v614 = vrot.slane %v612, 4
      %v615 = vshll.u32 %v229, 16
      %v617 = vrot.slane %v615, 5
      %v618 = vor.u32 %v614, %v617
      %v619 = vrot.slane %v618, 4
      %v621 = vshll.u32 %v230, 16
      %v623 = vrot.slane %v621, 5
      %v624 = vsel %vm250, %v619, %v623
      %v625 = vshrl.u32 %v230, 16
      %v627 = vrot.slane %v625, 4
      %v628 = vor.u32 %v627, %v623
      %v629 = vrot.slane %v628, 4
      %v631 = vshll.u32 %v247, 16
      %v633 = vrot.slane %v631, 5
      %v634 = vsel %vm250, %v629, %v633
      %s635 = scalar_lea.vmem %s1, 2
      %v636 = vld [vmem:[%s635] sm:$0x3]
      %v637 = vunpack.c.l.b16 %v264
      %v638 = vunpack.c.l.b16 %v274
      %v639 = vunpack.c.l.b16 %v288
      %v640 = vunpack.c.l.b16 %v298
      %v641 = vunpack.c.l.b16 %v312
      %v642 = vunpack.c.l.b16 %v322
      %v643 = vunpack.c.l.b16 %v336
      %v644 = vunpack.c.l.b16 %v346
      %v645 = vunpack.c.l.b16 %v360
      %v646 = vunpack.c.l.b16 %v370
      %v647 = vunpack.c.l.b16 %v384
      %v648 = vunpack.c.l.b16 %v394
      %v649 = vunpack.c.l.b16 %v408
      %v650 = vunpack.c.l.b16 %v418
      %v651 = vunpack.c.l.b16 %v432
      %v652 = vunpack.c.l.b16 %v442
      %v653 = vunpack.c.l.b16 %v456
      %v654 = vunpack.c.l.b16 %v466
      %v655 = vunpack.c.l.b16 %v480
      %v656 = vunpack.c.l.b16 %v490
      %v657 = vunpack.c.l.b16 %v504
      %v658 = vunpack.c.l.b16 %v514
      %v659 = vunpack.c.l.b16 %v528
      %v660 = vunpack.c.l.b16 %v538
      %v661 = vunpack.c.l.b16 %v552
      %v662 = vunpack.c.l.b16 %v562
      %v663 = vunpack.c.l.b16 %v576
      %v664 = vunpack.c.l.b16 %v586
      %v665 = vunpack.c.l.b16 %v600
      %v666 = vunpack.c.l.b16 %v610
      %v667 = vunpack.c.l.b16 %v624
      %v668 = vunpack.c.l.b16 %v634
      %v669 = vpack.c.b16 %v638, %v637
      %v670 = vpack.c.b16 %v640, %v639
      %v671 = vpack.c.b16 %v642, %v641
      %v672 = vpack.c.b16 %v644, %v643
      %v673 = vpack.c.b16 %v646, %v645
      %v674 = vpack.c.b16 %v648, %v647
      %v675 = vpack.c.b16 %v650, %v649
      %v676 = vpack.c.b16 %v652, %v651
      %v677 = vpack.c.b16 %v654, %v653
      %v678 = vpack.c.b16 %v656, %v655
      %v679 = vpack.c.b16 %v658, %v657
      %v680 = vpack.c.b16 %v660, %v659
      %v681 = vpack.c.b16 %v662, %v661
      %v682 = vpack.c.b16 %v664, %v663
      %v683 = vpack.c.b16 %v666, %v665
      %v684 = vpack.c.b16 %v668, %v667
      %vm685 = vcmask 31744
      %v687 = vsel %vm685, %v669, 0
      %v690 = vsel %vm685, %v670, 0
      %v693 = vsel %vm685, %v671, 0
      %v696 = vsel %vm685, %v672, 0
      %v699 = vsel %vm685, %v673, 0
      %v702 = vsel %vm685, %v674, 0
      %v705 = vsel %vm685, %v675, 0
      %v708 = vsel %vm685, %v676, 0
      %v711 = vsel %vm685, %v677, 0
      %v714 = vsel %vm685, %v678, 0
      %v717 = vsel %vm685, %v679, 0
      %v720 = vsel %vm685, %v680, 0
      %v723 = vsel %vm685, %v681, 0
      %v726 = vsel %vm685, %v682, 0
      %v729 = vsel %vm685, %v683, 0
      %v732 = vsel %vm685, %v684, 0
      %vm734 = vcmask 1041408
      %v736 = vsel %vm734, %v636, 0
      %738 = vmatprep.subr.bf16.mxu0 0
      %739 = vmatpush1.bf16.msra.mxu0 0
      %740 = vmatprep.subr.bf16.mxu0 0
      %741 = vmatpush1.bf16.msra.mxu0 0
      %742 = vmatprep.subr.bf16.mxu0 0
      %743 = vmatpush1.bf16.msra.mxu0 0
      %744 = vmatprep.subr.bf16.mxu0 0
      %745 = vmatpush1.bf16.msra.mxu0 0
      %746 = vmatprep.subr.bf16.mxu0 0
      %747 = vmatpush1.bf16.msra.mxu0 0
      %748 = vmatprep.subr.bf16.mxu0 0
      %749 = vmatpush1.bf16.msra.mxu0 0
      %750 = vmatprep.subr.bf16.mxu0 0
      %751 = vmatpush1.bf16.msra.mxu0 0
      %752 = vmatprep.subr.bf16.mxu0 0
      %753 = vmatpush1.bf16.msra.mxu0 %v736
      %754 = vmatprep.subr.bf16.mxu0 0
      %755 = vmatpush2.bf16.msra.mxu0 0
      %756 = vmatprep.subr.bf16.mxu0 0
      %757 = vmatpush2.bf16.msra.mxu0 0
      %758 = vmatprep.subr.bf16.mxu0 0
      %759 = vmatpush2.bf16.msra.mxu0 0
      %760 = vmatprep.subr.bf16.mxu0 0
      %761 = vmatpush2.bf16.msra.mxu0 0
      %762 = vmatprep.subr.bf16.mxu0 0
      %763 = vmatpush2.bf16.msra.mxu0 0
      %764 = vmatprep.subr.bf16.mxu0 0
      %765 = vmatpush2.bf16.msra.mxu0 0
      %766 = vmatprep.subr.bf16.mxu0 0
      %767 = vmatpush2.bf16.msra.mxu0 0
      %768 = vmatprep.subr.bf16.mxu0 0
      %769 = vmatpush2.bf16.msra.mxu0 0
      %770 = vmatprep.mubr.bf16.mxu0 0
      %771 = vmatmul.mubr.bf16.gmra.mxu0 %v687
      %v772 = vpop.f32.mrf.mxu0
      %v773 = vadd.f32 0.0, %v772
      %v774 = vpop.f32.mrf.mxu0
      %v775 = vpop.f32.mrf.mxu0
      %v776 = vadd.f32 0.0, %v775
      %v777 = vpop.f32.mrf.mxu0
      %778 = vmatprep.mubr.bf16.mxu0 0
      %779 = vmatmul.mubr.bf16.gmra.mxu0 %v690
      %v780 = vpop.f32.mrf.mxu0
      %v781 = vadd.f32 0.0, %v780
      %v782 = vpop.f32.mrf.mxu0
      %v783 = vpop.f32.mrf.mxu0
      %v784 = vadd.f32 0.0, %v783
      %v785 = vpop.f32.mrf.mxu0
      %786 = vmatprep.mubr.bf16.mxu0 0
      %787 = vmatmul.mubr.bf16.gmra.mxu0 %v693
      %v788 = vpop.f32.mrf.mxu0
      %v789 = vadd.f32 0.0, %v788
      %v790 = vpop.f32.mrf.mxu0
      %v791 = vpop.f32.mrf.mxu0
      %v792 = vadd.f32 0.0, %v791
      %v793 = vpop.f32.mrf.mxu0
      %794 = vmatprep.mubr.bf16.mxu0 0
      %795 = vmatmul.mubr.bf16.gmra.mxu0 %v696
      %v796 = vpop.f32.mrf.mxu0
      %v797 = vadd.f32 0.0, %v796
      %v798 = vpop.f32.mrf.mxu0
      %v799 = vpop.f32.mrf.mxu0
      %v800 = vadd.f32 0.0, %v799
      %v801 = vpop.f32.mrf.mxu0
      %802 = vmatprep.mubr.bf16.mxu0 0
      %803 = vmatmul.mubr.bf16.gmra.mxu0 %v699
      %v804 = vpop.f32.mrf.mxu0
      %v805 = vadd.f32 0.0, %v804
      %v806 = vpop.f32.mrf.mxu0
      %v807 = vpop.f32.mrf.mxu0
      %v808 = vadd.f32 0.0, %v807
      %v809 = vpop.f32.mrf.mxu0
      %810 = vmatprep.mubr.bf16.mxu0 0
      %811 = vmatmul.mubr.bf16.gmra.mxu0 %v702
      %v812 = vpop.f32.mrf.mxu0
      %v813 = vadd.f32 0.0, %v812
      %v814 = vpop.f32.mrf.mxu0
      %v815 = vpop.f32.mrf.mxu0
      %v816 = vadd.f32 0.0, %v815
      %v817 = vpop.f32.mrf.mxu0
      %818 = vmatprep.mubr.bf16.mxu0 0
      %819 = vmatmul.mubr.bf16.gmra.mxu0 %v705
      %v820 = vpop.f32.mrf.mxu0
      %v821 = vadd.f32 0.0, %v820
      %v822 = vpop.f32.mrf.mxu0
      %v823 = vpop.f32.mrf.mxu0
      %v824 = vadd.f32 0.0, %v823
      %v825 = vpop.f32.mrf.mxu0
      %826 = vmatprep.mubr.bf16.mxu0 0
      %827 = vmatmul.mubr.bf16.gmra.mxu0 %v708
      %v828 = vpop.f32.mrf.mxu0
      %v829 = vadd.f32 0.0, %v828
      %v830 = vpop.f32.mrf.mxu0
      %v831 = vpop.f32.mrf.mxu0
      %v832 = vadd.f32 0.0, %v831
      %v833 = vpop.f32.mrf.mxu0
      %834 = vmatprep.mubr.bf16.mxu0 0
      %835 = vmatmul.mubr.bf16.gmra.mxu0 %v711
      %v836 = vpop.f32.mrf.mxu0
      %v837 = vadd.f32 0.0, %v836
      %v838 = vpop.f32.mrf.mxu0
      %v839 = vpop.f32.mrf.mxu0
      %v840 = vadd.f32 0.0, %v839
      %v841 = vpop.f32.mrf.mxu0
      %842 = vmatprep.mubr.bf16.mxu0 0
      %843 = vmatmul.mubr.bf16.gmra.mxu0 %v714
      %v844 = vpop.f32.mrf.mxu0
      %v845 = vadd.f32 0.0, %v844
      %v846 = vpop.f32.mrf.mxu0
      %v847 = vpop.f32.mrf.mxu0
      %v848 = vadd.f32 0.0, %v847
      %v849 = vpop.f32.mrf.mxu0
      %850 = vmatprep.mubr.bf16.mxu0 0
      %851 = vmatmul.mubr.bf16.gmra.mxu0 %v717
      %v852 = vpop.f32.mrf.mxu0
      %v853 = vadd.f32 0.0, %v852
      %v854 = vpop.f32.mrf.mxu0
      %v855 = vpop.f32.mrf.mxu0
      %v856 = vadd.f32 0.0, %v855
      %v857 = vpop.f32.mrf.mxu0
      %858 = vmatprep.mubr.bf16.mxu0 0
      %859 = vmatmul.mubr.bf16.gmra.mxu0 %v720
      %v860 = vpop.f32.mrf.mxu0
      %v861 = vadd.f32 0.0, %v860
      %v862 = vpop.f32.mrf.mxu0
      %v863 = vpop.f32.mrf.mxu0
      %v864 = vadd.f32 0.0, %v863
      %v865 = vpop.f32.mrf.mxu0
      %866 = vmatprep.mubr.bf16.mxu0 0
      %867 = vmatmul.mubr.bf16.gmra.mxu0 %v723
      %v868 = vpop.f32.mrf.mxu0
      %v869 = vadd.f32 0.0, %v868
      %v870 = vpop.f32.mrf.mxu0
      %v871 = vpop.f32.mrf.mxu0
      %v872 = vadd.f32 0.0, %v871
      %v873 = vpop.f32.mrf.mxu0
      %874 = vmatprep.mubr.bf16.mxu0 0
      %875 = vmatmul.mubr.bf16.gmra.mxu0 %v726
      %v876 = vpop.f32.mrf.mxu0
      %v877 = vadd.f32 0.0, %v876
      %v878 = vpop.f32.mrf.mxu0
      %v879 = vpop.f32.mrf.mxu0
      %v880 = vadd.f32 0.0, %v879
      %v881 = vpop.f32.mrf.mxu0
      %882 = vmatprep.mubr.bf16.mxu0 0
      %883 = vmatmul.mubr.bf16.gmra.mxu0 %v729
      %v884 = vpop.f32.mrf.mxu0
      %v885 = vadd.f32 0.0, %v884
      %v886 = vpop.f32.mrf.mxu0
      %v887 = vpop.f32.mrf.mxu0
      %v888 = vadd.f32 0.0, %v887
      %v889 = vpop.f32.mrf.mxu0
      %890 = vmatprep.mubr.bf16.mxu0 0
      %891 = vmatmul.mubr.bf16.gmra.mxu0 %v732
      %v892 = vpop.f32.mrf.mxu0
      %v893 = vadd.f32 0.0, %v892
      %v894 = vpop.f32.mrf.mxu0
      %v895 = vpop.f32.mrf.mxu0
      %v896 = vadd.f32 0.0, %v895
      %v897 = vpop.f32.mrf.mxu0
      %898 = vdwg.mxu0
      %v931 = vunpack.c.l.b16 %v199
      %v932 = vunpack.c.l.b16 %v200
      %v933 = vunpack.c.l.b16 %v201
      %v934 = vunpack.c.l.b16 %v202
      %v935 = vunpack.c.l.b16 %v203
      %v936 = vunpack.c.l.b16 %v204
      %v937 = vunpack.c.l.b16 %v205
      %v938 = vunpack.c.l.b16 %v206
      %v939 = vunpack.c.l.b16 %v207
      %v940 = vunpack.c.l.b16 %v208
      %v941 = vunpack.c.l.b16 %v209
      %v942 = vunpack.c.l.b16 %v210
      %v943 = vunpack.c.l.b16 %v211
      %v944 = vunpack.c.l.b16 %v212
      %v945 = vunpack.c.l.b16 %v213
      %v946 = vunpack.c.l.b16 %v214
      %v947 = vunpack.c.l.b16 %v215
      %v948 = vunpack.c.l.b16 %v216
      %v949 = vunpack.c.l.b16 %v217
      %v950 = vunpack.c.l.b16 %v218
      %v951 = vunpack.c.l.b16 %v219
      %v952 = vunpack.c.l.b16 %v220
      %v953 = vunpack.c.l.b16 %v221
      %v954 = vunpack.c.l.b16 %v222
      %v955 = vunpack.c.l.b16 %v223
      %v956 = vunpack.c.l.b16 %v224
      %v957 = vunpack.c.l.b16 %v225
      %v958 = vunpack.c.l.b16 %v226
      %v959 = vunpack.c.l.b16 %v227
      %v960 = vunpack.c.l.b16 %v228
      %v961 = vunpack.c.l.b16 %v229
      %v962 = vunpack.c.l.b16 %v230
      %v963 = vpack.c.b16 %v932, %v931
      %v964 = vpack.c.b16 %v934, %v933
      %v965 = vpack.c.b16 %v936, %v935
      %v966 = vpack.c.b16 %v938, %v937
      %v967 = vpack.c.b16 %v940, %v939
      %v968 = vpack.c.b16 %v942, %v941
      %v969 = vpack.c.b16 %v944, %v943
      %v970 = vpack.c.b16 %v946, %v945
      %v971 = vpack.c.b16 %v948, %v947
      %v972 = vpack.c.b16 %v950, %v949
      %v973 = vpack.c.b16 %v952, %v951
      %v974 = vpack.c.b16 %v954, %v953
      %v975 = vpack.c.b16 %v956, %v955
      %v976 = vpack.c.b16 %v958, %v957
      %v977 = vpack.c.b16 %v960, %v959
      %v978 = vpack.c.b16 %v962, %v961
      %v980 = vsel %vm685, %v963, 0
      %v983 = vsel %vm685, %v964, 0
      %v986 = vsel %vm685, %v965, 0
      %v989 = vsel %vm685, %v966, 0
      %v992 = vsel %vm685, %v967, 0
      %v995 = vsel %vm685, %v968, 0
      %v998 = vsel %vm685, %v969, 0
      %v1001 = vsel %vm685, %v970, 0
      %v1004 = vsel %vm685, %v971, 0
      %v1007 = vsel %vm685, %v972, 0
      %v1010 = vsel %vm685, %v973, 0
      %v1013 = vsel %vm685, %v974, 0
      %v1016 = vsel %vm685, %v975, 0
      %v1019 = vsel %vm685, %v976, 0
      %v1022 = vsel %vm685, %v977, 0
      %v1025 = vsel %vm685, %v978, 0
      %v1028 = vsel %vm734, %v231, 0
      %1030 = vmatprep.subr.bf16.mxu0 0
      %1031 = vmatpush1.bf16.msra.mxu0 0
      %1032 = vmatprep.subr.bf16.mxu0 0
      %1033 = vmatpush1.bf16.msra.mxu0 0
      %1034 = vmatprep.subr.bf16.mxu0 0
      %1035 = vmatpush1.bf16.msra.mxu0 0
      %1036 = vmatprep.subr.bf16.mxu0 0
      %1037 = vmatpush1.bf16.msra.mxu0 0
      %1038 = vmatprep.subr.bf16.mxu0 0
      %1039 = vmatpush1.bf16.msra.mxu0 0
      %1040 = vmatprep.subr.bf16.mxu0 0
      %1041 = vmatpush1.bf16.msra.mxu0 0
      %1042 = vmatprep.subr.bf16.mxu0 0
      %1043 = vmatpush1.bf16.msra.mxu0 0
      %1044 = vmatprep.subr.bf16.mxu0 0
      %1045 = vmatpush1.bf16.msra.mxu0 %v1028
      %1046 = vmatprep.subr.bf16.mxu0 0
      %1047 = vmatpush2.bf16.msra.mxu0 0
      %1048 = vmatprep.subr.bf16.mxu0 0
      %1049 = vmatpush2.bf16.msra.mxu0 0
      %1050 = vmatprep.subr.bf16.mxu0 0
      %1051 = vmatpush2.bf16.msra.mxu0 0
      %1052 = vmatprep.subr.bf16.mxu0 0
      %1053 = vmatpush2.bf16.msra.mxu0 0
      %1054 = vmatprep.subr.bf16.mxu0 0
      %1055 = vmatpush2.bf16.msra.mxu0 0
      %1056 = vmatprep.subr.bf16.mxu0 0
      %1057 = vmatpush2.bf16.msra.mxu0 0
      %1058 = vmatprep.subr.bf16.mxu0 0
      %1059 = vmatpush2.bf16.msra.mxu0 0
      %1060 = vmatprep.subr.bf16.mxu0 0
      %1061 = vmatpush2.bf16.msra.mxu0 0
      %1062 = vmatprep.mubr.bf16.mxu0 0
      %1063 = vmatmul.mubr.bf16.gmra.mxu0 %v980
      %v1064 = vpop.f32.mrf.mxu0
      %v1065 = vadd.f32 %v773, %v1064
      %v1066 = vpop.f32.mrf.mxu0
      %v1067 = vpop.f32.mrf.mxu0
      %v1068 = vadd.f32 %v776, %v1067
      %v1069 = vpop.f32.mrf.mxu0
      %1070 = vmatprep.mubr.bf16.mxu0 0
      %1071 = vmatmul.mubr.bf16.gmra.mxu0 %v983
      %v1072 = vpop.f32.mrf.mxu0
      %v1073 = vadd.f32 %v781, %v1072
      %v1074 = vpop.f32.mrf.mxu0
      %v1075 = vpop.f32.mrf.mxu0
      %v1076 = vadd.f32 %v784, %v1075
      %v1077 = vpop.f32.mrf.mxu0
      %1078 = vmatprep.mubr.bf16.mxu0 0
      %1079 = vmatmul.mubr.bf16.gmra.mxu0 %v986
      %v1080 = vpop.f32.mrf.mxu0
      %v1081 = vadd.f32 %v789, %v1080
      %v1082 = vpop.f32.mrf.mxu0
      %v1083 = vpop.f32.mrf.mxu0
      %v1084 = vadd.f32 %v792, %v1083
      %v1085 = vpop.f32.mrf.mxu0
      %1086 = vmatprep.mubr.bf16.mxu0 0
      %1087 = vmatmul.mubr.bf16.gmra.mxu0 %v989
      %v1088 = vpop.f32.mrf.mxu0
      %v1089 = vadd.f32 %v797, %v1088
      %v1090 = vpop.f32.mrf.mxu0
      %v1091 = vpop.f32.mrf.mxu0
      %v1092 = vadd.f32 %v800, %v1091
      %v1093 = vpop.f32.mrf.mxu0
      %1094 = vmatprep.mubr.bf16.mxu0 0
      %1095 = vmatmul.mubr.bf16.gmra.mxu0 %v992
      %v1096 = vpop.f32.mrf.mxu0
      %v1097 = vadd.f32 %v805, %v1096
      %v1098 = vpop.f32.mrf.mxu0
      %v1099 = vpop.f32.mrf.mxu0
      %v1100 = vadd.f32 %v808, %v1099
      %v1101 = vpop.f32.mrf.mxu0
      %1102 = vmatprep.mubr.bf16.mxu0 0
      %1103 = vmatmul.mubr.bf16.gmra.mxu0 %v995
      %v1104 = vpop.f32.mrf.mxu0
      %v1105 = vadd.f32 %v813, %v1104
      %v1106 = vpop.f32.mrf.mxu0
      %v1107 = vpop.f32.mrf.mxu0
      %v1108 = vadd.f32 %v816, %v1107
      %v1109 = vpop.f32.mrf.mxu0
      %1110 = vmatprep.mubr.bf16.mxu0 0
      %1111 = vmatmul.mubr.bf16.gmra.mxu0 %v998
      %v1112 = vpop.f32.mrf.mxu0
      %v1113 = vadd.f32 %v821, %v1112
      %v1114 = vpop.f32.mrf.mxu0
      %v1115 = vpop.f32.mrf.mxu0
      %v1116 = vadd.f32 %v824, %v1115
      %v1117 = vpop.f32.mrf.mxu0
      %1118 = vmatprep.mubr.bf16.mxu0 0
      %1119 = vmatmul.mubr.bf16.gmra.mxu0 %v1001
      %v1120 = vpop.f32.mrf.mxu0
      %v1121 = vadd.f32 %v829, %v1120
      %v1122 = vpop.f32.mrf.mxu0
      %v1123 = vpop.f32.mrf.mxu0
      %v1124 = vadd.f32 %v832, %v1123
      %v1125 = vpop.f32.mrf.mxu0
      %1126 = vmatprep.mubr.bf16.mxu0 0
      %1127 = vmatmul.mubr.bf16.gmra.mxu0 %v1004
      %v1128 = vpop.f32.mrf.mxu0
      %v1129 = vadd.f32 %v837, %v1128
      %v1130 = vpop.f32.mrf.mxu0
      %v1131 = vpop.f32.mrf.mxu0
      %v1132 = vadd.f32 %v840, %v1131
      %v1133 = vpop.f32.mrf.mxu0
      %1134 = vmatprep.mubr.bf16.mxu0 0
      %1135 = vmatmul.mubr.bf16.gmra.mxu0 %v1007
      %v1136 = vpop.f32.mrf.mxu0
      %v1137 = vadd.f32 %v845, %v1136
      %v1138 = vpop.f32.mrf.mxu0
      %v1139 = vpop.f32.mrf.mxu0
      %v1140 = vadd.f32 %v848, %v1139
      %v1141 = vpop.f32.mrf.mxu0
      %1142 = vmatprep.mubr.bf16.mxu0 0
      %1143 = vmatmul.mubr.bf16.gmra.mxu0 %v1010
      %v1144 = vpop.f32.mrf.mxu0
      %v1145 = vadd.f32 %v853, %v1144
      %v1146 = vpop.f32.mrf.mxu0
      %v1147 = vpop.f32.mrf.mxu0
      %v1148 = vadd.f32 %v856, %v1147
      %v1149 = vpop.f32.mrf.mxu0
      %1150 = vmatprep.mubr.bf16.mxu0 0
      %1151 = vmatmul.mubr.bf16.gmra.mxu0 %v1013
      %v1152 = vpop.f32.mrf.mxu0
      %v1153 = vadd.f32 %v861, %v1152
      %v1154 = vpop.f32.mrf.mxu0
      %v1155 = vpop.f32.mrf.mxu0
      %v1156 = vadd.f32 %v864, %v1155
      %v1157 = vpop.f32.mrf.mxu0
      %1158 = vmatprep.mubr.bf16.mxu0 0
      %1159 = vmatmul.mubr.bf16.gmra.mxu0 %v1016
      %v1160 = vpop.f32.mrf.mxu0
      %v1161 = vadd.f32 %v869, %v1160
      %v1162 = vpop.f32.mrf.mxu0
      %v1163 = vpop.f32.mrf.mxu0
      %v1164 = vadd.f32 %v872, %v1163
      %v1165 = vpop.f32.mrf.mxu0
      %1166 = vmatprep.mubr.bf16.mxu0 0
      %1167 = vmatmul.mubr.bf16.gmra.mxu0 %v1019
      %v1168 = vpop.f32.mrf.mxu0
      %v1169 = vadd.f32 %v877, %v1168
      %v1170 = vpop.f32.mrf.mxu0
      %v1171 = vpop.f32.mrf.mxu0
      %v1172 = vadd.f32 %v880, %v1171
      %v1173 = vpop.f32.mrf.mxu0
      %1174 = vmatprep.mubr.bf16.mxu0 0
      %1175 = vmatmul.mubr.bf16.gmra.mxu0 %v1022
      %v1176 = vpop.f32.mrf.mxu0
      %v1177 = vadd.f32 %v885, %v1176
      %v1178 = vpop.f32.mrf.mxu0
      %v1179 = vpop.f32.mrf.mxu0
      %v1180 = vadd.f32 %v888, %v1179
      %v1181 = vpop.f32.mrf.mxu0
      %1182 = vmatprep.mubr.bf16.mxu0 0
      %1183 = vmatmul.mubr.bf16.gmra.mxu0 %v1025
      %v1184 = vpop.f32.mrf.mxu0
      %v1185 = vadd.f32 %v893, %v1184
      %v1186 = vpop.f32.mrf.mxu0
      %v1187 = vpop.f32.mrf.mxu0
      %v1188 = vadd.f32 %v896, %v1187
      %v1189 = vpop.f32.mrf.mxu0
      %1190 = vdwg.mxu0
      %v1191 = vld [vmem:[%s198] sm:$0xe]
      %v1192 = vld [vmem:[%s198 + $0xc] sm:$0xe]
      %v1193 = vld [vmem:[%s198 + $0x18] sm:$0xe]
      %v1194 = vld [vmem:[%s198 + $0x24] sm:$0xe]
      %v1195 = vld [vmem:[%s198 + $0x30] sm:$0xe]
      %v1196 = vld [vmem:[%s198 + $0x3c] sm:$0xe]
      %v1197 = vld [vmem:[%s198 + $0x48] sm:$0xe]
      %v1198 = vld [vmem:[%s198 + $0x54] sm:$0xe]
      %v1199 = vld [vmem:[%s198 + $0x60] sm:$0xe]
      %v1200 = vld [vmem:[%s198 + $0x6c] sm:$0xe]
      %v1201 = vld [vmem:[%s198 + $0x78] sm:$0xe]
      %v1202 = vld [vmem:[%s198 + $0x84] sm:$0xe]
      %v1203 = vld [vmem:[%s198 + $0x90] sm:$0xe]
      %v1204 = vld [vmem:[%s198 + $0x9c] sm:$0xe]
      %v1205 = vld [vmem:[%s198 + $0xa8] sm:$0xe]
      %v1206 = vld [vmem:[%s198 + $0xb4] sm:$0xe]
      %vm1239 = vcmask 1042432
      %vm1240 = vcmask 1046532
      %vm1241 = vmor %vm1239, %vm1240
      %v1242 = vrot.slane %v1191, 5
      %v1243 = vrot.slane %v1242, 4
      %v1244 = vrot.slane %v200, 5
      %v1245 = vsel %vm1241, %v1243, %v1244
      %v1246 = vrot.slane %v1244, 4
      %v1247 = vrot.slane %v232, 5
      %v1248 = vsel %vm1241, %v1246, %v1247
      %v1249 = vrot.slane %v1192, 5
      %v1250 = vrot.slane %v1249, 4
      %v1251 = vrot.slane %v202, 5
      %v1252 = vsel %vm1241, %v1250, %v1251
      %v1253 = vrot.slane %v1251, 4
      %v1254 = vrot.slane %v233, 5
      %v1255 = vsel %vm1241, %v1253, %v1254
      %v1256 = vrot.slane %v1193, 5
      %v1257 = vrot.slane %v1256, 4
      %v1258 = vrot.slane %v204, 5
      %v1259 = vsel %vm1241, %v1257, %v1258
      %v1260 = vrot.slane %v1258, 4
      %v1261 = vrot.slane %v234, 5
      %v1262 = vsel %vm1241, %v1260, %v1261
      %v1263 = vrot.slane %v1194, 5
      %v1264 = vrot.slane %v1263, 4
      %v1265 = vrot.slane %v206, 5
      %v1266 = vsel %vm1241, %v1264, %v1265
      %v1267 = vrot.slane %v1265, 4
      %v1268 = vrot.slane %v235, 5
      %v1269 = vsel %vm1241, %v1267, %v1268
      %v1270 = vrot.slane %v1195, 5
      %v1271 = vrot.slane %v1270, 4
      %v1272 = vrot.slane %v208, 5
      %v1273 = vsel %vm1241, %v1271, %v1272
      %v1274 = vrot.slane %v1272, 4
      %v1275 = vrot.slane %v236, 5
      %v1276 = vsel %vm1241, %v1274, %v1275
      %v1277 = vrot.slane %v1196, 5
      %v1278 = vrot.slane %v1277, 4
      %v1279 = vrot.slane %v210, 5
      %v1280 = vsel %vm1241, %v1278, %v1279
      %v1281 = vrot.slane %v1279, 4
      %v1282 = vrot.slane %v237, 5
      %v1283 = vsel %vm1241, %v1281, %v1282
      %v1284 = vrot.slane %v1197, 5
      %v1285 = vrot.slane %v1284, 4
      %v1286 = vrot.slane %v212, 5
      %v1287 = vsel %vm1241, %v1285, %v1286
      %v1288 = vrot.slane %v1286, 4
      %v1289 = vrot.slane %v238, 5
      %v1290 = vsel %vm1241, %v1288, %v1289
      %v1291 = vrot.slane %v1198, 5
      %v1292 = vrot.slane %v1291, 4
      %v1293 = vrot.slane %v214, 5
      %v1294 = vsel %vm1241, %v1292, %v1293
      %v1295 = vrot.slane %v1293, 4
      %v1296 = vrot.slane %v239, 5
      %v1297 = vsel %vm1241, %v1295, %v1296
      %v1298 = vrot.slane %v1199, 5
      %v1299 = vrot.slane %v1298, 4
      %v1300 = vrot.slane %v216, 5
      %v1301 = vsel %vm1241, %v1299, %v1300
      %v1302 = vrot.slane %v1300, 4
      %v1303 = vrot.slane %v240, 5
      %v1304 = vsel %vm1241, %v1302, %v1303
      %v1305 = vrot.slane %v1200, 5
      %v1306 = vrot.slane %v1305, 4
      %v1307 = vrot.slane %v218, 5
      %v1308 = vsel %vm1241, %v1306, %v1307
      %v1309 = vrot.slane %v1307, 4
      %v1310 = vrot.slane %v241, 5
      %v1311 = vsel %vm1241, %v1309, %v1310
      %v1312 = vrot.slane %v1201, 5
      %v1313 = vrot.slane %v1312, 4
      %v1314 = vrot.slane %v220, 5
      %v1315 = vsel %vm1241, %v1313, %v1314
      %v1316 = vrot.slane %v1314, 4
      %v1317 = vrot.slane %v242, 5
      %v1318 = vsel %vm1241, %v1316, %v1317
      %v1319 = vrot.slane %v1202, 5
      %v1320 = vrot.slane %v1319, 4
      %v1321 = vrot.slane %v222, 5
      %v1322 = vsel %vm1241, %v1320, %v1321
      %v1323 = vrot.slane %v1321, 4
      %v1324 = vrot.slane %v243, 5
      %v1325 = vsel %vm1241, %v1323, %v1324
      %v1326 = vrot.slane %v1203, 5
      %v1327 = vrot.slane %v1326, 4
      %v1328 = vrot.slane %v224, 5
      %v1329 = vsel %vm1241, %v1327, %v1328
      %v1330 = vrot.slane %v1328, 4
      %v1331 = vrot.slane %v244, 5
      %v1332 = vsel %vm1241, %v1330, %v1331
      %v1333 = vrot.slane %v1204, 5
      %v1334 = vrot.slane %v1333, 4
      %v1335 = vrot.slane %v226, 5
      %v1336 = vsel %vm1241, %v1334, %v1335
      %v1337 = vrot.slane %v1335, 4
      %v1338 = vrot.slane %v245, 5
      %v1339 = vsel %vm1241, %v1337, %v1338
      %v1340 = vrot.slane %v1205, 5
      %v1341 = vrot.slane %v1340, 4
      %v1342 = vrot.slane %v228, 5
      %v1343 = vsel %vm1241, %v1341, %v1342
      %v1344 = vrot.slane %v1342, 4
      %v1345 = vrot.slane %v246, 5
      %v1346 = vsel %vm1241, %v1344, %v1345
      %v1347 = vrot.slane %v1206, 5
      %v1348 = vrot.slane %v1347, 4
      %v1349 = vrot.slane %v230, 5
      %v1350 = vsel %vm1241, %v1348, %v1349
      %v1351 = vrot.slane %v1349, 4
      %v1352 = vrot.slane %v247, 5
      %v1353 = vsel %vm1241, %v1351, %v1352
      %s1354 = scalar_lea.vmem %s1, 4
      %v1355 = vld [vmem:[%s1354] sm:$0x3]
      %v1356 = vunpack.c.l.b16 %v1245
      %v1357 = vunpack.c.l.b16 %v1248
      %v1358 = vunpack.c.l.b16 %v1252
      %v1359 = vunpack.c.l.b16 %v1255
      %v1360 = vunpack.c.l.b16 %v1259
      %v1361 = vunpack.c.l.b16 %v1262
      %v1362 = vunpack.c.l.b16 %v1266
      %v1363 = vunpack.c.l.b16 %v1269
      %v1364 = vunpack.c.l.b16 %v1273
      %v1365 = vunpack.c.l.b16 %v1276
      %v1366 = vunpack.c.l.b16 %v1280
      %v1367 = vunpack.c.l.b16 %v1283
      %v1368 = vunpack.c.l.b16 %v1287
      %v1369 = vunpack.c.l.b16 %v1290
      %v1370 = vunpack.c.l.b16 %v1294
      %v1371 = vunpack.c.l.b16 %v1297
      %v1372 = vunpack.c.l.b16 %v1301
      %v1373 = vunpack.c.l.b16 %v1304
      %v1374 = vunpack.c.l.b16 %v1308
      %v1375 = vunpack.c.l.b16 %v1311
      %v1376 = vunpack.c.l.b16 %v1315
      %v1377 = vunpack.c.l.b16 %v1318
      %v1378 = vunpack.c.l.b16 %v1322
      %v1379 = vunpack.c.l.b16 %v1325
      %v1380 = vunpack.c.l.b16 %v1329
      %v1381 = vunpack.c.l.b16 %v1332
      %v1382 = vunpack.c.l.b16 %v1336
      %v1383 = vunpack.c.l.b16 %v1339
      %v1384 = vunpack.c.l.b16 %v1343
      %v1385 = vunpack.c.l.b16 %v1346
      %v1386 = vunpack.c.l.b16 %v1350
      %v1387 = vunpack.c.l.b16 %v1353
      %v1388 = vpack.c.b16 %v1357, %v1356
      %v1389 = vpack.c.b16 %v1359, %v1358
      %v1390 = vpack.c.b16 %v1361, %v1360
      %v1391 = vpack.c.b16 %v1363, %v1362
      %v1392 = vpack.c.b16 %v1365, %v1364
      %v1393 = vpack.c.b16 %v1367, %v1366
      %v1394 = vpack.c.b16 %v1369, %v1368
      %v1395 = vpack.c.b16 %v1371, %v1370
      %v1396 = vpack.c.b16 %v1373, %v1372
      %v1397 = vpack.c.b16 %v1375, %v1374
      %v1398 = vpack.c.b16 %v1377, %v1376
      %v1399 = vpack.c.b16 %v1379, %v1378
      %v1400 = vpack.c.b16 %v1381, %v1380
      %v1401 = vpack.c.b16 %v1383, %v1382
      %v1402 = vpack.c.b16 %v1385, %v1384
      %v1403 = vpack.c.b16 %v1387, %v1386
      %v1405 = vsel %vm685, %v1388, 0
      %v1408 = vsel %vm685, %v1389, 0
      %v1411 = vsel %vm685, %v1390, 0
      %v1414 = vsel %vm685, %v1391, 0
      %v1417 = vsel %vm685, %v1392, 0
      %v1420 = vsel %vm685, %v1393, 0
      %v1423 = vsel %vm685, %v1394, 0
      %v1426 = vsel %vm685, %v1395, 0
      %v1429 = vsel %vm685, %v1396, 0
      %v1432 = vsel %vm685, %v1397, 0
      %v1435 = vsel %vm685, %v1398, 0
      %v1438 = vsel %vm685, %v1399, 0
      %v1441 = vsel %vm685, %v1400, 0
      %v1444 = vsel %vm685, %v1401, 0
      %v1447 = vsel %vm685, %v1402, 0
      %v1450 = vsel %vm685, %v1403, 0
      %v1453 = vsel %vm734, %v1355, 0
      %1455 = vmatprep.subr.bf16.mxu0 0
      %1456 = vmatpush1.bf16.msra.mxu0 0
      %1457 = vmatprep.subr.bf16.mxu0 0
      %1458 = vmatpush1.bf16.msra.mxu0 0
      %1459 = vmatprep.subr.bf16.mxu0 0
      %1460 = vmatpush1.bf16.msra.mxu0 0
      %1461 = vmatprep.subr.bf16.mxu0 0
      %1462 = vmatpush1.bf16.msra.mxu0 0
      %1463 = vmatprep.subr.bf16.mxu0 0
      %1464 = vmatpush1.bf16.msra.mxu0 0
      %1465 = vmatprep.subr.bf16.mxu0 0
      %1466 = vmatpush1.bf16.msra.mxu0 0
      %1467 = vmatprep.subr.bf16.mxu0 0
      %1468 = vmatpush1.bf16.msra.mxu0 0
      %1469 = vmatprep.subr.bf16.mxu0 0
      %1470 = vmatpush1.bf16.msra.mxu0 %v1453
      %1471 = vmatprep.subr.bf16.mxu0 0
      %1472 = vmatpush2.bf16.msra.mxu0 0
      %1473 = vmatprep.subr.bf16.mxu0 0
      %1474 = vmatpush2.bf16.msra.mxu0 0
      %1475 = vmatprep.subr.bf16.mxu0 0
      %1476 = vmatpush2.bf16.msra.mxu0 0
      %1477 = vmatprep.subr.bf16.mxu0 0
      %1478 = vmatpush2.bf16.msra.mxu0 0
      %1479 = vmatprep.subr.bf16.mxu0 0
      %1480 = vmatpush2.bf16.msra.mxu0 0
      %1481 = vmatprep.subr.bf16.mxu0 0
      %1482 = vmatpush2.bf16.msra.mxu0 0
      %1483 = vmatprep.subr.bf16.mxu0 0
      %1484 = vmatpush2.bf16.msra.mxu0 0
      %1485 = vmatprep.subr.bf16.mxu0 0
      %1486 = vmatpush2.bf16.msra.mxu0 0
      %1487 = vmatprep.mubr.bf16.mxu0 0
      %1488 = vmatmul.mubr.bf16.gmra.mxu0 %v1405
      %v1489 = vpop.f32.mrf.mxu0
      %v1490 = vadd.f32 0.0, %v1489
      %v1491 = vpop.f32.mrf.mxu0
      %v1492 = vpop.f32.mrf.mxu0
      %v1493 = vadd.f32 0.0, %v1492
      %v1494 = vpop.f32.mrf.mxu0
      %1495 = vmatprep.mubr.bf16.mxu0 0
      %1496 = vmatmul.mubr.bf16.gmra.mxu0 %v1408
      %v1497 = vpop.f32.mrf.mxu0
      %v1498 = vadd.f32 0.0, %v1497
      %v1499 = vpop.f32.mrf.mxu0
      %v1500 = vpop.f32.mrf.mxu0
      %v1501 = vadd.f32 0.0, %v1500
      %v1502 = vpop.f32.mrf.mxu0
      %1503 = vmatprep.mubr.bf16.mxu0 0
      %1504 = vmatmul.mubr.bf16.gmra.mxu0 %v1411
      %v1505 = vpop.f32.mrf.mxu0
      %v1506 = vadd.f32 0.0, %v1505
      %v1507 = vpop.f32.mrf.mxu0
      %v1508 = vpop.f32.mrf.mxu0
      %v1509 = vadd.f32 0.0, %v1508
      %v1510 = vpop.f32.mrf.mxu0
      %1511 = vmatprep.mubr.bf16.mxu0 0
      %1512 = vmatmul.mubr.bf16.gmra.mxu0 %v1414
      %v1513 = vpop.f32.mrf.mxu0
      %v1514 = vadd.f32 0.0, %v1513
      %v1515 = vpop.f32.mrf.mxu0
      %v1516 = vpop.f32.mrf.mxu0
      %v1517 = vadd.f32 0.0, %v1516
      %v1518 = vpop.f32.mrf.mxu0
      %1519 = vmatprep.mubr.bf16.mxu0 0
      %1520 = vmatmul.mubr.bf16.gmra.mxu0 %v1417
      %v1521 = vpop.f32.mrf.mxu0
      %v1522 = vadd.f32 0.0, %v1521
      %v1523 = vpop.f32.mrf.mxu0
      %v1524 = vpop.f32.mrf.mxu0
      %v1525 = vadd.f32 0.0, %v1524
      %v1526 = vpop.f32.mrf.mxu0
      %1527 = vmatprep.mubr.bf16.mxu0 0
      %1528 = vmatmul.mubr.bf16.gmra.mxu0 %v1420
      %v1529 = vpop.f32.mrf.mxu0
      %v1530 = vadd.f32 0.0, %v1529
      %v1531 = vpop.f32.mrf.mxu0
      %v1532 = vpop.f32.mrf.mxu0
      %v1533 = vadd.f32 0.0, %v1532
      %v1534 = vpop.f32.mrf.mxu0
      %1535 = vmatprep.mubr.bf16.mxu0 0
      %1536 = vmatmul.mubr.bf16.gmra.mxu0 %v1423
      %v1537 = vpop.f32.mrf.mxu0
      %v1538 = vadd.f32 0.0, %v1537
      %v1539 = vpop.f32.mrf.mxu0
      %v1540 = vpop.f32.mrf.mxu0
      %v1541 = vadd.f32 0.0, %v1540
      %v1542 = vpop.f32.mrf.mxu0
      %1543 = vmatprep.mubr.bf16.mxu0 0
      %1544 = vmatmul.mubr.bf16.gmra.mxu0 %v1426
      %v1545 = vpop.f32.mrf.mxu0
      %v1546 = vadd.f32 0.0, %v1545
      %v1547 = vpop.f32.mrf.mxu0
      %v1548 = vpop.f32.mrf.mxu0
      %v1549 = vadd.f32 0.0, %v1548
      %v1550 = vpop.f32.mrf.mxu0
      %1551 = vmatprep.mubr.bf16.mxu0 0
      %1552 = vmatmul.mubr.bf16.gmra.mxu0 %v1429
      %v1553 = vpop.f32.mrf.mxu0
      %v1554 = vadd.f32 0.0, %v1553
      %v1555 = vpop.f32.mrf.mxu0
      %v1556 = vpop.f32.mrf.mxu0
      %v1557 = vadd.f32 0.0, %v1556
      %v1558 = vpop.f32.mrf.mxu0
      %1559 = vmatprep.mubr.bf16.mxu0 0
      %1560 = vmatmul.mubr.bf16.gmra.mxu0 %v1432
      %v1561 = vpop.f32.mrf.mxu0
      %v1562 = vadd.f32 0.0, %v1561
      %v1563 = vpop.f32.mrf.mxu0
      %v1564 = vpop.f32.mrf.mxu0
      %v1565 = vadd.f32 0.0, %v1564
      %v1566 = vpop.f32.mrf.mxu0
      %1567 = vmatprep.mubr.bf16.mxu0 0
      %1568 = vmatmul.mubr.bf16.gmra.mxu0 %v1435
      %v1569 = vpop.f32.mrf.mxu0
      %v1570 = vadd.f32 0.0, %v1569
      %v1571 = vpop.f32.mrf.mxu0
      %v1572 = vpop.f32.mrf.mxu0
      %v1573 = vadd.f32 0.0, %v1572
      %v1574 = vpop.f32.mrf.mxu0
      %1575 = vmatprep.mubr.bf16.mxu0 0
      %1576 = vmatmul.mubr.bf16.gmra.mxu0 %v1438
      %v1577 = vpop.f32.mrf.mxu0
      %v1578 = vadd.f32 0.0, %v1577
      %v1579 = vpop.f32.mrf.mxu0
      %v1580 = vpop.f32.mrf.mxu0
      %v1581 = vadd.f32 0.0, %v1580
      %v1582 = vpop.f32.mrf.mxu0
      %1583 = vmatprep.mubr.bf16.mxu0 0
      %1584 = vmatmul.mubr.bf16.gmra.mxu0 %v1441
      %v1585 = vpop.f32.mrf.mxu0
      %v1586 = vadd.f32 0.0, %v1585
      %v1587 = vpop.f32.mrf.mxu0
      %v1588 = vpop.f32.mrf.mxu0
      %v1589 = vadd.f32 0.0, %v1588
      %v1590 = vpop.f32.mrf.mxu0
      %1591 = vmatprep.mubr.bf16.mxu0 0
      %1592 = vmatmul.mubr.bf16.gmra.mxu0 %v1444
      %v1593 = vpop.f32.mrf.mxu0
      %v1594 = vadd.f32 0.0, %v1593
      %v1595 = vpop.f32.mrf.mxu0
      %v1596 = vpop.f32.mrf.mxu0
      %v1597 = vadd.f32 0.0, %v1596
      %v1598 = vpop.f32.mrf.mxu0
      %1599 = vmatprep.mubr.bf16.mxu0 0
      %1600 = vmatmul.mubr.bf16.gmra.mxu0 %v1447
      %v1601 = vpop.f32.mrf.mxu0
      %v1602 = vadd.f32 0.0, %v1601
      %v1603 = vpop.f32.mrf.mxu0
      %v1604 = vpop.f32.mrf.mxu0
      %v1605 = vadd.f32 0.0, %v1604
      %v1606 = vpop.f32.mrf.mxu0
      %1607 = vmatprep.mubr.bf16.mxu0 0
      %1608 = vmatmul.mubr.bf16.gmra.mxu0 %v1450
      %v1609 = vpop.f32.mrf.mxu0
      %v1610 = vadd.f32 0.0, %v1609
      %v1611 = vpop.f32.mrf.mxu0
      %v1612 = vpop.f32.mrf.mxu0
      %v1613 = vadd.f32 0.0, %v1612
      %v1614 = vpop.f32.mrf.mxu0
      %1615 = vdwg.mxu0
      %v1616 = vadd.f32 %v1065, %v1490
      %v1617 = vadd.f32 %v1068, %v1493
      %v1618 = vadd.f32 %v1073, %v1498
      %v1619 = vadd.f32 %v1076, %v1501
      %v1620 = vadd.f32 %v1081, %v1506
      %v1621 = vadd.f32 %v1084, %v1509
      %v1622 = vadd.f32 %v1089, %v1514
      %v1623 = vadd.f32 %v1092, %v1517
      %v1624 = vadd.f32 %v1097, %v1522
      %v1625 = vadd.f32 %v1100, %v1525
      %v1626 = vadd.f32 %v1105, %v1530
      %v1627 = vadd.f32 %v1108, %v1533
      %v1628 = vadd.f32 %v1113, %v1538
      %v1629 = vadd.f32 %v1116, %v1541
      %v1630 = vadd.f32 %v1121, %v1546
      %v1631 = vadd.f32 %v1124, %v1549
      %v1632 = vadd.f32 %v1129, %v1554
      %v1633 = vadd.f32 %v1132, %v1557
      %v1634 = vadd.f32 %v1137, %v1562
      %v1635 = vadd.f32 %v1140, %v1565
      %v1636 = vadd.f32 %v1145, %v1570
      %v1637 = vadd.f32 %v1148, %v1573
      %v1638 = vadd.f32 %v1153, %v1578
      %v1639 = vadd.f32 %v1156, %v1581
      %v1640 = vadd.f32 %v1161, %v1586
      %v1641 = vadd.f32 %v1164, %v1589
      %v1642 = vadd.f32 %v1169, %v1594
      %v1643 = vadd.f32 %v1172, %v1597
      %v1644 = vadd.f32 %v1177, %v1602
      %v1645 = vadd.f32 %v1180, %v1605
      %v1646 = vadd.f32 %v1185, %v1610
      %v1647 = vadd.f32 %v1188, %v1613
      %s1648 = sadd.s32 %s195, 1
      %s1649 = smul.u32 %s1648, 3
      %s1650 = smul.addr %s1649, 4
      %s1651 = scalar_lea.vmem %s183, %s1650
      %v1652 = vld [vmem:[%s1651] sm:$0xf]
      %v1653 = vld [vmem:[%s1651 + $0x4] sm:$0xf]
      %v1654 = vld [vmem:[%s1651 + $0xc] sm:$0xf]
      %v1655 = vld [vmem:[%s1651 + $0x10] sm:$0xf]
      %v1656 = vld [vmem:[%s1651 + $0x18] sm:$0xf]
      %v1657 = vld [vmem:[%s1651 + $0x1c] sm:$0xf]
      %v1658 = vld [vmem:[%s1651 + $0x24] sm:$0xf]
      %v1659 = vld [vmem:[%s1651 + $0x28] sm:$0xf]
      %v1660 = vld [vmem:[%s1651 + $0x30] sm:$0xf]
      %v1661 = vld [vmem:[%s1651 + $0x34] sm:$0xf]
      %v1662 = vld [vmem:[%s1651 + $0x3c] sm:$0xf]
      %v1663 = vld [vmem:[%s1651 + $0x40] sm:$0xf]
      %v1664 = vld [vmem:[%s1651 + $0x48] sm:$0xf]
      %v1665 = vld [vmem:[%s1651 + $0x4c] sm:$0xf]
      %v1666 = vld [vmem:[%s1651 + $0x54] sm:$0xf]
      %v1667 = vld [vmem:[%s1651 + $0x58] sm:$0xf]
      %v1668 = vld [vmem:[%s1651 + $0x60] sm:$0xf]
      %v1669 = vld [vmem:[%s1651 + $0x64] sm:$0xf]
      %v1670 = vld [vmem:[%s1651 + $0x6c] sm:$0xf]
      %v1671 = vld [vmem:[%s1651 + $0x70] sm:$0xf]
      %v1672 = vld [vmem:[%s1651 + $0x78] sm:$0xf]
      %v1673 = vld [vmem:[%s1651 + $0x7c] sm:$0xf]
      %v1674 = vld [vmem:[%s1651 + $0x84] sm:$0xf]
      %v1675 = vld [vmem:[%s1651 + $0x88] sm:$0xf]
      %v1676 = vld [vmem:[%s1651 + $0x90] sm:$0xf]
      %v1677 = vld [vmem:[%s1651 + $0x94] sm:$0xf]
      %v1678 = vld [vmem:[%s1651 + $0x9c] sm:$0xf]
      %v1679 = vld [vmem:[%s1651 + $0xa0] sm:$0xf]
      %v1680 = vld [vmem:[%s1651 + $0xa8] sm:$0xf]
      %v1681 = vld [vmem:[%s1651 + $0xac] sm:$0xf]
      %v1682 = vld [vmem:[%s1651 + $0xb4] sm:$0xf]
      %v1683 = vld [vmem:[%s1651 + $0xb8] sm:$0xf]
      %s1684 = scalar_lea.vmem %s1, 6
      %v1685 = vld [vmem:[%s1684] sm:$0x3]
      %v1718 = vunpack.c.l.b16 %v1652
      %v1719 = vunpack.c.l.b16 %v1653
      %v1720 = vunpack.c.l.b16 %v1654
      %v1721 = vunpack.c.l.b16 %v1655
      %v1722 = vunpack.c.l.b16 %v1656
      %v1723 = vunpack.c.l.b16 %v1657
      %v1724 = vunpack.c.l.b16 %v1658
      %v1725 = vunpack.c.l.b16 %v1659
      %v1726 = vunpack.c.l.b16 %v1660
      %v1727 = vunpack.c.l.b16 %v1661
      %v1728 = vunpack.c.l.b16 %v1662
      %v1729 = vunpack.c.l.b16 %v1663
      %v1730 = vunpack.c.l.b16 %v1664
      %v1731 = vunpack.c.l.b16 %v1665
      %v1732 = vunpack.c.l.b16 %v1666
      %v1733 = vunpack.c.l.b16 %v1667
      %v1734 = vunpack.c.l.b16 %v1668
      %v1735 = vunpack.c.l.b16 %v1669
      %v1736 = vunpack.c.l.b16 %v1670
      %v1737 = vunpack.c.l.b16 %v1671
      %v1738 = vunpack.c.l.b16 %v1672
      %v1739 = vunpack.c.l.b16 %v1673
      %v1740 = vunpack.c.l.b16 %v1674
      %v1741 = vunpack.c.l.b16 %v1675
      %v1742 = vunpack.c.l.b16 %v1676
      %v1743 = vunpack.c.l.b16 %v1677
      %v1744 = vunpack.c.l.b16 %v1678
      %v1745 = vunpack.c.l.b16 %v1679
      %v1746 = vunpack.c.l.b16 %v1680
      %v1747 = vunpack.c.l.b16 %v1681
      %v1748 = vunpack.c.l.b16 %v1682
      %v1749 = vunpack.c.l.b16 %v1683
      %v1750 = vpack.c.b16 %v1719, %v1718
      %v1751 = vpack.c.b16 %v1721, %v1720
      %v1752 = vpack.c.b16 %v1723, %v1722
      %v1753 = vpack.c.b16 %v1725, %v1724
      %v1754 = vpack.c.b16 %v1727, %v1726
      %v1755 = vpack.c.b16 %v1729, %v1728
      %v1756 = vpack.c.b16 %v1731, %v1730
      %v1757 = vpack.c.b16 %v1733, %v1732
      %v1758 = vpack.c.b16 %v1735, %v1734
      %v1759 = vpack.c.b16 %v1737, %v1736
      %v1760 = vpack.c.b16 %v1739, %v1738
      %v1761 = vpack.c.b16 %v1741, %v1740
      %v1762 = vpack.c.b16 %v1743, %v1742
      %v1763 = vpack.c.b16 %v1745, %v1744
      %v1764 = vpack.c.b16 %v1747, %v1746
      %v1765 = vpack.c.b16 %v1749, %v1748
      %v1767 = vsel %vm685, %v1750, 0
      %v1770 = vsel %vm685, %v1751, 0
      %v1773 = vsel %vm685, %v1752, 0
      %v1776 = vsel %vm685, %v1753, 0
      %v1779 = vsel %vm685, %v1754, 0
      %v1782 = vsel %vm685, %v1755, 0
      %v1785 = vsel %vm685, %v1756, 0
      %v1788 = vsel %vm685, %v1757, 0
      %v1791 = vsel %vm685, %v1758, 0
      %v1794 = vsel %vm685, %v1759, 0
      %v1797 = vsel %vm685, %v1760, 0
      %v1800 = vsel %vm685, %v1761, 0
      %v1803 = vsel %vm685, %v1762, 0
      %v1806 = vsel %vm685, %v1763, 0
      %v1809 = vsel %vm685, %v1764, 0
      %v1812 = vsel %vm685, %v1765, 0
      %v1815 = vsel %vm734, %v1685, 0
      %1817 = vmatprep.subr.bf16.mxu0 0
      %1818 = vmatpush1.bf16.msra.mxu0 0
      %1819 = vmatprep.subr.bf16.mxu0 0
      %1820 = vmatpush1.bf16.msra.mxu0 0
      %1821 = vmatprep.subr.bf16.mxu0 0
      %1822 = vmatpush1.bf16.msra.mxu0 0
      %1823 = vmatprep.subr.bf16.mxu0 0
      %1824 = vmatpush1.bf16.msra.mxu0 0
      %1825 = vmatprep.subr.bf16.mxu0 0
      %1826 = vmatpush1.bf16.msra.mxu0 0
      %1827 = vmatprep.subr.bf16.mxu0 0
      %1828 = vmatpush1.bf16.msra.mxu0 0
      %1829 = vmatprep.subr.bf16.mxu0 0
      %1830 = vmatpush1.bf16.msra.mxu0 0
      %1831 = vmatprep.subr.bf16.mxu0 0
      %1832 = vmatpush1.bf16.msra.mxu0 %v1815
      %1833 = vmatprep.subr.bf16.mxu0 0
      %1834 = vmatpush2.bf16.msra.mxu0 0
      %1835 = vmatprep.subr.bf16.mxu0 0
      %1836 = vmatpush2.bf16.msra.mxu0 0
      %1837 = vmatprep.subr.bf16.mxu0 0
      %1838 = vmatpush2.bf16.msra.mxu0 0
      %1839 = vmatprep.subr.bf16.mxu0 0
      %1840 = vmatpush2.bf16.msra.mxu0 0
      %1841 = vmatprep.subr.bf16.mxu0 0
      %1842 = vmatpush2.bf16.msra.mxu0 0
      %1843 = vmatprep.subr.bf16.mxu0 0
      %1844 = vmatpush2.bf16.msra.mxu0 0
      %1845 = vmatprep.subr.bf16.mxu0 0
      %1846 = vmatpush2.bf16.msra.mxu0 0
      %1847 = vmatprep.subr.bf16.mxu0 0
      %1848 = vmatpush2.bf16.msra.mxu0 0
      %1849 = vmatprep.mubr.bf16.mxu0 0
      %1850 = vmatmul.mubr.bf16.gmra.mxu0 %v1767
      %v1851 = vpop.f32.mrf.mxu0
      %v1852 = vadd.f32 0.0, %v1851
      %v1853 = vpop.f32.mrf.mxu0
      %v1854 = vpop.f32.mrf.mxu0
      %v1855 = vadd.f32 0.0, %v1854
      %v1856 = vpop.f32.mrf.mxu0
      %1857 = vmatprep.mubr.bf16.mxu0 0
      %1858 = vmatmul.mubr.bf16.gmra.mxu0 %v1770
      %v1859 = vpop.f32.mrf.mxu0
      %v1860 = vadd.f32 0.0, %v1859
      %v1861 = vpop.f32.mrf.mxu0
      %v1862 = vpop.f32.mrf.mxu0
      %v1863 = vadd.f32 0.0, %v1862
      %v1864 = vpop.f32.mrf.mxu0
      %1865 = vmatprep.mubr.bf16.mxu0 0
      %1866 = vmatmul.mubr.bf16.gmra.mxu0 %v1773
      %v1867 = vpop.f32.mrf.mxu0
      %v1868 = vadd.f32 0.0, %v1867
      %v1869 = vpop.f32.mrf.mxu0
      %v1870 = vpop.f32.mrf.mxu0
      %v1871 = vadd.f32 0.0, %v1870
      %v1872 = vpop.f32.mrf.mxu0
      %1873 = vmatprep.mubr.bf16.mxu0 0
      %1874 = vmatmul.mubr.bf16.gmra.mxu0 %v1776
      %v1875 = vpop.f32.mrf.mxu0
      %v1876 = vadd.f32 0.0, %v1875
      %v1877 = vpop.f32.mrf.mxu0
      %v1878 = vpop.f32.mrf.mxu0
      %v1879 = vadd.f32 0.0, %v1878
      %v1880 = vpop.f32.mrf.mxu0
      %1881 = vmatprep.mubr.bf16.mxu0 0
      %1882 = vmatmul.mubr.bf16.gmra.mxu0 %v1779
      %v1883 = vpop.f32.mrf.mxu0
      %v1884 = vadd.f32 0.0, %v1883
      %v1885 = vpop.f32.mrf.mxu0
      %v1886 = vpop.f32.mrf.mxu0
      %v1887 = vadd.f32 0.0, %v1886
      %v1888 = vpop.f32.mrf.mxu0
      %1889 = vmatprep.mubr.bf16.mxu0 0
      %1890 = vmatmul.mubr.bf16.gmra.mxu0 %v1782
      %v1891 = vpop.f32.mrf.mxu0
      %v1892 = vadd.f32 0.0, %v1891
      %v1893 = vpop.f32.mrf.mxu0
      %v1894 = vpop.f32.mrf.mxu0
      %v1895 = vadd.f32 0.0, %v1894
      %v1896 = vpop.f32.mrf.mxu0
      %1897 = vmatprep.mubr.bf16.mxu0 0
      %1898 = vmatmul.mubr.bf16.gmra.mxu0 %v1785
      %v1899 = vpop.f32.mrf.mxu0
      %v1900 = vadd.f32 0.0, %v1899
      %v1901 = vpop.f32.mrf.mxu0
      %v1902 = vpop.f32.mrf.mxu0
      %v1903 = vadd.f32 0.0, %v1902
      %v1904 = vpop.f32.mrf.mxu0
      %1905 = vmatprep.mubr.bf16.mxu0 0
      %1906 = vmatmul.mubr.bf16.gmra.mxu0 %v1788
      %v1907 = vpop.f32.mrf.mxu0
      %v1908 = vadd.f32 0.0, %v1907
      %v1909 = vpop.f32.mrf.mxu0
      %v1910 = vpop.f32.mrf.mxu0
      %v1911 = vadd.f32 0.0, %v1910
      %v1912 = vpop.f32.mrf.mxu0
      %1913 = vmatprep.mubr.bf16.mxu0 0
      %1914 = vmatmul.mubr.bf16.gmra.mxu0 %v1791
      %v1915 = vpop.f32.mrf.mxu0
      %v1916 = vadd.f32 0.0, %v1915
      %v1917 = vpop.f32.mrf.mxu0
      %v1918 = vpop.f32.mrf.mxu0
      %v1919 = vadd.f32 0.0, %v1918
      %v1920 = vpop.f32.mrf.mxu0
      %1921 = vmatprep.mubr.bf16.mxu0 0
      %1922 = vmatmul.mubr.bf16.gmra.mxu0 %v1794
      %v1923 = vpop.f32.mrf.mxu0
      %v1924 = vadd.f32 0.0, %v1923
      %v1925 = vpop.f32.mrf.mxu0
      %v1926 = vpop.f32.mrf.mxu0
      %v1927 = vadd.f32 0.0, %v1926
      %v1928 = vpop.f32.mrf.mxu0
      %1929 = vmatprep.mubr.bf16.mxu0 0
      %1930 = vmatmul.mubr.bf16.gmra.mxu0 %v1797
      %v1931 = vpop.f32.mrf.mxu0
      %v1932 = vadd.f32 0.0, %v1931
      %v1933 = vpop.f32.mrf.mxu0
      %v1934 = vpop.f32.mrf.mxu0
      %v1935 = vadd.f32 0.0, %v1934
      %v1936 = vpop.f32.mrf.mxu0
      %1937 = vmatprep.mubr.bf16.mxu0 0
      %1938 = vmatmul.mubr.bf16.gmra.mxu0 %v1800
      %v1939 = vpop.f32.mrf.mxu0
      %v1940 = vadd.f32 0.0, %v1939
      %v1941 = vpop.f32.mrf.mxu0
      %v1942 = vpop.f32.mrf.mxu0
      %v1943 = vadd.f32 0.0, %v1942
      %v1944 = vpop.f32.mrf.mxu0
      %1945 = vmatprep.mubr.bf16.mxu0 0
      %1946 = vmatmul.mubr.bf16.gmra.mxu0 %v1803
      %v1947 = vpop.f32.mrf.mxu0
      %v1948 = vadd.f32 0.0, %v1947
      %v1949 = vpop.f32.mrf.mxu0
      %v1950 = vpop.f32.mrf.mxu0
      %v1951 = vadd.f32 0.0, %v1950
      %v1952 = vpop.f32.mrf.mxu0
      %1953 = vmatprep.mubr.bf16.mxu0 0
      %1954 = vmatmul.mubr.bf16.gmra.mxu0 %v1806
      %v1955 = vpop.f32.mrf.mxu0
      %v1956 = vadd.f32 0.0, %v1955
      %v1957 = vpop.f32.mrf.mxu0
      %v1958 = vpop.f32.mrf.mxu0
      %v1959 = vadd.f32 0.0, %v1958
      %v1960 = vpop.f32.mrf.mxu0
      %1961 = vmatprep.mubr.bf16.mxu0 0
      %1962 = vmatmul.mubr.bf16.gmra.mxu0 %v1809
      %v1963 = vpop.f32.mrf.mxu0
      %v1964 = vadd.f32 0.0, %v1963
      %v1965 = vpop.f32.mrf.mxu0
      %v1966 = vpop.f32.mrf.mxu0
      %v1967 = vadd.f32 0.0, %v1966
      %v1968 = vpop.f32.mrf.mxu0
      %1969 = vmatprep.mubr.bf16.mxu0 0
      %1970 = vmatmul.mubr.bf16.gmra.mxu0 %v1812
      %v1971 = vpop.f32.mrf.mxu0
      %v1972 = vadd.f32 0.0, %v1971
      %v1973 = vpop.f32.mrf.mxu0
      %v1974 = vpop.f32.mrf.mxu0
      %v1975 = vadd.f32 0.0, %v1974
      %v1976 = vpop.f32.mrf.mxu0
      %1977 = vdwg.mxu0
      %v1978 = vadd.f32 %v1616, %v1852
      %v1979 = vadd.f32 %v1617, %v1855
      %v1980 = vadd.f32 %v1618, %v1860
      %v1981 = vadd.f32 %v1619, %v1863
      %v1982 = vadd.f32 %v1620, %v1868
      %v1983 = vadd.f32 %v1621, %v1871
      %v1984 = vadd.f32 %v1622, %v1876
      %v1985 = vadd.f32 %v1623, %v1879
      %v1986 = vadd.f32 %v1624, %v1884
      %v1987 = vadd.f32 %v1625, %v1887
      %v1988 = vadd.f32 %v1626, %v1892
      %v1989 = vadd.f32 %v1627, %v1895
      %v1990 = vadd.f32 %v1628, %v1900
      %v1991 = vadd.f32 %v1629, %v1903
      %v1992 = vadd.f32 %v1630, %v1908
      %v1993 = vadd.f32 %v1631, %v1911
      %v1994 = vadd.f32 %v1632, %v1916
      %v1995 = vadd.f32 %v1633, %v1919
      %v1996 = vadd.f32 %v1634, %v1924
      %v1997 = vadd.f32 %v1635, %v1927
      %v1998 = vadd.f32 %v1636, %v1932
      %v1999 = vadd.f32 %v1637, %v1935
      %v2000 = vadd.f32 %v1638, %v1940
      %v2001 = vadd.f32 %v1639, %v1943
      %v2002 = vadd.f32 %v1640, %v1948
      %v2003 = vadd.f32 %v1641, %v1951
      %v2004 = vadd.f32 %v1642, %v1956
      %v2005 = vadd.f32 %v1643, %v1959
      %v2006 = vadd.f32 %v1644, %v1964
      %v2007 = vadd.f32 %v1645, %v1967
      %v2008 = vadd.f32 %v1646, %v1972
      %v2009 = vadd.f32 %v1647, %v1975
      %v2010 = vld [vmem:[%s1651] sm:$0xf]
      %v2011 = vld [vmem:[%s1651 + $0x4] sm:$0xf]
      %v2012 = vld [vmem:[%s1651 + $0x8] sm:$0x1]
      %v2013 = vld [vmem:[%s1651 + $0xc] sm:$0xf]
      %v2014 = vld [vmem:[%s1651 + $0x10] sm:$0xf]
      %v2015 = vld [vmem:[%s1651 + $0x14] sm:$0x1]
      %v2016 = vld [vmem:[%s1651 + $0x18] sm:$0xf]
      %v2017 = vld [vmem:[%s1651 + $0x1c] sm:$0xf]
      %v2018 = vld [vmem:[%s1651 + $0x20] sm:$0x1]
      %v2019 = vld [vmem:[%s1651 + $0x24] sm:$0xf]
      %v2020 = vld [vmem:[%s1651 + $0x28] sm:$0xf]
      %v2021 = vld [vmem:[%s1651 + $0x2c] sm:$0x1]
      %v2022 = vld [vmem:[%s1651 + $0x30] sm:$0xf]
      %v2023 = vld [vmem:[%s1651 + $0x34] sm:$0xf]
      %v2024 = vld [vmem:[%s1651 + $0x38] sm:$0x1]
      %v2025 = vld [vmem:[%s1651 + $0x3c] sm:$0xf]
      %v2026 = vld [vmem:[%s1651 + $0x40] sm:$0xf]
      %v2027 = vld [vmem:[%s1651 + $0x44] sm:$0x1]
      %v2028 = vld [vmem:[%s1651 + $0x48] sm:$0xf]
      %v2029 = vld [vmem:[%s1651 + $0x4c] sm:$0xf]
      %v2030 = vld [vmem:[%s1651 + $0x50] sm:$0x1]
      %v2031 = vld [vmem:[%s1651 + $0x54] sm:$0xf]
      %v2032 = vld [vmem:[%s1651 + $0x58] sm:$0xf]
      %v2033 = vld [vmem:[%s1651 + $0x5c] sm:$0x1]
      %v2034 = vld [vmem:[%s1651 + $0x60] sm:$0xf]
      %v2035 = vld [vmem:[%s1651 + $0x64] sm:$0xf]
      %v2036 = vld [vmem:[%s1651 + $0x68] sm:$0x1]
      %v2037 = vld [vmem:[%s1651 + $0x6c] sm:$0xf]
      %v2038 = vld [vmem:[%s1651 + $0x70] sm:$0xf]
      %v2039 = vld [vmem:[%s1651 + $0x74] sm:$0x1]
      %v2040 = vld [vmem:[%s1651 + $0x78] sm:$0xf]
      %v2041 = vld [vmem:[%s1651 + $0x7c] sm:$0xf]
      %v2042 = vld [vmem:[%s1651 + $0x80] sm:$0x1]
      %v2043 = vld [vmem:[%s1651 + $0x84] sm:$0xf]
      %v2044 = vld [vmem:[%s1651 + $0x88] sm:$0xf]
      %v2045 = vld [vmem:[%s1651 + $0x8c] sm:$0x1]
      %v2046 = vld [vmem:[%s1651 + $0x90] sm:$0xf]
      %v2047 = vld [vmem:[%s1651 + $0x94] sm:$0xf]
      %v2048 = vld [vmem:[%s1651 + $0x98] sm:$0x1]
      %v2049 = vld [vmem:[%s1651 + $0x9c] sm:$0xf]
      %v2050 = vld [vmem:[%s1651 + $0xa0] sm:$0xf]
      %v2051 = vld [vmem:[%s1651 + $0xa4] sm:$0x1]
      %v2052 = vld [vmem:[%s1651 + $0xa8] sm:$0xf]
      %v2053 = vld [vmem:[%s1651 + $0xac] sm:$0xf]
      %v2054 = vld [vmem:[%s1651 + $0xb0] sm:$0x1]
      %v2055 = vld [vmem:[%s1651 + $0xb4] sm:$0xf]
      %v2056 = vld [vmem:[%s1651 + $0xb8] sm:$0xf]
      %v2057 = vld [vmem:[%s1651 + $0xbc] sm:$0x1]
      %v2059 = vshrl.u32 %v2010, 16
      %v2061 = vrot.slane %v2059, 4
      %v2062 = vshll.u32 %v2010, 16
      %v2064 = vrot.slane %v2062, 5
      %v2065 = vor.u32 %v2061, %v2064
      %v2066 = vrot.slane %v2065, 4
      %v2068 = vshll.u32 %v2011, 16
      %v2070 = vrot.slane %v2068, 5
      %v2071 = vsel %vm250, %v2066, %v2070
      %v2072 = vshrl.u32 %v2011, 16
      %v2074 = vrot.slane %v2072, 4
      %v2075 = vor.u32 %v2074, %v2070
      %v2076 = vrot.slane %v2075, 4
      %v2078 = vshll.u32 %v2012, 16
      %v2080 = vrot.slane %v2078, 5
      %v2081 = vsel %vm250, %v2076, %v2080
      %v2083 = vshrl.u32 %v2013, 16
      %v2085 = vrot.slane %v2083, 4
      %v2086 = vshll.u32 %v2013, 16
      %v2088 = vrot.slane %v2086, 5
      %v2089 = vor.u32 %v2085, %v2088
      %v2090 = vrot.slane %v2089, 4
      %v2092 = vshll.u32 %v2014, 16
      %v2094 = vrot.slane %v2092, 5
      %v2095 = vsel %vm250, %v2090, %v2094
      %v2096 = vshrl.u32 %v2014, 16
      %v2098 = vrot.slane %v2096, 4
      %v2099 = vor.u32 %v2098, %v2094
      %v2100 = vrot.slane %v2099, 4
      %v2102 = vshll.u32 %v2015, 16
      %v2104 = vrot.slane %v2102, 5
      %v2105 = vsel %vm250, %v2100, %v2104
      %v2107 = vshrl.u32 %v2016, 16
      %v2109 = vrot.slane %v2107, 4
      %v2110 = vshll.u32 %v2016, 16
      %v2112 = vrot.slane %v2110, 5
      %v2113 = vor.u32 %v2109, %v2112
      %v2114 = vrot.slane %v2113, 4
      %v2116 = vshll.u32 %v2017, 16
      %v2118 = vrot.slane %v2116, 5
      %v2119 = vsel %vm250, %v2114, %v2118
      %v2120 = vshrl.u32 %v2017, 16
      %v2122 = vrot.slane %v2120, 4
      %v2123 = vor.u32 %v2122, %v2118
      %v2124 = vrot.slane %v2123, 4
      %v2126 = vshll.u32 %v2018, 16
      %v2128 = vrot.slane %v2126, 5
      %v2129 = vsel %vm250, %v2124, %v2128
      %v2131 = vshrl.u32 %v2019, 16
      %v2133 = vrot.slane %v2131, 4
      %v2134 = vshll.u32 %v2019, 16
      %v2136 = vrot.slane %v2134, 5
      %v2137 = vor.u32 %v2133, %v2136
      %v2138 = vrot.slane %v2137, 4
      %v2140 = vshll.u32 %v2020, 16
      %v2142 = vrot.slane %v2140, 5
      %v2143 = vsel %vm250, %v2138, %v2142
      %v2144 = vshrl.u32 %v2020, 16
      %v2146 = vrot.slane %v2144, 4
      %v2147 = vor.u32 %v2146, %v2142
      %v2148 = vrot.slane %v2147, 4
      %v2150 = vshll.u32 %v2021, 16
      %v2152 = vrot.slane %v2150, 5
      %v2153 = vsel %vm250, %v2148, %v2152
      %v2155 = vshrl.u32 %v2022, 16
      %v2157 = vrot.slane %v2155, 4
      %v2158 = vshll.u32 %v2022, 16
      %v2160 = vrot.slane %v2158, 5
      %v2161 = vor.u32 %v2157, %v2160
      %v2162 = vrot.slane %v2161, 4
      %v2164 = vshll.u32 %v2023, 16
      %v2166 = vrot.slane %v2164, 5
      %v2167 = vsel %vm250, %v2162, %v2166
      %v2168 = vshrl.u32 %v2023, 16
      %v2170 = vrot.slane %v2168, 4
      %v2171 = vor.u32 %v2170, %v2166
      %v2172 = vrot.slane %v2171, 4
      %v2174 = vshll.u32 %v2024, 16
      %v2176 = vrot.slane %v2174, 5
      %v2177 = vsel %vm250, %v2172, %v2176
      %v2179 = vshrl.u32 %v2025, 16
      %v2181 = vrot.slane %v2179, 4
      %v2182 = vshll.u32 %v2025, 16
      %v2184 = vrot.slane %v2182, 5
      %v2185 = vor.u32 %v2181, %v2184
      %v2186 = vrot.slane %v2185, 4
      %v2188 = vshll.u32 %v2026, 16
      %v2190 = vrot.slane %v2188, 5
      %v2191 = vsel %vm250, %v2186, %v2190
      %v2192 = vshrl.u32 %v2026, 16
      %v2194 = vrot.slane %v2192, 4
      %v2195 = vor.u32 %v2194, %v2190
      %v2196 = vrot.slane %v2195, 4
      %v2198 = vshll.u32 %v2027, 16
      %v2200 = vrot.slane %v2198, 5
      %v2201 = vsel %vm250, %v2196, %v2200
      %v2203 = vshrl.u32 %v2028, 16
      %v2205 = vrot.slane %v2203, 4
      %v2206 = vshll.u32 %v2028, 16
      %v2208 = vrot.slane %v2206, 5
      %v2209 = vor.u32 %v2205, %v2208
      %v2210 = vrot.slane %v2209, 4
      %v2212 = vshll.u32 %v2029, 16
      %v2214 = vrot.slane %v2212, 5
      %v2215 = vsel %vm250, %v2210, %v2214
      %v2216 = vshrl.u32 %v2029, 16
      %v2218 = vrot.slane %v2216, 4
      %v2219 = vor.u32 %v2218, %v2214
      %v2220 = vrot.slane %v2219, 4
      %v2222 = vshll.u32 %v2030, 16
      %v2224 = vrot.slane %v2222, 5
      %v2225 = vsel %vm250, %v2220, %v2224
      %v2227 = vshrl.u32 %v2031, 16
      %v2229 = vrot.slane %v2227, 4
      %v2230 = vshll.u32 %v2031, 16
      %v2232 = vrot.slane %v2230, 5
      %v2233 = vor.u32 %v2229, %v2232
      %v2234 = vrot.slane %v2233, 4
      %v2236 = vshll.u32 %v2032, 16
      %v2238 = vrot.slane %v2236, 5
      %v2239 = vsel %vm250, %v2234, %v2238
      %v2240 = vshrl.u32 %v2032, 16
      %v2242 = vrot.slane %v2240, 4
      %v2243 = vor.u32 %v2242, %v2238
      %v2244 = vrot.slane %v2243, 4
      %v2246 = vshll.u32 %v2033, 16
      %v2248 = vrot.slane %v2246, 5
      %v2249 = vsel %vm250, %v2244, %v2248
      %v2251 = vshrl.u32 %v2034, 16
      %v2253 = vrot.slane %v2251, 4
      %v2254 = vshll.u32 %v2034, 16
      %v2256 = vrot.slane %v2254, 5
      %v2257 = vor.u32 %v2253, %v2256
      %v2258 = vrot.slane %v2257, 4
      %v2260 = vshll.u32 %v2035, 16
      %v2262 = vrot.slane %v2260, 5
      %v2263 = vsel %vm250, %v2258, %v2262
      %v2264 = vshrl.u32 %v2035, 16
      %v2266 = vrot.slane %v2264, 4
      %v2267 = vor.u32 %v2266, %v2262
      %v2268 = vrot.slane %v2267, 4
      %v2270 = vshll.u32 %v2036, 16
      %v2272 = vrot.slane %v2270, 5
      %v2273 = vsel %vm250, %v2268, %v2272
      %v2275 = vshrl.u32 %v2037, 16
      %v2277 = vrot.slane %v2275, 4
      %v2278 = vshll.u32 %v2037, 16
      %v2280 = vrot.slane %v2278, 5
      %v2281 = vor.u32 %v2277, %v2280
      %v2282 = vrot.slane %v2281, 4
      %v2284 = vshll.u32 %v2038, 16
      %v2286 = vrot.slane %v2284, 5
      %v2287 = vsel %vm250, %v2282, %v2286
      %v2288 = vshrl.u32 %v2038, 16
      %v2290 = vrot.slane %v2288, 4
      %v2291 = vor.u32 %v2290, %v2286
      %v2292 = vrot.slane %v2291, 4
      %v2294 = vshll.u32 %v2039, 16
      %v2296 = vrot.slane %v2294, 5
      %v2297 = vsel %vm250, %v2292, %v2296
      %v2299 = vshrl.u32 %v2040, 16
      %v2301 = vrot.slane %v2299, 4
      %v2302 = vshll.u32 %v2040, 16
      %v2304 = vrot.slane %v2302, 5
      %v2305 = vor.u32 %v2301, %v2304
      %v2306 = vrot.slane %v2305, 4
      %v2308 = vshll.u32 %v2041, 16
      %v2310 = vrot.slane %v2308, 5
      %v2311 = vsel %vm250, %v2306, %v2310
      %v2312 = vshrl.u32 %v2041, 16
      %v2314 = vrot.slane %v2312, 4
      %v2315 = vor.u32 %v2314, %v2310
      %v2316 = vrot.slane %v2315, 4
      %v2318 = vshll.u32 %v2042, 16
      %v2320 = vrot.slane %v2318, 5
      %v2321 = vsel %vm250, %v2316, %v2320
      %v2323 = vshrl.u32 %v2043, 16
      %v2325 = vrot.slane %v2323, 4
      %v2326 = vshll.u32 %v2043, 16
      %v2328 = vrot.slane %v2326, 5
      %v2329 = vor.u32 %v2325, %v2328
      %v2330 = vrot.slane %v2329, 4
      %v2332 = vshll.u32 %v2044, 16
      %v2334 = vrot.slane %v2332, 5
      %v2335 = vsel %vm250, %v2330, %v2334
      %v2336 = vshrl.u32 %v2044, 16
      %v2338 = vrot.slane %v2336, 4
      %v2339 = vor.u32 %v2338, %v2334
      %v2340 = vrot.slane %v2339, 4
      %v2342 = vshll.u32 %v2045, 16
      %v2344 = vrot.slane %v2342, 5
      %v2345 = vsel %vm250, %v2340, %v2344
      %v2347 = vshrl.u32 %v2046, 16
      %v2349 = vrot.slane %v2347, 4
      %v2350 = vshll.u32 %v2046, 16
      %v2352 = vrot.slane %v2350, 5
      %v2353 = vor.u32 %v2349, %v2352
      %v2354 = vrot.slane %v2353, 4
      %v2356 = vshll.u32 %v2047, 16
      %v2358 = vrot.slane %v2356, 5
      %v2359 = vsel %vm250, %v2354, %v2358
      %v2360 = vshrl.u32 %v2047, 16
      %v2362 = vrot.slane %v2360, 4
      %v2363 = vor.u32 %v2362, %v2358
      %v2364 = vrot.slane %v2363, 4
      %v2366 = vshll.u32 %v2048, 16
      %v2368 = vrot.slane %v2366, 5
      %v2369 = vsel %vm250, %v2364, %v2368
      %v2371 = vshrl.u32 %v2049, 16
      %v2373 = vrot.slane %v2371, 4
      %v2374 = vshll.u32 %v2049, 16
      %v2376 = vrot.slane %v2374, 5
      %v2377 = vor.u32 %v2373, %v2376
      %v2378 = vrot.slane %v2377, 4
      %v2380 = vshll.u32 %v2050, 16
      %v2382 = vrot.slane %v2380, 5
      %v2383 = vsel %vm250, %v2378, %v2382
      %v2384 = vshrl.u32 %v2050, 16
      %v2386 = vrot.slane %v2384, 4
      %v2387 = vor.u32 %v2386, %v2382
      %v2388 = vrot.slane %v2387, 4
      %v2390 = vshll.u32 %v2051, 16
      %v2392 = vrot.slane %v2390, 5
      %v2393 = vsel %vm250, %v2388, %v2392
      %v2395 = vshrl.u32 %v2052, 16
      %v2397 = vrot.slane %v2395, 4
      %v2398 = vshll.u32 %v2052, 16
      %v2400 = vrot.slane %v2398, 5
      %v2401 = vor.u32 %v2397, %v2400
      %v2402 = vrot.slane %v2401, 4
      %v2404 = vshll.u32 %v2053, 16
      %v2406 = vrot.slane %v2404, 5
      %v2407 = vsel %vm250, %v2402, %v2406
      %v2408 = vshrl.u32 %v2053, 16
      %v2410 = vrot.slane %v2408, 4
      %v2411 = vor.u32 %v2410, %v2406
      %v2412 = vrot.slane %v2411, 4
      %v2414 = vshll.u32 %v2054, 16
      %v2416 = vrot.slane %v2414, 5
      %v2417 = vsel %vm250, %v2412, %v2416
      %v2419 = vshrl.u32 %v2055, 16
      %v2421 = vrot.slane %v2419, 4
      %v2422 = vshll.u32 %v2055, 16
      %v2424 = vrot.slane %v2422, 5
      %v2425 = vor.u32 %v2421, %v2424
      %v2426 = vrot.slane %v2425, 4
      %v2428 = vshll.u32 %v2056, 16
      %v2430 = vrot.slane %v2428, 5
      %v2431 = vsel %vm250, %v2426, %v2430
      %v2432 = vshrl.u32 %v2056, 16
      %v2434 = vrot.slane %v2432, 4
      %v2435 = vor.u32 %v2434, %v2430
      %v2436 = vrot.slane %v2435, 4
      %v2438 = vshll.u32 %v2057, 16
      %v2440 = vrot.slane %v2438, 5
      %v2441 = vsel %vm250, %v2436, %v2440
      %s2442 = scalar_lea.vmem %s1, 8
      %v2443 = vld [vmem:[%s2442] sm:$0x3]
      %v2444 = vunpack.c.l.b16 %v2071
      %v2445 = vunpack.c.l.b16 %v2081
      %v2446 = vunpack.c.l.b16 %v2095
      %v2447 = vunpack.c.l.b16 %v2105
      %v2448 = vunpack.c.l.b16 %v2119
      %v2449 = vunpack.c.l.b16 %v2129
      %v2450 = vunpack.c.l.b16 %v2143
      %v2451 = vunpack.c.l.b16 %v2153
      %v2452 = vunpack.c.l.b16 %v2167
      %v2453 = vunpack.c.l.b16 %v2177
      %v2454 = vunpack.c.l.b16 %v2191
      %v2455 = vunpack.c.l.b16 %v2201
      %v2456 = vunpack.c.l.b16 %v2215
      %v2457 = vunpack.c.l.b16 %v2225
      %v2458 = vunpack.c.l.b16 %v2239
      %v2459 = vunpack.c.l.b16 %v2249
      %v2460 = vunpack.c.l.b16 %v2263
      %v2461 = vunpack.c.l.b16 %v2273
      %v2462 = vunpack.c.l.b16 %v2287
      %v2463 = vunpack.c.l.b16 %v2297
      %v2464 = vunpack.c.l.b16 %v2311
      %v2465 = vunpack.c.l.b16 %v2321
      %v2466 = vunpack.c.l.b16 %v2335
      %v2467 = vunpack.c.l.b16 %v2345
      %v2468 = vunpack.c.l.b16 %v2359
      %v2469 = vunpack.c.l.b16 %v2369
      %v2470 = vunpack.c.l.b16 %v2383
      %v2471 = vunpack.c.l.b16 %v2393
      %v2472 = vunpack.c.l.b16 %v2407
      %v2473 = vunpack.c.l.b16 %v2417
      %v2474 = vunpack.c.l.b16 %v2431
      %v2475 = vunpack.c.l.b16 %v2441
      %v2476 = vpack.c.b16 %v2445, %v2444
      %v2477 = vpack.c.b16 %v2447, %v2446
      %v2478 = vpack.c.b16 %v2449, %v2448
      %v2479 = vpack.c.b16 %v2451, %v2450
      %v2480 = vpack.c.b16 %v2453, %v2452
      %v2481 = vpack.c.b16 %v2455, %v2454
      %v2482 = vpack.c.b16 %v2457, %v2456
      %v2483 = vpack.c.b16 %v2459, %v2458
      %v2484 = vpack.c.b16 %v2461, %v2460
      %v2485 = vpack.c.b16 %v2463, %v2462
      %v2486 = vpack.c.b16 %v2465, %v2464
      %v2487 = vpack.c.b16 %v2467, %v2466
      %v2488 = vpack.c.b16 %v2469, %v2468
      %v2489 = vpack.c.b16 %v2471, %v2470
      %v2490 = vpack.c.b16 %v2473, %v2472
      %v2491 = vpack.c.b16 %v2475, %v2474
      %v2493 = vsel %vm685, %v2476, 0
      %v2496 = vsel %vm685, %v2477, 0
      %v2499 = vsel %vm685, %v2478, 0
      %v2502 = vsel %vm685, %v2479, 0
      %v2505 = vsel %vm685, %v2480, 0
      %v2508 = vsel %vm685, %v2481, 0
      %v2511 = vsel %vm685, %v2482, 0
      %v2514 = vsel %vm685, %v2483, 0
      %v2517 = vsel %vm685, %v2484, 0
      %v2520 = vsel %vm685, %v2485, 0
      %v2523 = vsel %vm685, %v2486, 0
      %v2526 = vsel %vm685, %v2487, 0
      %v2529 = vsel %vm685, %v2488, 0
      %v2532 = vsel %vm685, %v2489, 0
      %v2535 = vsel %vm685, %v2490, 0
      %v2538 = vsel %vm685, %v2491, 0
      %v2541 = vsel %vm734, %v2443, 0
      %2543 = vmatprep.subr.bf16.mxu0 0
      %2544 = vmatpush1.bf16.msra.mxu0 0
      %2545 = vmatprep.subr.bf16.mxu0 0
      %2546 = vmatpush1.bf16.msra.mxu0 0
      %2547 = vmatprep.subr.bf16.mxu0 0
      %2548 = vmatpush1.bf16.msra.mxu0 0
      %2549 = vmatprep.subr.bf16.mxu0 0
      %2550 = vmatpush1.bf16.msra.mxu0 0
      %2551 = vmatprep.subr.bf16.mxu0 0
      %2552 = vmatpush1.bf16.msra.mxu0 0
      %2553 = vmatprep.subr.bf16.mxu0 0
      %2554 = vmatpush1.bf16.msra.mxu0 0
      %2555 = vmatprep.subr.bf16.mxu0 0
      %2556 = vmatpush1.bf16.msra.mxu0 0
      %2557 = vmatprep.subr.bf16.mxu0 0
      %2558 = vmatpush1.bf16.msra.mxu0 %v2541
      %2559 = vmatprep.subr.bf16.mxu0 0
      %2560 = vmatpush2.bf16.msra.mxu0 0
      %2561 = vmatprep.subr.bf16.mxu0 0
      %2562 = vmatpush2.bf16.msra.mxu0 0
      %2563 = vmatprep.subr.bf16.mxu0 0
      %2564 = vmatpush2.bf16.msra.mxu0 0
      %2565 = vmatprep.subr.bf16.mxu0 0
      %2566 = vmatpush2.bf16.msra.mxu0 0
      %2567 = vmatprep.subr.bf16.mxu0 0
      %2568 = vmatpush2.bf16.msra.mxu0 0
      %2569 = vmatprep.subr.bf16.mxu0 0
      %2570 = vmatpush2.bf16.msra.mxu0 0
      %2571 = vmatprep.subr.bf16.mxu0 0
      %2572 = vmatpush2.bf16.msra.mxu0 0
      %2573 = vmatprep.subr.bf16.mxu0 0
      %2574 = vmatpush2.bf16.msra.mxu0 0
      %2575 = vmatprep.mubr.bf16.mxu0 0
      %2576 = vmatmul.mubr.bf16.gmra.mxu0 %v2493
      %v2577 = vpop.f32.mrf.mxu0
      %v2578 = vadd.f32 0.0, %v2577
      %v2579 = vpop.f32.mrf.mxu0
      %v2580 = vpop.f32.mrf.mxu0
      %v2581 = vadd.f32 0.0, %v2580
      %v2582 = vpop.f32.mrf.mxu0
      %2583 = vmatprep.mubr.bf16.mxu0 0
      %2584 = vmatmul.mubr.bf16.gmra.mxu0 %v2496
      %v2585 = vpop.f32.mrf.mxu0
      %v2586 = vadd.f32 0.0, %v2585
      %v2587 = vpop.f32.mrf.mxu0
      %v2588 = vpop.f32.mrf.mxu0
      %v2589 = vadd.f32 0.0, %v2588
      %v2590 = vpop.f32.mrf.mxu0
      %2591 = vmatprep.mubr.bf16.mxu0 0
      %2592 = vmatmul.mubr.bf16.gmra.mxu0 %v2499
      %v2593 = vpop.f32.mrf.mxu0
      %v2594 = vadd.f32 0.0, %v2593
      %v2595 = vpop.f32.mrf.mxu0
      %v2596 = vpop.f32.mrf.mxu0
      %v2597 = vadd.f32 0.0, %v2596
      %v2598 = vpop.f32.mrf.mxu0
      %2599 = vmatprep.mubr.bf16.mxu0 0
      %2600 = vmatmul.mubr.bf16.gmra.mxu0 %v2502
      %v2601 = vpop.f32.mrf.mxu0
      %v2602 = vadd.f32 0.0, %v2601
      %v2603 = vpop.f32.mrf.mxu0
      %v2604 = vpop.f32.mrf.mxu0
      %v2605 = vadd.f32 0.0, %v2604
      %v2606 = vpop.f32.mrf.mxu0
      %2607 = vmatprep.mubr.bf16.mxu0 0
      %2608 = vmatmul.mubr.bf16.gmra.mxu0 %v2505
      %v2609 = vpop.f32.mrf.mxu0
      %v2610 = vadd.f32 0.0, %v2609
      %v2611 = vpop.f32.mrf.mxu0
      %v2612 = vpop.f32.mrf.mxu0
      %v2613 = vadd.f32 0.0, %v2612
      %v2614 = vpop.f32.mrf.mxu0
      %2615 = vmatprep.mubr.bf16.mxu0 0
      %2616 = vmatmul.mubr.bf16.gmra.mxu0 %v2508
      %v2617 = vpop.f32.mrf.mxu0
      %v2618 = vadd.f32 0.0, %v2617
      %v2619 = vpop.f32.mrf.mxu0
      %v2620 = vpop.f32.mrf.mxu0
      %v2621 = vadd.f32 0.0, %v2620
      %v2622 = vpop.f32.mrf.mxu0
      %2623 = vmatprep.mubr.bf16.mxu0 0
      %2624 = vmatmul.mubr.bf16.gmra.mxu0 %v2511
      %v2625 = vpop.f32.mrf.mxu0
      %v2626 = vadd.f32 0.0, %v2625
      %v2627 = vpop.f32.mrf.mxu0
      %v2628 = vpop.f32.mrf.mxu0
      %v2629 = vadd.f32 0.0, %v2628
      %v2630 = vpop.f32.mrf.mxu0
      %2631 = vmatprep.mubr.bf16.mxu0 0
      %2632 = vmatmul.mubr.bf16.gmra.mxu0 %v2514
      %v2633 = vpop.f32.mrf.mxu0
      %v2634 = vadd.f32 0.0, %v2633
      %v2635 = vpop.f32.mrf.mxu0
      %v2636 = vpop.f32.mrf.mxu0
      %v2637 = vadd.f32 0.0, %v2636
      %v2638 = vpop.f32.mrf.mxu0
      %2639 = vmatprep.mubr.bf16.mxu0 0
      %2640 = vmatmul.mubr.bf16.gmra.mxu0 %v2517
      %v2641 = vpop.f32.mrf.mxu0
      %v2642 = vadd.f32 0.0, %v2641
      %v2643 = vpop.f32.mrf.mxu0
      %v2644 = vpop.f32.mrf.mxu0
      %v2645 = vadd.f32 0.0, %v2644
      %v2646 = vpop.f32.mrf.mxu0
      %2647 = vmatprep.mubr.bf16.mxu0 0
      %2648 = vmatmul.mubr.bf16.gmra.mxu0 %v2520
      %v2649 = vpop.f32.mrf.mxu0
      %v2650 = vadd.f32 0.0, %v2649
      %v2651 = vpop.f32.mrf.mxu0
      %v2652 = vpop.f32.mrf.mxu0
      %v2653 = vadd.f32 0.0, %v2652
      %v2654 = vpop.f32.mrf.mxu0
      %2655 = vmatprep.mubr.bf16.mxu0 0
      %2656 = vmatmul.mubr.bf16.gmra.mxu0 %v2523
      %v2657 = vpop.f32.mrf.mxu0
      %v2658 = vadd.f32 0.0, %v2657
      %v2659 = vpop.f32.mrf.mxu0
      %v2660 = vpop.f32.mrf.mxu0
      %v2661 = vadd.f32 0.0, %v2660
      %v2662 = vpop.f32.mrf.mxu0
      %2663 = vmatprep.mubr.bf16.mxu0 0
      %2664 = vmatmul.mubr.bf16.gmra.mxu0 %v2526
      %v2665 = vpop.f32.mrf.mxu0
      %v2666 = vadd.f32 0.0, %v2665
      %v2667 = vpop.f32.mrf.mxu0
      %v2668 = vpop.f32.mrf.mxu0
      %v2669 = vadd.f32 0.0, %v2668
      %v2670 = vpop.f32.mrf.mxu0
      %2671 = vmatprep.mubr.bf16.mxu0 0
      %2672 = vmatmul.mubr.bf16.gmra.mxu0 %v2529
      %v2673 = vpop.f32.mrf.mxu0
      %v2674 = vadd.f32 0.0, %v2673
      %v2675 = vpop.f32.mrf.mxu0
      %v2676 = vpop.f32.mrf.mxu0
      %v2677 = vadd.f32 0.0, %v2676
      %v2678 = vpop.f32.mrf.mxu0
      %2679 = vmatprep.mubr.bf16.mxu0 0
      %2680 = vmatmul.mubr.bf16.gmra.mxu0 %v2532
      %v2681 = vpop.f32.mrf.mxu0
      %v2682 = vadd.f32 0.0, %v2681
      %v2683 = vpop.f32.mrf.mxu0
      %v2684 = vpop.f32.mrf.mxu0
      %v2685 = vadd.f32 0.0, %v2684
      %v2686 = vpop.f32.mrf.mxu0
      %2687 = vmatprep.mubr.bf16.mxu0 0
      %2688 = vmatmul.mubr.bf16.gmra.mxu0 %v2535
      %v2689 = vpop.f32.mrf.mxu0
      %v2690 = vadd.f32 0.0, %v2689
      %v2691 = vpop.f32.mrf.mxu0
      %v2692 = vpop.f32.mrf.mxu0
      %v2693 = vadd.f32 0.0, %v2692
      %v2694 = vpop.f32.mrf.mxu0
      %2695 = vmatprep.mubr.bf16.mxu0 0
      %2696 = vmatmul.mubr.bf16.gmra.mxu0 %v2538
      %v2697 = vpop.f32.mrf.mxu0
      %v2698 = vadd.f32 0.0, %v2697
      %v2699 = vpop.f32.mrf.mxu0
      %v2700 = vpop.f32.mrf.mxu0
      %v2701 = vadd.f32 0.0, %v2700
      %v2702 = vpop.f32.mrf.mxu0
      %2703 = vdwg.mxu0
      %v2704 = vadd.f32 %v1978, %v2578
      %v2705 = vadd.f32 %v1979, %v2581
      %v2706 = vadd.f32 %v1980, %v2586
      %v2707 = vadd.f32 %v1981, %v2589
      %v2708 = vadd.f32 %v1982, %v2594
      %v2709 = vadd.f32 %v1983, %v2597
      %v2710 = vadd.f32 %v1984, %v2602
      %v2711 = vadd.f32 %v1985, %v2605
      %v2712 = vadd.f32 %v1986, %v2610
      %v2713 = vadd.f32 %v1987, %v2613
      %v2714 = vadd.f32 %v1988, %v2618
      %v2715 = vadd.f32 %v1989, %v2621
      %v2716 = vadd.f32 %v1990, %v2626
      %v2717 = vadd.f32 %v1991, %v2629
      %v2718 = vadd.f32 %v1992, %v2634
      %v2719 = vadd.f32 %v1993, %v2637
      %v2720 = vadd.f32 %v1994, %v2642
      %v2721 = vadd.f32 %v1995, %v2645
      %v2722 = vadd.f32 %v1996, %v2650
      %v2723 = vadd.f32 %v1997, %v2653
      %v2724 = vadd.f32 %v1998, %v2658
      %v2725 = vadd.f32 %v1999, %v2661
      %v2726 = vadd.f32 %v2000, %v2666
      %v2727 = vadd.f32 %v2001, %v2669
      %v2728 = vadd.f32 %v2002, %v2674
      %v2729 = vadd.f32 %v2003, %v2677
      %v2730 = vadd.f32 %v2004, %v2682
      %v2731 = vadd.f32 %v2005, %v2685
      %v2732 = vadd.f32 %v2006, %v2690
      %v2733 = vadd.f32 %v2007, %v2693
      %v2734 = vadd.f32 %v2008, %v2698
      %v2735 = vadd.f32 %v2009, %v2701
      %v2736 = vld [vmem:[%s1651] sm:$0xe]
      %v2737 = vld [vmem:[%s1651 + $0xc] sm:$0xe]
      %v2738 = vld [vmem:[%s1651 + $0x18] sm:$0xe]
      %v2739 = vld [vmem:[%s1651 + $0x24] sm:$0xe]
      %v2740 = vld [vmem:[%s1651 + $0x30] sm:$0xe]
      %v2741 = vld [vmem:[%s1651 + $0x3c] sm:$0xe]
      %v2742 = vld [vmem:[%s1651 + $0x48] sm:$0xe]
      %v2743 = vld [vmem:[%s1651 + $0x54] sm:$0xe]
      %v2744 = vld [vmem:[%s1651 + $0x60] sm:$0xe]
      %v2745 = vld [vmem:[%s1651 + $0x6c] sm:$0xe]
      %v2746 = vld [vmem:[%s1651 + $0x78] sm:$0xe]
      %v2747 = vld [vmem:[%s1651 + $0x84] sm:$0xe]
      %v2748 = vld [vmem:[%s1651 + $0x90] sm:$0xe]
      %v2749 = vld [vmem:[%s1651 + $0x9c] sm:$0xe]
      %v2750 = vld [vmem:[%s1651 + $0xa8] sm:$0xe]
      %v2751 = vld [vmem:[%s1651 + $0xb4] sm:$0xe]
      %v2800 = vrot.slane %v2736, 5
      %v2801 = vrot.slane %v2800, 4
      %v2802 = vrot.slane %v2011, 5
      %v2803 = vsel %vm1241, %v2801, %v2802
      %v2804 = vrot.slane %v2802, 4
      %v2805 = vrot.slane %v2012, 5
      %v2806 = vsel %vm1241, %v2804, %v2805
      %v2807 = vrot.slane %v2737, 5
      %v2808 = vrot.slane %v2807, 4
      %v2809 = vrot.slane %v2014, 5
      %v2810 = vsel %vm1241, %v2808, %v2809
      %v2811 = vrot.slane %v2809, 4
      %v2812 = vrot.slane %v2015, 5
      %v2813 = vsel %vm1241, %v2811, %v2812
      %v2814 = vrot.slane %v2738, 5
      %v2815 = vrot.slane %v2814, 4
      %v2816 = vrot.slane %v2017, 5
      %v2817 = vsel %vm1241, %v2815, %v2816
      %v2818 = vrot.slane %v2816, 4
      %v2819 = vrot.slane %v2018, 5
      %v2820 = vsel %vm1241, %v2818, %v2819
      %v2821 = vrot.slane %v2739, 5
      %v2822 = vrot.slane %v2821, 4
      %v2823 = vrot.slane %v2020, 5
      %v2824 = vsel %vm1241, %v2822, %v2823
      %v2825 = vrot.slane %v2823, 4
      %v2826 = vrot.slane %v2021, 5
      %v2827 = vsel %vm1241, %v2825, %v2826
      %v2828 = vrot.slane %v2740, 5
      %v2829 = vrot.slane %v2828, 4
      %v2830 = vrot.slane %v2023, 5
      %v2831 = vsel %vm1241, %v2829, %v2830
      %v2832 = vrot.slane %v2830, 4
      %v2833 = vrot.slane %v2024, 5
      %v2834 = vsel %vm1241, %v2832, %v2833
      %v2835 = vrot.slane %v2741, 5
      %v2836 = vrot.slane %v2835, 4
      %v2837 = vrot.slane %v2026, 5
      %v2838 = vsel %vm1241, %v2836, %v2837
      %v2839 = vrot.slane %v2837, 4
      %v2840 = vrot.slane %v2027, 5
      %v2841 = vsel %vm1241, %v2839, %v2840
      %v2842 = vrot.slane %v2742, 5
      %v2843 = vrot.slane %v2842, 4
      %v2844 = vrot.slane %v2029, 5
      %v2845 = vsel %vm1241, %v2843, %v2844
      %v2846 = vrot.slane %v2844, 4
      %v2847 = vrot.slane %v2030, 5
      %v2848 = vsel %vm1241, %v2846, %v2847
      %v2849 = vrot.slane %v2743, 5
      %v2850 = vrot.slane %v2849, 4
      %v2851 = vrot.slane %v2032, 5
      %v2852 = vsel %vm1241, %v2850, %v2851
      %v2853 = vrot.slane %v2851, 4
      %v2854 = vrot.slane %v2033, 5
      %v2855 = vsel %vm1241, %v2853, %v2854
      %v2856 = vrot.slane %v2744, 5
      %v2857 = vrot.slane %v2856, 4
      %v2858 = vrot.slane %v2035, 5
      %v2859 = vsel %vm1241, %v2857, %v2858
      %v2860 = vrot.slane %v2858, 4
      %v2861 = vrot.slane %v2036, 5
      %v2862 = vsel %vm1241, %v2860, %v2861
      %v2863 = vrot.slane %v2745, 5
      %v2864 = vrot.slane %v2863, 4
      %v2865 = vrot.slane %v2038, 5
      %v2866 = vsel %vm1241, %v2864, %v2865
      %v2867 = vrot.slane %v2865, 4
      %v2868 = vrot.slane %v2039, 5
      %v2869 = vsel %vm1241, %v2867, %v2868
      %v2870 = vrot.slane %v2746, 5
      %v2871 = vrot.slane %v2870, 4
      %v2872 = vrot.slane %v2041, 5
      %v2873 = vsel %vm1241, %v2871, %v2872
      %v2874 = vrot.slane %v2872, 4
      %v2875 = vrot.slane %v2042, 5
      %v2876 = vsel %vm1241, %v2874, %v2875
      %v2877 = vrot.slane %v2747, 5
      %v2878 = vrot.slane %v2877, 4
      %v2879 = vrot.slane %v2044, 5
      %v2880 = vsel %vm1241, %v2878, %v2879
      %v2881 = vrot.slane %v2879, 4
      %v2882 = vrot.slane %v2045, 5
      %v2883 = vsel %vm1241, %v2881, %v2882
      %v2884 = vrot.slane %v2748, 5
      %v2885 = vrot.slane %v2884, 4
      %v2886 = vrot.slane %v2047, 5
      %v2887 = vsel %vm1241, %v2885, %v2886
      %v2888 = vrot.slane %v2886, 4
      %v2889 = vrot.slane %v2048, 5
      %v2890 = vsel %vm1241, %v2888, %v2889
      %v2891 = vrot.slane %v2749, 5
      %v2892 = vrot.slane %v2891, 4
      %v2893 = vrot.slane %v2050, 5
      %v2894 = vsel %vm1241, %v2892, %v2893
      %v2895 = vrot.slane %v2893, 4
      %v2896 = vrot.slane %v2051, 5
      %v2897 = vsel %vm1241, %v2895, %v2896
      %v2898 = vrot.slane %v2750, 5
      %v2899 = vrot.slane %v2898, 4
      %v2900 = vrot.slane %v2053, 5
      %v2901 = vsel %vm1241, %v2899, %v2900
      %v2902 = vrot.slane %v2900, 4
      %v2903 = vrot.slane %v2054, 5
      %v2904 = vsel %vm1241, %v2902, %v2903
      %v2905 = vrot.slane %v2751, 5
      %v2906 = vrot.slane %v2905, 4
      %v2907 = vrot.slane %v2056, 5
      %v2908 = vsel %vm1241, %v2906, %v2907
      %v2909 = vrot.slane %v2907, 4
      %v2910 = vrot.slane %v2057, 5
      %v2911 = vsel %vm1241, %v2909, %v2910
      %s2912 = scalar_lea.vmem %s1, 10
      %v2913 = vld [vmem:[%s2912] sm:$0x3]
      %v2914 = vunpack.c.l.b16 %v2803
      %v2915 = vunpack.c.l.b16 %v2806
      %v2916 = vunpack.c.l.b16 %v2810
      %v2917 = vunpack.c.l.b16 %v2813
      %v2918 = vunpack.c.l.b16 %v2817
      %v2919 = vunpack.c.l.b16 %v2820
      %v2920 = vunpack.c.l.b16 %v2824
      %v2921 = vunpack.c.l.b16 %v2827
      %v2922 = vunpack.c.l.b16 %v2831
      %v2923 = vunpack.c.l.b16 %v2834
      %v2924 = vunpack.c.l.b16 %v2838
      %v2925 = vunpack.c.l.b16 %v2841
      %v2926 = vunpack.c.l.b16 %v2845
      %v2927 = vunpack.c.l.b16 %v2848
      %v2928 = vunpack.c.l.b16 %v2852
      %v2929 = vunpack.c.l.b16 %v2855
      %v2930 = vunpack.c.l.b16 %v2859
      %v2931 = vunpack.c.l.b16 %v2862
      %v2932 = vunpack.c.l.b16 %v2866
      %v2933 = vunpack.c.l.b16 %v2869
      %v2934 = vunpack.c.l.b16 %v2873
      %v2935 = vunpack.c.l.b16 %v2876
      %v2936 = vunpack.c.l.b16 %v2880
      %v2937 = vunpack.c.l.b16 %v2883
      %v2938 = vunpack.c.l.b16 %v2887
      %v2939 = vunpack.c.l.b16 %v2890
      %v2940 = vunpack.c.l.b16 %v2894
      %v2941 = vunpack.c.l.b16 %v2897
      %v2942 = vunpack.c.l.b16 %v2901
      %v2943 = vunpack.c.l.b16 %v2904
      %v2944 = vunpack.c.l.b16 %v2908
      %v2945 = vunpack.c.l.b16 %v2911
      %v2946 = vpack.c.b16 %v2915, %v2914
      %v2947 = vpack.c.b16 %v2917, %v2916
      %v2948 = vpack.c.b16 %v2919, %v2918
      %v2949 = vpack.c.b16 %v2921, %v2920
      %v2950 = vpack.c.b16 %v2923, %v2922
      %v2951 = vpack.c.b16 %v2925, %v2924
      %v2952 = vpack.c.b16 %v2927, %v2926
      %v2953 = vpack.c.b16 %v2929, %v2928
      %v2954 = vpack.c.b16 %v2931, %v2930
      %v2955 = vpack.c.b16 %v2933, %v2932
      %v2956 = vpack.c.b16 %v2935, %v2934
      %v2957 = vpack.c.b16 %v2937, %v2936
      %v2958 = vpack.c.b16 %v2939, %v2938
      %v2959 = vpack.c.b16 %v2941, %v2940
      %v2960 = vpack.c.b16 %v2943, %v2942
      %v2961 = vpack.c.b16 %v2945, %v2944
      %v2963 = vsel %vm685, %v2946, 0
      %v2966 = vsel %vm685, %v2947, 0
      %v2969 = vsel %vm685, %v2948, 0
      %v2972 = vsel %vm685, %v2949, 0
      %v2975 = vsel %vm685, %v2950, 0
      %v2978 = vsel %vm685, %v2951, 0
      %v2981 = vsel %vm685, %v2952, 0
      %v2984 = vsel %vm685, %v2953, 0
      %v2987 = vsel %vm685, %v2954, 0
      %v2990 = vsel %vm685, %v2955, 0
      %v2993 = vsel %vm685, %v2956, 0
      %v2996 = vsel %vm685, %v2957, 0
      %v2999 = vsel %vm685, %v2958, 0
      %v3002 = vsel %vm685, %v2959, 0
      %v3005 = vsel %vm685, %v2960, 0
      %v3008 = vsel %vm685, %v2961, 0
      %v3011 = vsel %vm734, %v2913, 0
      %3013 = vmatprep.subr.bf16.mxu0 0
      %3014 = vmatpush1.bf16.msra.mxu0 0
      %3015 = vmatprep.subr.bf16.mxu0 0
      %3016 = vmatpush1.bf16.msra.mxu0 0
      %3017 = vmatprep.subr.bf16.mxu0 0
      %3018 = vmatpush1.bf16.msra.mxu0 0
      %3019 = vmatprep.subr.bf16.mxu0 0
      %3020 = vmatpush1.bf16.msra.mxu0 0
      %3021 = vmatprep.subr.bf16.mxu0 0
      %3022 = vmatpush1.bf16.msra.mxu0 0
      %3023 = vmatprep.subr.bf16.mxu0 0
      %3024 = vmatpush1.bf16.msra.mxu0 0
      %3025 = vmatprep.subr.bf16.mxu0 0
      %3026 = vmatpush1.bf16.msra.mxu0 0
      %3027 = vmatprep.subr.bf16.mxu0 0
      %3028 = vmatpush1.bf16.msra.mxu0 %v3011
      %3029 = vmatprep.subr.bf16.mxu0 0
      %3030 = vmatpush2.bf16.msra.mxu0 0
      %3031 = vmatprep.subr.bf16.mxu0 0
      %3032 = vmatpush2.bf16.msra.mxu0 0
      %3033 = vmatprep.subr.bf16.mxu0 0
      %3034 = vmatpush2.bf16.msra.mxu0 0
      %3035 = vmatprep.subr.bf16.mxu0 0
      %3036 = vmatpush2.bf16.msra.mxu0 0
      %3037 = vmatprep.subr.bf16.mxu0 0
      %3038 = vmatpush2.bf16.msra.mxu0 0
      %3039 = vmatprep.subr.bf16.mxu0 0
      %3040 = vmatpush2.bf16.msra.mxu0 0
      %3041 = vmatprep.subr.bf16.mxu0 0
      %3042 = vmatpush2.bf16.msra.mxu0 0
      %3043 = vmatprep.subr.bf16.mxu0 0
      %3044 = vmatpush2.bf16.msra.mxu0 0
      %3045 = vmatprep.mubr.bf16.mxu0 0
      %3046 = vmatmul.mubr.bf16.gmra.mxu0 %v2963
      %v3047 = vpop.f32.mrf.mxu0
      %v3048 = vadd.f32 0.0, %v3047
      %v3049 = vpop.f32.mrf.mxu0
      %v3050 = vpop.f32.mrf.mxu0
      %v3051 = vadd.f32 0.0, %v3050
      %v3052 = vpop.f32.mrf.mxu0
      %3053 = vmatprep.mubr.bf16.mxu0 0
      %3054 = vmatmul.mubr.bf16.gmra.mxu0 %v2966
      %v3055 = vpop.f32.mrf.mxu0
      %v3056 = vadd.f32 0.0, %v3055
      %v3057 = vpop.f32.mrf.mxu0
      %v3058 = vpop.f32.mrf.mxu0
      %v3059 = vadd.f32 0.0, %v3058
      %v3060 = vpop.f32.mrf.mxu0
      %3061 = vmatprep.mubr.bf16.mxu0 0
      %3062 = vmatmul.mubr.bf16.gmra.mxu0 %v2969
      %v3063 = vpop.f32.mrf.mxu0
      %v3064 = vadd.f32 0.0, %v3063
      %v3065 = vpop.f32.mrf.mxu0
      %v3066 = vpop.f32.mrf.mxu0
      %v3067 = vadd.f32 0.0, %v3066
      %v3068 = vpop.f32.mrf.mxu0
      %3069 = vmatprep.mubr.bf16.mxu0 0
      %3070 = vmatmul.mubr.bf16.gmra.mxu0 %v2972
      %v3071 = vpop.f32.mrf.mxu0
      %v3072 = vadd.f32 0.0, %v3071
      %v3073 = vpop.f32.mrf.mxu0
      %v3074 = vpop.f32.mrf.mxu0
      %v3075 = vadd.f32 0.0, %v3074
      %v3076 = vpop.f32.mrf.mxu0
      %3077 = vmatprep.mubr.bf16.mxu0 0
      %3078 = vmatmul.mubr.bf16.gmra.mxu0 %v2975
      %v3079 = vpop.f32.mrf.mxu0
      %v3080 = vadd.f32 0.0, %v3079
      %v3081 = vpop.f32.mrf.mxu0
      %v3082 = vpop.f32.mrf.mxu0
      %v3083 = vadd.f32 0.0, %v3082
      %v3084 = vpop.f32.mrf.mxu0
      %3085 = vmatprep.mubr.bf16.mxu0 0
      %3086 = vmatmul.mubr.bf16.gmra.mxu0 %v2978
      %v3087 = vpop.f32.mrf.mxu0
      %v3088 = vadd.f32 0.0, %v3087
      %v3089 = vpop.f32.mrf.mxu0
      %v3090 = vpop.f32.mrf.mxu0
      %v3091 = vadd.f32 0.0, %v3090
      %v3092 = vpop.f32.mrf.mxu0
      %3093 = vmatprep.mubr.bf16.mxu0 0
      %3094 = vmatmul.mubr.bf16.gmra.mxu0 %v2981
      %v3095 = vpop.f32.mrf.mxu0
      %v3096 = vadd.f32 0.0, %v3095
      %v3097 = vpop.f32.mrf.mxu0
      %v3098 = vpop.f32.mrf.mxu0
      %v3099 = vadd.f32 0.0, %v3098
      %v3100 = vpop.f32.mrf.mxu0
      %3101 = vmatprep.mubr.bf16.mxu0 0
      %3102 = vmatmul.mubr.bf16.gmra.mxu0 %v2984
      %v3103 = vpop.f32.mrf.mxu0
      %v3104 = vadd.f32 0.0, %v3103
      %v3105 = vpop.f32.mrf.mxu0
      %v3106 = vpop.f32.mrf.mxu0
      %v3107 = vadd.f32 0.0, %v3106
      %v3108 = vpop.f32.mrf.mxu0
      %3109 = vmatprep.mubr.bf16.mxu0 0
      %3110 = vmatmul.mubr.bf16.gmra.mxu0 %v2987
      %v3111 = vpop.f32.mrf.mxu0
      %v3112 = vadd.f32 0.0, %v3111
      %v3113 = vpop.f32.mrf.mxu0
      %v3114 = vpop.f32.mrf.mxu0
      %v3115 = vadd.f32 0.0, %v3114
      %v3116 = vpop.f32.mrf.mxu0
      %3117 = vmatprep.mubr.bf16.mxu0 0
      %3118 = vmatmul.mubr.bf16.gmra.mxu0 %v2990
      %v3119 = vpop.f32.mrf.mxu0
      %v3120 = vadd.f32 0.0, %v3119
      %v3121 = vpop.f32.mrf.mxu0
      %v3122 = vpop.f32.mrf.mxu0
      %v3123 = vadd.f32 0.0, %v3122
      %v3124 = vpop.f32.mrf.mxu0
      %3125 = vmatprep.mubr.bf16.mxu0 0
      %3126 = vmatmul.mubr.bf16.gmra.mxu0 %v2993
      %v3127 = vpop.f32.mrf.mxu0
      %v3128 = vadd.f32 0.0, %v3127
      %v3129 = vpop.f32.mrf.mxu0
      %v3130 = vpop.f32.mrf.mxu0
      %v3131 = vadd.f32 0.0, %v3130
      %v3132 = vpop.f32.mrf.mxu0
      %3133 = vmatprep.mubr.bf16.mxu0 0
      %3134 = vmatmul.mubr.bf16.gmra.mxu0 %v2996
      %v3135 = vpop.f32.mrf.mxu0
      %v3136 = vadd.f32 0.0, %v3135
      %v3137 = vpop.f32.mrf.mxu0
      %v3138 = vpop.f32.mrf.mxu0
      %v3139 = vadd.f32 0.0, %v3138
      %v3140 = vpop.f32.mrf.mxu0
      %3141 = vmatprep.mubr.bf16.mxu0 0
      %3142 = vmatmul.mubr.bf16.gmra.mxu0 %v2999
      %v3143 = vpop.f32.mrf.mxu0
      %v3144 = vadd.f32 0.0, %v3143
      %v3145 = vpop.f32.mrf.mxu0
      %v3146 = vpop.f32.mrf.mxu0
      %v3147 = vadd.f32 0.0, %v3146
      %v3148 = vpop.f32.mrf.mxu0
      %3149 = vmatprep.mubr.bf16.mxu0 0
      %3150 = vmatmul.mubr.bf16.gmra.mxu0 %v3002
      %v3151 = vpop.f32.mrf.mxu0
      %v3152 = vadd.f32 0.0, %v3151
      %v3153 = vpop.f32.mrf.mxu0
      %v3154 = vpop.f32.mrf.mxu0
      %v3155 = vadd.f32 0.0, %v3154
      %v3156 = vpop.f32.mrf.mxu0
      %3157 = vmatprep.mubr.bf16.mxu0 0
      %3158 = vmatmul.mubr.bf16.gmra.mxu0 %v3005
      %v3159 = vpop.f32.mrf.mxu0
      %v3160 = vadd.f32 0.0, %v3159
      %v3161 = vpop.f32.mrf.mxu0
      %v3162 = vpop.f32.mrf.mxu0
      %v3163 = vadd.f32 0.0, %v3162
      %v3164 = vpop.f32.mrf.mxu0
      %3165 = vmatprep.mubr.bf16.mxu0 0
      %3166 = vmatmul.mubr.bf16.gmra.mxu0 %v3008
      %v3167 = vpop.f32.mrf.mxu0
      %v3168 = vadd.f32 0.0, %v3167
      %v3169 = vpop.f32.mrf.mxu0
      %v3170 = vpop.f32.mrf.mxu0
      %v3171 = vadd.f32 0.0, %v3170
      %v3172 = vpop.f32.mrf.mxu0
      %3173 = vdwg.mxu0
      %v3174 = vadd.f32 %v2704, %v3048
      %v3175 = vadd.f32 %v2705, %v3051
      %v3176 = vadd.f32 %v2706, %v3056
      %v3177 = vadd.f32 %v2707, %v3059
      %v3178 = vadd.f32 %v2708, %v3064
      %v3179 = vadd.f32 %v2709, %v3067
      %v3180 = vadd.f32 %v2710, %v3072
      %v3181 = vadd.f32 %v2711, %v3075
      %v3182 = vadd.f32 %v2712, %v3080
      %v3183 = vadd.f32 %v2713, %v3083
      %v3184 = vadd.f32 %v2714, %v3088
      %v3185 = vadd.f32 %v2715, %v3091
      %v3186 = vadd.f32 %v2716, %v3096
      %v3187 = vadd.f32 %v2717, %v3099
      %v3188 = vadd.f32 %v2718, %v3104
      %v3189 = vadd.f32 %v2719, %v3107
      %v3190 = vadd.f32 %v2720, %v3112
      %v3191 = vadd.f32 %v2721, %v3115
      %v3192 = vadd.f32 %v2722, %v3120
      %v3193 = vadd.f32 %v2723, %v3123
      %v3194 = vadd.f32 %v2724, %v3128
      %v3195 = vadd.f32 %v2725, %v3131
      %v3196 = vadd.f32 %v2726, %v3136
      %v3197 = vadd.f32 %v2727, %v3139
      %v3198 = vadd.f32 %v2728, %v3144
      %v3199 = vadd.f32 %v2729, %v3147
      %v3200 = vadd.f32 %v2730, %v3152
      %v3201 = vadd.f32 %v2731, %v3155
      %v3202 = vadd.f32 %v2732, %v3160
      %v3203 = vadd.f32 %v2733, %v3163
      %v3204 = vadd.f32 %v2734, %v3168
      %v3205 = vadd.f32 %v2735, %v3171
      %s3206 = sadd.s32 %s195, 2
      %s3207 = smul.u32 %s3206, 3
      %s3208 = smul.addr %s3207, 4
      %s3209 = scalar_lea.vmem %s183, %s3208
      %v3210 = vld [vmem:[%s3209] sm:$0xf]
      %v3211 = vld [vmem:[%s3209 + $0x4] sm:$0xf]
      %v3212 = vld [vmem:[%s3209 + $0xc] sm:$0xf]
      %v3213 = vld [vmem:[%s3209 + $0x10] sm:$0xf]
      %v3214 = vld [vmem:[%s3209 + $0x18] sm:$0xf]
      %v3215 = vld [vmem:[%s3209 + $0x1c] sm:$0xf]
      %v3216 = vld [vmem:[%s3209 + $0x24] sm:$0xf]
      %v3217 = vld [vmem:[%s3209 + $0x28] sm:$0xf]
      %v3218 = vld [vmem:[%s3209 + $0x30] sm:$0xf]
      %v3219 = vld [vmem:[%s3209 + $0x34] sm:$0xf]
      %v3220 = vld [vmem:[%s3209 + $0x3c] sm:$0xf]
      %v3221 = vld [vmem:[%s3209 + $0x40] sm:$0xf]
      %v3222 = vld [vmem:[%s3209 + $0x48] sm:$0xf]
      %v3223 = vld [vmem:[%s3209 + $0x4c] sm:$0xf]
      %v3224 = vld [vmem:[%s3209 + $0x54] sm:$0xf]
      %v3225 = vld [vmem:[%s3209 + $0x58] sm:$0xf]
      %v3226 = vld [vmem:[%s3209 + $0x60] sm:$0xf]
      %v3227 = vld [vmem:[%s3209 + $0x64] sm:$0xf]
      %v3228 = vld [vmem:[%s3209 + $0x6c] sm:$0xf]
      %v3229 = vld [vmem:[%s3209 + $0x70] sm:$0xf]
      %v3230 = vld [vmem:[%s3209 + $0x78] sm:$0xf]
      %v3231 = vld [vmem:[%s3209 + $0x7c] sm:$0xf]
      %v3232 = vld [vmem:[%s3209 + $0x84] sm:$0xf]
      %v3233 = vld [vmem:[%s3209 + $0x88] sm:$0xf]
      %v3234 = vld [vmem:[%s3209 + $0x90] sm:$0xf]
      %v3235 = vld [vmem:[%s3209 + $0x94] sm:$0xf]
      %v3236 = vld [vmem:[%s3209 + $0x9c] sm:$0xf]
      %v3237 = vld [vmem:[%s3209 + $0xa0] sm:$0xf]
      %v3238 = vld [vmem:[%s3209 + $0xa8] sm:$0xf]
      %v3239 = vld [vmem:[%s3209 + $0xac] sm:$0xf]
      %v3240 = vld [vmem:[%s3209 + $0xb4] sm:$0xf]
      %v3241 = vld [vmem:[%s3209 + $0xb8] sm:$0xf]
      %s3242 = scalar_lea.vmem %s1, 12
      %v3243 = vld [vmem:[%s3242] sm:$0x3]
      %v3276 = vunpack.c.l.b16 %v3210
      %v3277 = vunpack.c.l.b16 %v3211
      %v3278 = vunpack.c.l.b16 %v3212
      %v3279 = vunpack.c.l.b16 %v3213
      %v3280 = vunpack.c.l.b16 %v3214
      %v3281 = vunpack.c.l.b16 %v3215
      %v3282 = vunpack.c.l.b16 %v3216
      %v3283 = vunpack.c.l.b16 %v3217
      %v3284 = vunpack.c.l.b16 %v3218
      %v3285 = vunpack.c.l.b16 %v3219
      %v3286 = vunpack.c.l.b16 %v3220
      %v3287 = vunpack.c.l.b16 %v3221
      %v3288 = vunpack.c.l.b16 %v3222
      %v3289 = vunpack.c.l.b16 %v3223
      %v3290 = vunpack.c.l.b16 %v3224
      %v3291 = vunpack.c.l.b16 %v3225
      %v3292 = vunpack.c.l.b16 %v3226
      %v3293 = vunpack.c.l.b16 %v3227
      %v3294 = vunpack.c.l.b16 %v3228
      %v3295 = vunpack.c.l.b16 %v3229
      %v3296 = vunpack.c.l.b16 %v3230
      %v3297 = vunpack.c.l.b16 %v3231
      %v3298 = vunpack.c.l.b16 %v3232
      %v3299 = vunpack.c.l.b16 %v3233
      %v3300 = vunpack.c.l.b16 %v3234
      %v3301 = vunpack.c.l.b16 %v3235
      %v3302 = vunpack.c.l.b16 %v3236
      %v3303 = vunpack.c.l.b16 %v3237
      %v3304 = vunpack.c.l.b16 %v3238
      %v3305 = vunpack.c.l.b16 %v3239
      %v3306 = vunpack.c.l.b16 %v3240
      %v3307 = vunpack.c.l.b16 %v3241
      %v3308 = vpack.c.b16 %v3277, %v3276
      %v3309 = vpack.c.b16 %v3279, %v3278
      %v3310 = vpack.c.b16 %v3281, %v3280
      %v3311 = vpack.c.b16 %v3283, %v3282
      %v3312 = vpack.c.b16 %v3285, %v3284
      %v3313 = vpack.c.b16 %v3287, %v3286
      %v3314 = vpack.c.b16 %v3289, %v3288
      %v3315 = vpack.c.b16 %v3291, %v3290
      %v3316 = vpack.c.b16 %v3293, %v3292
      %v3317 = vpack.c.b16 %v3295, %v3294
      %v3318 = vpack.c.b16 %v3297, %v3296
      %v3319 = vpack.c.b16 %v3299, %v3298
      %v3320 = vpack.c.b16 %v3301, %v3300
      %v3321 = vpack.c.b16 %v3303, %v3302
      %v3322 = vpack.c.b16 %v3305, %v3304
      %v3323 = vpack.c.b16 %v3307, %v3306
      %v3325 = vsel %vm685, %v3308, 0
      %v3328 = vsel %vm685, %v3309, 0
      %v3331 = vsel %vm685, %v3310, 0
      %v3334 = vsel %vm685, %v3311, 0
      %v3337 = vsel %vm685, %v3312, 0
      %v3340 = vsel %vm685, %v3313, 0
      %v3343 = vsel %vm685, %v3314, 0
      %v3346 = vsel %vm685, %v3315, 0
      %v3349 = vsel %vm685, %v3316, 0
      %v3352 = vsel %vm685, %v3317, 0
      %v3355 = vsel %vm685, %v3318, 0
      %v3358 = vsel %vm685, %v3319, 0
      %v3361 = vsel %vm685, %v3320, 0
      %v3364 = vsel %vm685, %v3321, 0
      %v3367 = vsel %vm685, %v3322, 0
      %v3370 = vsel %vm685, %v3323, 0
      %v3373 = vsel %vm734, %v3243, 0
      %3375 = vmatprep.subr.bf16.mxu0 0
      %3376 = vmatpush1.bf16.msra.mxu0 0
      %3377 = vmatprep.subr.bf16.mxu0 0
      %3378 = vmatpush1.bf16.msra.mxu0 0
      %3379 = vmatprep.subr.bf16.mxu0 0
      %3380 = vmatpush1.bf16.msra.mxu0 0
      %3381 = vmatprep.subr.bf16.mxu0 0
      %3382 = vmatpush1.bf16.msra.mxu0 0
      %3383 = vmatprep.subr.bf16.mxu0 0
      %3384 = vmatpush1.bf16.msra.mxu0 0
      %3385 = vmatprep.subr.bf16.mxu0 0
      %3386 = vmatpush1.bf16.msra.mxu0 0
      %3387 = vmatprep.subr.bf16.mxu0 0
      %3388 = vmatpush1.bf16.msra.mxu0 0
      %3389 = vmatprep.subr.bf16.mxu0 0
      %3390 = vmatpush1.bf16.msra.mxu0 %v3373
      %3391 = vmatprep.subr.bf16.mxu0 0
      %3392 = vmatpush2.bf16.msra.mxu0 0
      %3393 = vmatprep.subr.bf16.mxu0 0
      %3394 = vmatpush2.bf16.msra.mxu0 0
      %3395 = vmatprep.subr.bf16.mxu0 0
      %3396 = vmatpush2.bf16.msra.mxu0 0
      %3397 = vmatprep.subr.bf16.mxu0 0
      %3398 = vmatpush2.bf16.msra.mxu0 0
      %3399 = vmatprep.subr.bf16.mxu0 0
      %3400 = vmatpush2.bf16.msra.mxu0 0
      %3401 = vmatprep.subr.bf16.mxu0 0
      %3402 = vmatpush2.bf16.msra.mxu0 0
      %3403 = vmatprep.subr.bf16.mxu0 0
      %3404 = vmatpush2.bf16.msra.mxu0 0
      %3405 = vmatprep.subr.bf16.mxu0 0
      %3406 = vmatpush2.bf16.msra.mxu0 0
      %3407 = vmatprep.mubr.bf16.mxu0 0
      %3408 = vmatmul.mubr.bf16.gmra.mxu0 %v3325
      %v3409 = vpop.f32.mrf.mxu0
      %v3410 = vadd.f32 0.0, %v3409
      %v3411 = vpop.f32.mrf.mxu0
      %v3412 = vpop.f32.mrf.mxu0
      %v3413 = vadd.f32 0.0, %v3412
      %v3414 = vpop.f32.mrf.mxu0
      %3415 = vmatprep.mubr.bf16.mxu0 0
      %3416 = vmatmul.mubr.bf16.gmra.mxu0 %v3328
      %v3417 = vpop.f32.mrf.mxu0
      %v3418 = vadd.f32 0.0, %v3417
      %v3419 = vpop.f32.mrf.mxu0
      %v3420 = vpop.f32.mrf.mxu0
      %v3421 = vadd.f32 0.0, %v3420
      %v3422 = vpop.f32.mrf.mxu0
      %3423 = vmatprep.mubr.bf16.mxu0 0
      %3424 = vmatmul.mubr.bf16.gmra.mxu0 %v3331
      %v3425 = vpop.f32.mrf.mxu0
      %v3426 = vadd.f32 0.0, %v3425
      %v3427 = vpop.f32.mrf.mxu0
      %v3428 = vpop.f32.mrf.mxu0
      %v3429 = vadd.f32 0.0, %v3428
      %v3430 = vpop.f32.mrf.mxu0
      %3431 = vmatprep.mubr.bf16.mxu0 0
      %3432 = vmatmul.mubr.bf16.gmra.mxu0 %v3334
      %v3433 = vpop.f32.mrf.mxu0
      %v3434 = vadd.f32 0.0, %v3433
      %v3435 = vpop.f32.mrf.mxu0
      %v3436 = vpop.f32.mrf.mxu0
      %v3437 = vadd.f32 0.0, %v3436
      %v3438 = vpop.f32.mrf.mxu0
      %3439 = vmatprep.mubr.bf16.mxu0 0
      %3440 = vmatmul.mubr.bf16.gmra.mxu0 %v3337
      %v3441 = vpop.f32.mrf.mxu0
      %v3442 = vadd.f32 0.0, %v3441
      %v3443 = vpop.f32.mrf.mxu0
      %v3444 = vpop.f32.mrf.mxu0
      %v3445 = vadd.f32 0.0, %v3444
      %v3446 = vpop.f32.mrf.mxu0
      %3447 = vmatprep.mubr.bf16.mxu0 0
      %3448 = vmatmul.mubr.bf16.gmra.mxu0 %v3340
      %v3449 = vpop.f32.mrf.mxu0
      %v3450 = vadd.f32 0.0, %v3449
      %v3451 = vpop.f32.mrf.mxu0
      %v3452 = vpop.f32.mrf.mxu0
      %v3453 = vadd.f32 0.0, %v3452
      %v3454 = vpop.f32.mrf.mxu0
      %3455 = vmatprep.mubr.bf16.mxu0 0
      %3456 = vmatmul.mubr.bf16.gmra.mxu0 %v3343
      %v3457 = vpop.f32.mrf.mxu0
      %v3458 = vadd.f32 0.0, %v3457
      %v3459 = vpop.f32.mrf.mxu0
      %v3460 = vpop.f32.mrf.mxu0
      %v3461 = vadd.f32 0.0, %v3460
      %v3462 = vpop.f32.mrf.mxu0
      %3463 = vmatprep.mubr.bf16.mxu0 0
      %3464 = vmatmul.mubr.bf16.gmra.mxu0 %v3346
      %v3465 = vpop.f32.mrf.mxu0
      %v3466 = vadd.f32 0.0, %v3465
      %v3467 = vpop.f32.mrf.mxu0
      %v3468 = vpop.f32.mrf.mxu0
      %v3469 = vadd.f32 0.0, %v3468
      %v3470 = vpop.f32.mrf.mxu0
      %3471 = vmatprep.mubr.bf16.mxu0 0
      %3472 = vmatmul.mubr.bf16.gmra.mxu0 %v3349
      %v3473 = vpop.f32.mrf.mxu0
      %v3474 = vadd.f32 0.0, %v3473
      %v3475 = vpop.f32.mrf.mxu0
      %v3476 = vpop.f32.mrf.mxu0
      %v3477 = vadd.f32 0.0, %v3476
      %v3478 = vpop.f32.mrf.mxu0
      %3479 = vmatprep.mubr.bf16.mxu0 0
      %3480 = vmatmul.mubr.bf16.gmra.mxu0 %v3352
      %v3481 = vpop.f32.mrf.mxu0
      %v3482 = vadd.f32 0.0, %v3481
      %v3483 = vpop.f32.mrf.mxu0
      %v3484 = vpop.f32.mrf.mxu0
      %v3485 = vadd.f32 0.0, %v3484
      %v3486 = vpop.f32.mrf.mxu0
      %3487 = vmatprep.mubr.bf16.mxu0 0
      %3488 = vmatmul.mubr.bf16.gmra.mxu0 %v3355
      %v3489 = vpop.f32.mrf.mxu0
      %v3490 = vadd.f32 0.0, %v3489
      %v3491 = vpop.f32.mrf.mxu0
      %v3492 = vpop.f32.mrf.mxu0
      %v3493 = vadd.f32 0.0, %v3492
      %v3494 = vpop.f32.mrf.mxu0
      %3495 = vmatprep.mubr.bf16.mxu0 0
      %3496 = vmatmul.mubr.bf16.gmra.mxu0 %v3358
      %v3497 = vpop.f32.mrf.mxu0
      %v3498 = vadd.f32 0.0, %v3497
      %v3499 = vpop.f32.mrf.mxu0
      %v3500 = vpop.f32.mrf.mxu0
      %v3501 = vadd.f32 0.0, %v3500
      %v3502 = vpop.f32.mrf.mxu0
      %3503 = vmatprep.mubr.bf16.mxu0 0
      %3504 = vmatmul.mubr.bf16.gmra.mxu0 %v3361
      %v3505 = vpop.f32.mrf.mxu0
      %v3506 = vadd.f32 0.0, %v3505
      %v3507 = vpop.f32.mrf.mxu0
      %v3508 = vpop.f32.mrf.mxu0
      %v3509 = vadd.f32 0.0, %v3508
      %v3510 = vpop.f32.mrf.mxu0
      %3511 = vmatprep.mubr.bf16.mxu0 0
      %3512 = vmatmul.mubr.bf16.gmra.mxu0 %v3364
      %v3513 = vpop.f32.mrf.mxu0
      %v3514 = vadd.f32 0.0, %v3513
      %v3515 = vpop.f32.mrf.mxu0
      %v3516 = vpop.f32.mrf.mxu0
      %v3517 = vadd.f32 0.0, %v3516
      %v3518 = vpop.f32.mrf.mxu0
      %3519 = vmatprep.mubr.bf16.mxu0 0
      %3520 = vmatmul.mubr.bf16.gmra.mxu0 %v3367
      %v3521 = vpop.f32.mrf.mxu0
      %v3522 = vadd.f32 0.0, %v3521
      %v3523 = vpop.f32.mrf.mxu0
      %v3524 = vpop.f32.mrf.mxu0
      %v3525 = vadd.f32 0.0, %v3524
      %v3526 = vpop.f32.mrf.mxu0
      %3527 = vmatprep.mubr.bf16.mxu0 0
      %3528 = vmatmul.mubr.bf16.gmra.mxu0 %v3370
      %v3529 = vpop.f32.mrf.mxu0
      %v3530 = vadd.f32 0.0, %v3529
      %v3531 = vpop.f32.mrf.mxu0
      %v3532 = vpop.f32.mrf.mxu0
      %v3533 = vadd.f32 0.0, %v3532
      %v3534 = vpop.f32.mrf.mxu0
      %3535 = vdwg.mxu0
      %v3536 = vadd.f32 %v3174, %v3410
      %v3537 = vadd.f32 %v3175, %v3413
      %v3538 = vadd.f32 %v3176, %v3418
      %v3539 = vadd.f32 %v3177, %v3421
      %v3540 = vadd.f32 %v3178, %v3426
      %v3541 = vadd.f32 %v3179, %v3429
      %v3542 = vadd.f32 %v3180, %v3434
      %v3543 = vadd.f32 %v3181, %v3437
      %v3544 = vadd.f32 %v3182, %v3442
      %v3545 = vadd.f32 %v3183, %v3445
      %v3546 = vadd.f32 %v3184, %v3450
      %v3547 = vadd.f32 %v3185, %v3453
      %v3548 = vadd.f32 %v3186, %v3458
      %v3549 = vadd.f32 %v3187, %v3461
      %v3550 = vadd.f32 %v3188, %v3466
      %v3551 = vadd.f32 %v3189, %v3469
      %v3552 = vadd.f32 %v3190, %v3474
      %v3553 = vadd.f32 %v3191, %v3477
      %v3554 = vadd.f32 %v3192, %v3482
      %v3555 = vadd.f32 %v3193, %v3485
      %v3556 = vadd.f32 %v3194, %v3490
      %v3557 = vadd.f32 %v3195, %v3493
      %v3558 = vadd.f32 %v3196, %v3498
      %v3559 = vadd.f32 %v3197, %v3501
      %v3560 = vadd.f32 %v3198, %v3506
      %v3561 = vadd.f32 %v3199, %v3509
      %v3562 = vadd.f32 %v3200, %v3514
      %v3563 = vadd.f32 %v3201, %v3517
      %v3564 = vadd.f32 %v3202, %v3522
      %v3565 = vadd.f32 %v3203, %v3525
      %v3566 = vadd.f32 %v3204, %v3530
      %v3567 = vadd.f32 %v3205, %v3533
      %v3568 = vld [vmem:[%s3209] sm:$0xf]
      %v3569 = vld [vmem:[%s3209 + $0x4] sm:$0xf]
      %v3570 = vld [vmem:[%s3209 + $0x8] sm:$0x1]
      %v3571 = vld [vmem:[%s3209 + $0xc] sm:$0xf]
      %v3572 = vld [vmem:[%s3209 + $0x10] sm:$0xf]
      %v3573 = vld [vmem:[%s3209 + $0x14] sm:$0x1]
      %v3574 = vld [vmem:[%s3209 + $0x18] sm:$0xf]
      %v3575 = vld [vmem:[%s3209 + $0x1c] sm:$0xf]
      %v3576 = vld [vmem:[%s3209 + $0x20] sm:$0x1]
      %v3577 = vld [vmem:[%s3209 + $0x24] sm:$0xf]
      %v3578 = vld [vmem:[%s3209 + $0x28] sm:$0xf]
      %v3579 = vld [vmem:[%s3209 + $0x2c] sm:$0x1]
      %v3580 = vld [vmem:[%s3209 + $0x30] sm:$0xf]
      %v3581 = vld [vmem:[%s3209 + $0x34] sm:$0xf]
      %v3582 = vld [vmem:[%s3209 + $0x38] sm:$0x1]
      %v3583 = vld [vmem:[%s3209 + $0x3c] sm:$0xf]
      %v3584 = vld [vmem:[%s3209 + $0x40] sm:$0xf]
      %v3585 = vld [vmem:[%s3209 + $0x44] sm:$0x1]
      %v3586 = vld [vmem:[%s3209 + $0x48] sm:$0xf]
      %v3587 = vld [vmem:[%s3209 + $0x4c] sm:$0xf]
      %v3588 = vld [vmem:[%s3209 + $0x50] sm:$0x1]
      %v3589 = vld [vmem:[%s3209 + $0x54] sm:$0xf]
      %v3590 = vld [vmem:[%s3209 + $0x58] sm:$0xf]
      %v3591 = vld [vmem:[%s3209 + $0x5c] sm:$0x1]
      %v3592 = vld [vmem:[%s3209 + $0x60] sm:$0xf]
      %v3593 = vld [vmem:[%s3209 + $0x64] sm:$0xf]
      %v3594 = vld [vmem:[%s3209 + $0x68] sm:$0x1]
      %v3595 = vld [vmem:[%s3209 + $0x6c] sm:$0xf]
      %v3596 = vld [vmem:[%s3209 + $0x70] sm:$0xf]
      %v3597 = vld [vmem:[%s3209 + $0x74] sm:$0x1]
      %v3598 = vld [vmem:[%s3209 + $0x78] sm:$0xf]
      %v3599 = vld [vmem:[%s3209 + $0x7c] sm:$0xf]
      %v3600 = vld [vmem:[%s3209 + $0x80] sm:$0x1]
      %v3601 = vld [vmem:[%s3209 + $0x84] sm:$0xf]
      %v3602 = vld [vmem:[%s3209 + $0x88] sm:$0xf]
      %v3603 = vld [vmem:[%s3209 + $0x8c] sm:$0x1]
      %v3604 = vld [vmem:[%s3209 + $0x90] sm:$0xf]
      %v3605 = vld [vmem:[%s3209 + $0x94] sm:$0xf]
      %v3606 = vld [vmem:[%s3209 + $0x98] sm:$0x1]
      %v3607 = vld [vmem:[%s3209 + $0x9c] sm:$0xf]
      %v3608 = vld [vmem:[%s3209 + $0xa0] sm:$0xf]
      %v3609 = vld [vmem:[%s3209 + $0xa4] sm:$0x1]
      %v3610 = vld [vmem:[%s3209 + $0xa8] sm:$0xf]
      %v3611 = vld [vmem:[%s3209 + $0xac] sm:$0xf]
      %v3612 = vld [vmem:[%s3209 + $0xb0] sm:$0x1]
      %v3613 = vld [vmem:[%s3209 + $0xb4] sm:$0xf]
      %v3614 = vld [vmem:[%s3209 + $0xb8] sm:$0xf]
      %v3615 = vld [vmem:[%s3209 + $0xbc] sm:$0x1]
      %v3617 = vshrl.u32 %v3568, 16
      %v3619 = vrot.slane %v3617, 4
      %v3620 = vshll.u32 %v3568, 16
      %v3622 = vrot.slane %v3620, 5
      %v3623 = vor.u32 %v3619, %v3622
      %v3624 = vrot.slane %v3623, 4
      %v3626 = vshll.u32 %v3569, 16
      %v3628 = vrot.slane %v3626, 5
      %v3629 = vsel %vm250, %v3624, %v3628
      %v3630 = vshrl.u32 %v3569, 16
      %v3632 = vrot.slane %v3630, 4
      %v3633 = vor.u32 %v3632, %v3628
      %v3634 = vrot.slane %v3633, 4
      %v3636 = vshll.u32 %v3570, 16
      %v3638 = vrot.slane %v3636, 5
      %v3639 = vsel %vm250, %v3634, %v3638
      %v3641 = vshrl.u32 %v3571, 16
      %v3643 = vrot.slane %v3641, 4
      %v3644 = vshll.u32 %v3571, 16
      %v3646 = vrot.slane %v3644, 5
      %v3647 = vor.u32 %v3643, %v3646
      %v3648 = vrot.slane %v3647, 4
      %v3650 = vshll.u32 %v3572, 16
      %v3652 = vrot.slane %v3650, 5
      %v3653 = vsel %vm250, %v3648, %v3652
      %v3654 = vshrl.u32 %v3572, 16
      %v3656 = vrot.slane %v3654, 4
      %v3657 = vor.u32 %v3656, %v3652
      %v3658 = vrot.slane %v3657, 4
      %v3660 = vshll.u32 %v3573, 16
      %v3662 = vrot.slane %v3660, 5
      %v3663 = vsel %vm250, %v3658, %v3662
      %v3665 = vshrl.u32 %v3574, 16
      %v3667 = vrot.slane %v3665, 4
      %v3668 = vshll.u32 %v3574, 16
      %v3670 = vrot.slane %v3668, 5
      %v3671 = vor.u32 %v3667, %v3670
      %v3672 = vrot.slane %v3671, 4
      %v3674 = vshll.u32 %v3575, 16
      %v3676 = vrot.slane %v3674, 5
      %v3677 = vsel %vm250, %v3672, %v3676
      %v3678 = vshrl.u32 %v3575, 16
      %v3680 = vrot.slane %v3678, 4
      %v3681 = vor.u32 %v3680, %v3676
      %v3682 = vrot.slane %v3681, 4
      %v3684 = vshll.u32 %v3576, 16
      %v3686 = vrot.slane %v3684, 5
      %v3687 = vsel %vm250, %v3682, %v3686
      %v3689 = vshrl.u32 %v3577, 16
      %v3691 = vrot.slane %v3689, 4
      %v3692 = vshll.u32 %v3577, 16
      %v3694 = vrot.slane %v3692, 5
      %v3695 = vor.u32 %v3691, %v3694
      %v3696 = vrot.slane %v3695, 4
      %v3698 = vshll.u32 %v3578, 16
      %v3700 = vrot.slane %v3698, 5
      %v3701 = vsel %vm250, %v3696, %v3700
      %v3702 = vshrl.u32 %v3578, 16
      %v3704 = vrot.slane %v3702, 4
      %v3705 = vor.u32 %v3704, %v3700
      %v3706 = vrot.slane %v3705, 4
      %v3708 = vshll.u32 %v3579, 16
      %v3710 = vrot.slane %v3708, 5
      %v3711 = vsel %vm250, %v3706, %v3710
      %v3713 = vshrl.u32 %v3580, 16
      %v3715 = vrot.slane %v3713, 4
      %v3716 = vshll.u32 %v3580, 16
      %v3718 = vrot.slane %v3716, 5
      %v3719 = vor.u32 %v3715, %v3718
      %v3720 = vrot.slane %v3719, 4
      %v3722 = vshll.u32 %v3581, 16
      %v3724 = vrot.slane %v3722, 5
      %v3725 = vsel %vm250, %v3720, %v3724
      %v3726 = vshrl.u32 %v3581, 16
      %v3728 = vrot.slane %v3726, 4
      %v3729 = vor.u32 %v3728, %v3724
      %v3730 = vrot.slane %v3729, 4
      %v3732 = vshll.u32 %v3582, 16
      %v3734 = vrot.slane %v3732, 5
      %v3735 = vsel %vm250, %v3730, %v3734
      %v3737 = vshrl.u32 %v3583, 16
      %v3739 = vrot.slane %v3737, 4
      %v3740 = vshll.u32 %v3583, 16
      %v3742 = vrot.slane %v3740, 5
      %v3743 = vor.u32 %v3739, %v3742
      %v3744 = vrot.slane %v3743, 4
      %v3746 = vshll.u32 %v3584, 16
      %v3748 = vrot.slane %v3746, 5
      %v3749 = vsel %vm250, %v3744, %v3748
      %v3750 = vshrl.u32 %v3584, 16
      %v3752 = vrot.slane %v3750, 4
      %v3753 = vor.u32 %v3752, %v3748
      %v3754 = vrot.slane %v3753, 4
      %v3756 = vshll.u32 %v3585, 16
      %v3758 = vrot.slane %v3756, 5
      %v3759 = vsel %vm250, %v3754, %v3758
      %v3761 = vshrl.u32 %v3586, 16
      %v3763 = vrot.slane %v3761, 4
      %v3764 = vshll.u32 %v3586, 16
      %v3766 = vrot.slane %v3764, 5
      %v3767 = vor.u32 %v3763, %v3766
      %v3768 = vrot.slane %v3767, 4
      %v3770 = vshll.u32 %v3587, 16
      %v3772 = vrot.slane %v3770, 5
      %v3773 = vsel %vm250, %v3768, %v3772
      %v3774 = vshrl.u32 %v3587, 16
      %v3776 = vrot.slane %v3774, 4
      %v3777 = vor.u32 %v3776, %v3772
      %v3778 = vrot.slane %v3777, 4
      %v3780 = vshll.u32 %v3588, 16
      %v3782 = vrot.slane %v3780, 5
      %v3783 = vsel %vm250, %v3778, %v3782
      %v3785 = vshrl.u32 %v3589, 16
      %v3787 = vrot.slane %v3785, 4
      %v3788 = vshll.u32 %v3589, 16
      %v3790 = vrot.slane %v3788, 5
      %v3791 = vor.u32 %v3787, %v3790
      %v3792 = vrot.slane %v3791, 4
      %v3794 = vshll.u32 %v3590, 16
      %v3796 = vrot.slane %v3794, 5
      %v3797 = vsel %vm250, %v3792, %v3796
      %v3798 = vshrl.u32 %v3590, 16
      %v3800 = vrot.slane %v3798, 4
      %v3801 = vor.u32 %v3800, %v3796
      %v3802 = vrot.slane %v3801, 4
      %v3804 = vshll.u32 %v3591, 16
      %v3806 = vrot.slane %v3804, 5
      %v3807 = vsel %vm250, %v3802, %v3806
      %v3809 = vshrl.u32 %v3592, 16
      %v3811 = vrot.slane %v3809, 4
      %v3812 = vshll.u32 %v3592, 16
      %v3814 = vrot.slane %v3812, 5
      %v3815 = vor.u32 %v3811, %v3814
      %v3816 = vrot.slane %v3815, 4
      %v3818 = vshll.u32 %v3593, 16
      %v3820 = vrot.slane %v3818, 5
      %v3821 = vsel %vm250, %v3816, %v3820
      %v3822 = vshrl.u32 %v3593, 16
      %v3824 = vrot.slane %v3822, 4
      %v3825 = vor.u32 %v3824, %v3820
      %v3826 = vrot.slane %v3825, 4
      %v3828 = vshll.u32 %v3594, 16
      %v3830 = vrot.slane %v3828, 5
      %v3831 = vsel %vm250, %v3826, %v3830
      %v3833 = vshrl.u32 %v3595, 16
      %v3835 = vrot.slane %v3833, 4
      %v3836 = vshll.u32 %v3595, 16
      %v3838 = vrot.slane %v3836, 5
      %v3839 = vor.u32 %v3835, %v3838
      %v3840 = vrot.slane %v3839, 4
      %v3842 = vshll.u32 %v3596, 16
      %v3844 = vrot.slane %v3842, 5
      %v3845 = vsel %vm250, %v3840, %v3844
      %v3846 = vshrl.u32 %v3596, 16
      %v3848 = vrot.slane %v3846, 4
      %v3849 = vor.u32 %v3848, %v3844
      %v3850 = vrot.slane %v3849, 4
      %v3852 = vshll.u32 %v3597, 16
      %v3854 = vrot.slane %v3852, 5
      %v3855 = vsel %vm250, %v3850, %v3854
      %v3857 = vshrl.u32 %v3598, 16
      %v3859 = vrot.slane %v3857, 4
      %v3860 = vshll.u32 %v3598, 16
      %v3862 = vrot.slane %v3860, 5
      %v3863 = vor.u32 %v3859, %v3862
      %v3864 = vrot.slane %v3863, 4
      %v3866 = vshll.u32 %v3599, 16
      %v3868 = vrot.slane %v3866, 5
      %v3869 = vsel %vm250, %v3864, %v3868
      %v3870 = vshrl.u32 %v3599, 16
      %v3872 = vrot.slane %v3870, 4
      %v3873 = vor.u32 %v3872, %v3868
      %v3874 = vrot.slane %v3873, 4
      %v3876 = vshll.u32 %v3600, 16
      %v3878 = vrot.slane %v3876, 5
      %v3879 = vsel %vm250, %v3874, %v3878
      %v3881 = vshrl.u32 %v3601, 16
      %v3883 = vrot.slane %v3881, 4
      %v3884 = vshll.u32 %v3601, 16
      %v3886 = vrot.slane %v3884, 5
      %v3887 = vor.u32 %v3883, %v3886
      %v3888 = vrot.slane %v3887, 4
      %v3890 = vshll.u32 %v3602, 16
      %v3892 = vrot.slane %v3890, 5
      %v3893 = vsel %vm250, %v3888, %v3892
      %v3894 = vshrl.u32 %v3602, 16
      %v3896 = vrot.slane %v3894, 4
      %v3897 = vor.u32 %v3896, %v3892
      %v3898 = vrot.slane %v3897, 4
      %v3900 = vshll.u32 %v3603, 16
      %v3902 = vrot.slane %v3900, 5
      %v3903 = vsel %vm250, %v3898, %v3902
      %v3905 = vshrl.u32 %v3604, 16
      %v3907 = vrot.slane %v3905, 4
      %v3908 = vshll.u32 %v3604, 16
      %v3910 = vrot.slane %v3908, 5
      %v3911 = vor.u32 %v3907, %v3910
      %v3912 = vrot.slane %v3911, 4
      %v3914 = vshll.u32 %v3605, 16
      %v3916 = vrot.slane %v3914, 5
      %v3917 = vsel %vm250, %v3912, %v3916
      %v3918 = vshrl.u32 %v3605, 16
      %v3920 = vrot.slane %v3918, 4
      %v3921 = vor.u32 %v3920, %v3916
      %v3922 = vrot.slane %v3921, 4
      %v3924 = vshll.u32 %v3606, 16
      %v3926 = vrot.slane %v3924, 5
      %v3927 = vsel %vm250, %v3922, %v3926
      %v3929 = vshrl.u32 %v3607, 16
      %v3931 = vrot.slane %v3929, 4
      %v3932 = vshll.u32 %v3607, 16
      %v3934 = vrot.slane %v3932, 5
      %v3935 = vor.u32 %v3931, %v3934
      %v3936 = vrot.slane %v3935, 4
      %v3938 = vshll.u32 %v3608, 16
      %v3940 = vrot.slane %v3938, 5
      %v3941 = vsel %vm250, %v3936, %v3940
      %v3942 = vshrl.u32 %v3608, 16
      %v3944 = vrot.slane %v3942, 4
      %v3945 = vor.u32 %v3944, %v3940
      %v3946 = vrot.slane %v3945, 4
      %v3948 = vshll.u32 %v3609, 16
      %v3950 = vrot.slane %v3948, 5
      %v3951 = vsel %vm250, %v3946, %v3950
      %v3953 = vshrl.u32 %v3610, 16
      %v3955 = vrot.slane %v3953, 4
      %v3956 = vshll.u32 %v3610, 16
      %v3958 = vrot.slane %v3956, 5
      %v3959 = vor.u32 %v3955, %v3958
      %v3960 = vrot.slane %v3959, 4
      %v3962 = vshll.u32 %v3611, 16
      %v3964 = vrot.slane %v3962, 5
      %v3965 = vsel %vm250, %v3960, %v3964
      %v3966 = vshrl.u32 %v3611, 16
      %v3968 = vrot.slane %v3966, 4
      %v3969 = vor.u32 %v3968, %v3964
      %v3970 = vrot.slane %v3969, 4
      %v3972 = vshll.u32 %v3612, 16
      %v3974 = vrot.slane %v3972, 5
      %v3975 = vsel %vm250, %v3970, %v3974
      %v3977 = vshrl.u32 %v3613, 16
      %v3979 = vrot.slane %v3977, 4
      %v3980 = vshll.u32 %v3613, 16
      %v3982 = vrot.slane %v3980, 5
      %v3983 = vor.u32 %v3979, %v3982
      %v3984 = vrot.slane %v3983, 4
      %v3986 = vshll.u32 %v3614, 16
      %v3988 = vrot.slane %v3986, 5
      %v3989 = vsel %vm250, %v3984, %v3988
      %v3990 = vshrl.u32 %v3614, 16
      %v3992 = vrot.slane %v3990, 4
      %v3993 = vor.u32 %v3992, %v3988
      %v3994 = vrot.slane %v3993, 4
      %v3996 = vshll.u32 %v3615, 16
      %v3998 = vrot.slane %v3996, 5
      %v3999 = vsel %vm250, %v3994, %v3998
      %s4000 = scalar_lea.vmem %s1, 14
      %v4001 = vld [vmem:[%s4000] sm:$0x3]
      %v4002 = vunpack.c.l.b16 %v3629
      %v4003 = vunpack.c.l.b16 %v3639
      %v4004 = vunpack.c.l.b16 %v3653
      %v4005 = vunpack.c.l.b16 %v3663
      %v4006 = vunpack.c.l.b16 %v3677
      %v4007 = vunpack.c.l.b16 %v3687
      %v4008 = vunpack.c.l.b16 %v3701
      %v4009 = vunpack.c.l.b16 %v3711
      %v4010 = vunpack.c.l.b16 %v3725
      %v4011 = vunpack.c.l.b16 %v3735
      %v4012 = vunpack.c.l.b16 %v3749
      %v4013 = vunpack.c.l.b16 %v3759
      %v4014 = vunpack.c.l.b16 %v3773
      %v4015 = vunpack.c.l.b16 %v3783
      %v4016 = vunpack.c.l.b16 %v3797
      %v4017 = vunpack.c.l.b16 %v3807
      %v4018 = vunpack.c.l.b16 %v3821
      %v4019 = vunpack.c.l.b16 %v3831
      %v4020 = vunpack.c.l.b16 %v3845
      %v4021 = vunpack.c.l.b16 %v3855
      %v4022 = vunpack.c.l.b16 %v3869
      %v4023 = vunpack.c.l.b16 %v3879
      %v4024 = vunpack.c.l.b16 %v3893
      %v4025 = vunpack.c.l.b16 %v3903
      %v4026 = vunpack.c.l.b16 %v3917
      %v4027 = vunpack.c.l.b16 %v3927
      %v4028 = vunpack.c.l.b16 %v3941
      %v4029 = vunpack.c.l.b16 %v3951
      %v4030 = vunpack.c.l.b16 %v3965
      %v4031 = vunpack.c.l.b16 %v3975
      %v4032 = vunpack.c.l.b16 %v3989
      %v4033 = vunpack.c.l.b16 %v3999
      %v4034 = vpack.c.b16 %v4003, %v4002
      %v4035 = vpack.c.b16 %v4005, %v4004
      %v4036 = vpack.c.b16 %v4007, %v4006
      %v4037 = vpack.c.b16 %v4009, %v4008
      %v4038 = vpack.c.b16 %v4011, %v4010
      %v4039 = vpack.c.b16 %v4013, %v4012
      %v4040 = vpack.c.b16 %v4015, %v4014
      %v4041 = vpack.c.b16 %v4017, %v4016
      %v4042 = vpack.c.b16 %v4019, %v4018
      %v4043 = vpack.c.b16 %v4021, %v4020
      %v4044 = vpack.c.b16 %v4023, %v4022
      %v4045 = vpack.c.b16 %v4025, %v4024
      %v4046 = vpack.c.b16 %v4027, %v4026
      %v4047 = vpack.c.b16 %v4029, %v4028
      %v4048 = vpack.c.b16 %v4031, %v4030
      %v4049 = vpack.c.b16 %v4033, %v4032
      %v4051 = vsel %vm685, %v4034, 0
      %v4054 = vsel %vm685, %v4035, 0
      %v4057 = vsel %vm685, %v4036, 0
      %v4060 = vsel %vm685, %v4037, 0
      %v4063 = vsel %vm685, %v4038, 0
      %v4066 = vsel %vm685, %v4039, 0
      %v4069 = vsel %vm685, %v4040, 0
      %v4072 = vsel %vm685, %v4041, 0
      %v4075 = vsel %vm685, %v4042, 0
      %v4078 = vsel %vm685, %v4043, 0
      %v4081 = vsel %vm685, %v4044, 0
      %v4084 = vsel %vm685, %v4045, 0
      %v4087 = vsel %vm685, %v4046, 0
      %v4090 = vsel %vm685, %v4047, 0
      %v4093 = vsel %vm685, %v4048, 0
      %v4096 = vsel %vm685, %v4049, 0
      %v4099 = vsel %vm734, %v4001, 0
      %4101 = vmatprep.subr.bf16.mxu0 0
      %4102 = vmatpush1.bf16.msra.mxu0 0
      %4103 = vmatprep.subr.bf16.mxu0 0
      %4104 = vmatpush1.bf16.msra.mxu0 0
      %4105 = vmatprep.subr.bf16.mxu0 0
      %4106 = vmatpush1.bf16.msra.mxu0 0
      %4107 = vmatprep.subr.bf16.mxu0 0
      %4108 = vmatpush1.bf16.msra.mxu0 0
      %4109 = vmatprep.subr.bf16.mxu0 0
      %4110 = vmatpush1.bf16.msra.mxu0 0
      %4111 = vmatprep.subr.bf16.mxu0 0
      %4112 = vmatpush1.bf16.msra.mxu0 0
      %4113 = vmatprep.subr.bf16.mxu0 0
      %4114 = vmatpush1.bf16.msra.mxu0 0
      %4115 = vmatprep.subr.bf16.mxu0 0
      %4116 = vmatpush1.bf16.msra.mxu0 %v4099
      %4117 = vmatprep.subr.bf16.mxu0 0
      %4118 = vmatpush2.bf16.msra.mxu0 0
      %4119 = vmatprep.subr.bf16.mxu0 0
      %4120 = vmatpush2.bf16.msra.mxu0 0
      %4121 = vmatprep.subr.bf16.mxu0 0
      %4122 = vmatpush2.bf16.msra.mxu0 0
      %4123 = vmatprep.subr.bf16.mxu0 0
      %4124 = vmatpush2.bf16.msra.mxu0 0
      %4125 = vmatprep.subr.bf16.mxu0 0
      %4126 = vmatpush2.bf16.msra.mxu0 0
      %4127 = vmatprep.subr.bf16.mxu0 0
      %4128 = vmatpush2.bf16.msra.mxu0 0
      %4129 = vmatprep.subr.bf16.mxu0 0
      %4130 = vmatpush2.bf16.msra.mxu0 0
      %4131 = vmatprep.subr.bf16.mxu0 0
      %4132 = vmatpush2.bf16.msra.mxu0 0
      %4133 = vmatprep.mubr.bf16.mxu0 0
      %4134 = vmatmul.mubr.bf16.gmra.mxu0 %v4051
      %v4135 = vpop.f32.mrf.mxu0
      %v4136 = vadd.f32 0.0, %v4135
      %v4137 = vpop.f32.mrf.mxu0
      %v4138 = vpop.f32.mrf.mxu0
      %v4139 = vadd.f32 0.0, %v4138
      %v4140 = vpop.f32.mrf.mxu0
      %4141 = vmatprep.mubr.bf16.mxu0 0
      %4142 = vmatmul.mubr.bf16.gmra.mxu0 %v4054
      %v4143 = vpop.f32.mrf.mxu0
      %v4144 = vadd.f32 0.0, %v4143
      %v4145 = vpop.f32.mrf.mxu0
      %v4146 = vpop.f32.mrf.mxu0
      %v4147 = vadd.f32 0.0, %v4146
      %v4148 = vpop.f32.mrf.mxu0
      %4149 = vmatprep.mubr.bf16.mxu0 0
      %4150 = vmatmul.mubr.bf16.gmra.mxu0 %v4057
      %v4151 = vpop.f32.mrf.mxu0
      %v4152 = vadd.f32 0.0, %v4151
      %v4153 = vpop.f32.mrf.mxu0
      %v4154 = vpop.f32.mrf.mxu0
      %v4155 = vadd.f32 0.0, %v4154
      %v4156 = vpop.f32.mrf.mxu0
      %4157 = vmatprep.mubr.bf16.mxu0 0
      %4158 = vmatmul.mubr.bf16.gmra.mxu0 %v4060
      %v4159 = vpop.f32.mrf.mxu0
      %v4160 = vadd.f32 0.0, %v4159
      %v4161 = vpop.f32.mrf.mxu0
      %v4162 = vpop.f32.mrf.mxu0
      %v4163 = vadd.f32 0.0, %v4162
      %v4164 = vpop.f32.mrf.mxu0
      %4165 = vmatprep.mubr.bf16.mxu0 0
      %4166 = vmatmul.mubr.bf16.gmra.mxu0 %v4063
      %v4167 = vpop.f32.mrf.mxu0
      %v4168 = vadd.f32 0.0, %v4167
      %v4169 = vpop.f32.mrf.mxu0
      %v4170 = vpop.f32.mrf.mxu0
      %v4171 = vadd.f32 0.0, %v4170
      %v4172 = vpop.f32.mrf.mxu0
      %4173 = vmatprep.mubr.bf16.mxu0 0
      %4174 = vmatmul.mubr.bf16.gmra.mxu0 %v4066
      %v4175 = vpop.f32.mrf.mxu0
      %v4176 = vadd.f32 0.0, %v4175
      %v4177 = vpop.f32.mrf.mxu0
      %v4178 = vpop.f32.mrf.mxu0
      %v4179 = vadd.f32 0.0, %v4178
      %v4180 = vpop.f32.mrf.mxu0
      %4181 = vmatprep.mubr.bf16.mxu0 0
      %4182 = vmatmul.mubr.bf16.gmra.mxu0 %v4069
      %v4183 = vpop.f32.mrf.mxu0
      %v4184 = vadd.f32 0.0, %v4183
      %v4185 = vpop.f32.mrf.mxu0
      %v4186 = vpop.f32.mrf.mxu0
      %v4187 = vadd.f32 0.0, %v4186
      %v4188 = vpop.f32.mrf.mxu0
      %4189 = vmatprep.mubr.bf16.mxu0 0
      %4190 = vmatmul.mubr.bf16.gmra.mxu0 %v4072
      %v4191 = vpop.f32.mrf.mxu0
      %v4192 = vadd.f32 0.0, %v4191
      %v4193 = vpop.f32.mrf.mxu0
      %v4194 = vpop.f32.mrf.mxu0
      %v4195 = vadd.f32 0.0, %v4194
      %v4196 = vpop.f32.mrf.mxu0
      %4197 = vmatprep.mubr.bf16.mxu0 0
      %4198 = vmatmul.mubr.bf16.gmra.mxu0 %v4075
      %v4199 = vpop.f32.mrf.mxu0
      %v4200 = vadd.f32 0.0, %v4199
      %v4201 = vpop.f32.mrf.mxu0
      %v4202 = vpop.f32.mrf.mxu0
      %v4203 = vadd.f32 0.0, %v4202
      %v4204 = vpop.f32.mrf.mxu0
      %4205 = vmatprep.mubr.bf16.mxu0 0
      %4206 = vmatmul.mubr.bf16.gmra.mxu0 %v4078
      %v4207 = vpop.f32.mrf.mxu0
      %v4208 = vadd.f32 0.0, %v4207
      %v4209 = vpop.f32.mrf.mxu0
      %v4210 = vpop.f32.mrf.mxu0
      %v4211 = vadd.f32 0.0, %v4210
      %v4212 = vpop.f32.mrf.mxu0
      %4213 = vmatprep.mubr.bf16.mxu0 0
      %4214 = vmatmul.mubr.bf16.gmra.mxu0 %v4081
      %v4215 = vpop.f32.mrf.mxu0
      %v4216 = vadd.f32 0.0, %v4215
      %v4217 = vpop.f32.mrf.mxu0
      %v4218 = vpop.f32.mrf.mxu0
      %v4219 = vadd.f32 0.0, %v4218
      %v4220 = vpop.f32.mrf.mxu0
      %4221 = vmatprep.mubr.bf16.mxu0 0
      %4222 = vmatmul.mubr.bf16.gmra.mxu0 %v4084
      %v4223 = vpop.f32.mrf.mxu0
      %v4224 = vadd.f32 0.0, %v4223
      %v4225 = vpop.f32.mrf.mxu0
      %v4226 = vpop.f32.mrf.mxu0
      %v4227 = vadd.f32 0.0, %v4226
      %v4228 = vpop.f32.mrf.mxu0
      %4229 = vmatprep.mubr.bf16.mxu0 0
      %4230 = vmatmul.mubr.bf16.gmra.mxu0 %v4087
      %v4231 = vpop.f32.mrf.mxu0
      %v4232 = vadd.f32 0.0, %v4231
      %v4233 = vpop.f32.mrf.mxu0
      %v4234 = vpop.f32.mrf.mxu0
      %v4235 = vadd.f32 0.0, %v4234
      %v4236 = vpop.f32.mrf.mxu0
      %4237 = vmatprep.mubr.bf16.mxu0 0
      %4238 = vmatmul.mubr.bf16.gmra.mxu0 %v4090
      %v4239 = vpop.f32.mrf.mxu0
      %v4240 = vadd.f32 0.0, %v4239
      %v4241 = vpop.f32.mrf.mxu0
      %v4242 = vpop.f32.mrf.mxu0
      %v4243 = vadd.f32 0.0, %v4242
      %v4244 = vpop.f32.mrf.mxu0
      %4245 = vmatprep.mubr.bf16.mxu0 0
      %4246 = vmatmul.mubr.bf16.gmra.mxu0 %v4093
      %v4247 = vpop.f32.mrf.mxu0
      %v4248 = vadd.f32 0.0, %v4247
      %v4249 = vpop.f32.mrf.mxu0
      %v4250 = vpop.f32.mrf.mxu0
      %v4251 = vadd.f32 0.0, %v4250
      %v4252 = vpop.f32.mrf.mxu0
      %4253 = vmatprep.mubr.bf16.mxu0 0
      %4254 = vmatmul.mubr.bf16.gmra.mxu0 %v4096
      %v4255 = vpop.f32.mrf.mxu0
      %v4256 = vadd.f32 0.0, %v4255
      %v4257 = vpop.f32.mrf.mxu0
      %v4258 = vpop.f32.mrf.mxu0
      %v4259 = vadd.f32 0.0, %v4258
      %v4260 = vpop.f32.mrf.mxu0
      %4261 = vdwg.mxu0
      %v4262 = vadd.f32 %v3536, %v4136
      %v4263 = vadd.f32 %v3537, %v4139
      %v4264 = vadd.f32 %v3538, %v4144
      %v4265 = vadd.f32 %v3539, %v4147
      %v4266 = vadd.f32 %v3540, %v4152
      %v4267 = vadd.f32 %v3541, %v4155
      %v4268 = vadd.f32 %v3542, %v4160
      %v4269 = vadd.f32 %v3543, %v4163
      %v4270 = vadd.f32 %v3544, %v4168
      %v4271 = vadd.f32 %v3545, %v4171
      %v4272 = vadd.f32 %v3546, %v4176
      %v4273 = vadd.f32 %v3547, %v4179
      %v4274 = vadd.f32 %v3548, %v4184
      %v4275 = vadd.f32 %v3549, %v4187
      %v4276 = vadd.f32 %v3550, %v4192
      %v4277 = vadd.f32 %v3551, %v4195
      %v4278 = vadd.f32 %v3552, %v4200
      %v4279 = vadd.f32 %v3553, %v4203
      %v4280 = vadd.f32 %v3554, %v4208
      %v4281 = vadd.f32 %v3555, %v4211
      %v4282 = vadd.f32 %v3556, %v4216
      %v4283 = vadd.f32 %v3557, %v4219
      %v4284 = vadd.f32 %v3558, %v4224
      %v4285 = vadd.f32 %v3559, %v4227
      %v4286 = vadd.f32 %v3560, %v4232
      %v4287 = vadd.f32 %v3561, %v4235
      %v4288 = vadd.f32 %v3562, %v4240
      %v4289 = vadd.f32 %v3563, %v4243
      %v4290 = vadd.f32 %v3564, %v4248
      %v4291 = vadd.f32 %v3565, %v4251
      %v4292 = vadd.f32 %v3566, %v4256
      %v4293 = vadd.f32 %v3567, %v4259
      %v4294 = vld [vmem:[%s3209] sm:$0xe]
      %v4295 = vld [vmem:[%s3209 + $0xc] sm:$0xe]
      %v4296 = vld [vmem:[%s3209 + $0x18] sm:$0xe]
      %v4297 = vld [vmem:[%s3209 + $0x24] sm:$0xe]
      %v4298 = vld [vmem:[%s3209 + $0x30] sm:$0xe]
      %v4299 = vld [vmem:[%s3209 + $0x3c] sm:$0xe]
      %v4300 = vld [vmem:[%s3209 + $0x48] sm:$0xe]
      %v4301 = vld [vmem:[%s3209 + $0x54] sm:$0xe]
      %v4302 = vld [vmem:[%s3209 + $0x60] sm:$0xe]
      %v4303 = vld [vmem:[%s3209 + $0x6c] sm:$0xe]
      %v4304 = vld [vmem:[%s3209 + $0x78] sm:$0xe]
      %v4305 = vld [vmem:[%s3209 + $0x84] sm:$0xe]
      %v4306 = vld [vmem:[%s3209 + $0x90] sm:$0xe]
      %v4307 = vld [vmem:[%s3209 + $0x9c] sm:$0xe]
      %v4308 = vld [vmem:[%s3209 + $0xa8] sm:$0xe]
      %v4309 = vld [vmem:[%s3209 + $0xb4] sm:$0xe]
      %v4358 = vrot.slane %v4294, 5
      %v4359 = vrot.slane %v4358, 4
      %v4360 = vrot.slane %v3569, 5
      %v4361 = vsel %vm1241, %v4359, %v4360
      %v4362 = vrot.slane %v4360, 4
      %v4363 = vrot.slane %v3570, 5
      %v4364 = vsel %vm1241, %v4362, %v4363
      %v4365 = vrot.slane %v4295, 5
      %v4366 = vrot.slane %v4365, 4
      %v4367 = vrot.slane %v3572, 5
      %v4368 = vsel %vm1241, %v4366, %v4367
      %v4369 = vrot.slane %v4367, 4
      %v4370 = vrot.slane %v3573, 5
      %v4371 = vsel %vm1241, %v4369, %v4370
      %v4372 = vrot.slane %v4296, 5
      %v4373 = vrot.slane %v4372, 4
      %v4374 = vrot.slane %v3575, 5
      %v4375 = vsel %vm1241, %v4373, %v4374
      %v4376 = vrot.slane %v4374, 4
      %v4377 = vrot.slane %v3576, 5
      %v4378 = vsel %vm1241, %v4376, %v4377
      %v4379 = vrot.slane %v4297, 5
      %v4380 = vrot.slane %v4379, 4
      %v4381 = vrot.slane %v3578, 5
      %v4382 = vsel %vm1241, %v4380, %v4381
      %v4383 = vrot.slane %v4381, 4
      %v4384 = vrot.slane %v3579, 5
      %v4385 = vsel %vm1241, %v4383, %v4384
      %v4386 = vrot.slane %v4298, 5
      %v4387 = vrot.slane %v4386, 4
      %v4388 = vrot.slane %v3581, 5
      %v4389 = vsel %vm1241, %v4387, %v4388
      %v4390 = vrot.slane %v4388, 4
      %v4391 = vrot.slane %v3582, 5
      %v4392 = vsel %vm1241, %v4390, %v4391
      %v4393 = vrot.slane %v4299, 5
      %v4394 = vrot.slane %v4393, 4
      %v4395 = vrot.slane %v3584, 5
      %v4396 = vsel %vm1241, %v4394, %v4395
      %v4397 = vrot.slane %v4395, 4
      %v4398 = vrot.slane %v3585, 5
      %v4399 = vsel %vm1241, %v4397, %v4398
      %v4400 = vrot.slane %v4300, 5
      %v4401 = vrot.slane %v4400, 4
      %v4402 = vrot.slane %v3587, 5
      %v4403 = vsel %vm1241, %v4401, %v4402
      %v4404 = vrot.slane %v4402, 4
      %v4405 = vrot.slane %v3588, 5
      %v4406 = vsel %vm1241, %v4404, %v4405
      %v4407 = vrot.slane %v4301, 5
      %v4408 = vrot.slane %v4407, 4
      %v4409 = vrot.slane %v3590, 5
      %v4410 = vsel %vm1241, %v4408, %v4409
      %v4411 = vrot.slane %v4409, 4
      %v4412 = vrot.slane %v3591, 5
      %v4413 = vsel %vm1241, %v4411, %v4412
      %v4414 = vrot.slane %v4302, 5
      %v4415 = vrot.slane %v4414, 4
      %v4416 = vrot.slane %v3593, 5
      %v4417 = vsel %vm1241, %v4415, %v4416
      %v4418 = vrot.slane %v4416, 4
      %v4419 = vrot.slane %v3594, 5
      %v4420 = vsel %vm1241, %v4418, %v4419
      %v4421 = vrot.slane %v4303, 5
      %v4422 = vrot.slane %v4421, 4
      %v4423 = vrot.slane %v3596, 5
      %v4424 = vsel %vm1241, %v4422, %v4423
      %v4425 = vrot.slane %v4423, 4
      %v4426 = vrot.slane %v3597, 5
      %v4427 = vsel %vm1241, %v4425, %v4426
      %v4428 = vrot.slane %v4304, 5
      %v4429 = vrot.slane %v4428, 4
      %v4430 = vrot.slane %v3599, 5
      %v4431 = vsel %vm1241, %v4429, %v4430
      %v4432 = vrot.slane %v4430, 4
      %v4433 = vrot.slane %v3600, 5
      %v4434 = vsel %vm1241, %v4432, %v4433
      %v4435 = vrot.slane %v4305, 5
      %v4436 = vrot.slane %v4435, 4
      %v4437 = vrot.slane %v3602, 5
      %v4438 = vsel %vm1241, %v4436, %v4437
      %v4439 = vrot.slane %v4437, 4
      %v4440 = vrot.slane %v3603, 5
      %v4441 = vsel %vm1241, %v4439, %v4440
      %v4442 = vrot.slane %v4306, 5
      %v4443 = vrot.slane %v4442, 4
      %v4444 = vrot.slane %v3605, 5
      %v4445 = vsel %vm1241, %v4443, %v4444
      %v4446 = vrot.slane %v4444, 4
      %v4447 = vrot.slane %v3606, 5
      %v4448 = vsel %vm1241, %v4446, %v4447
      %v4449 = vrot.slane %v4307, 5
      %v4450 = vrot.slane %v4449, 4
      %v4451 = vrot.slane %v3608, 5
      %v4452 = vsel %vm1241, %v4450, %v4451
      %v4453 = vrot.slane %v4451, 4
      %v4454 = vrot.slane %v3609, 5
      %v4455 = vsel %vm1241, %v4453, %v4454
      %v4456 = vrot.slane %v4308, 5
      %v4457 = vrot.slane %v4456, 4
      %v4458 = vrot.slane %v3611, 5
      %v4459 = vsel %vm1241, %v4457, %v4458
      %v4460 = vrot.slane %v4458, 4
      %v4461 = vrot.slane %v3612, 5
      %v4462 = vsel %vm1241, %v4460, %v4461
      %v4463 = vrot.slane %v4309, 5
      %v4464 = vrot.slane %v4463, 4
      %v4465 = vrot.slane %v3614, 5
      %v4466 = vsel %vm1241, %v4464, %v4465
      %v4467 = vrot.slane %v4465, 4
      %v4468 = vrot.slane %v3615, 5
      %v4469 = vsel %vm1241, %v4467, %v4468
      %s4470 = scalar_lea.vmem %s1, 16
      %v4471 = vld [vmem:[%s4470] sm:$0x3]
      %v4472 = vunpack.c.l.b16 %v4361
      %v4473 = vunpack.c.l.b16 %v4364
      %v4474 = vunpack.c.l.b16 %v4368
      %v4475 = vunpack.c.l.b16 %v4371
      %v4476 = vunpack.c.l.b16 %v4375
      %v4477 = vunpack.c.l.b16 %v4378
      %v4478 = vunpack.c.l.b16 %v4382
      %v4479 = vunpack.c.l.b16 %v4385
      %v4480 = vunpack.c.l.b16 %v4389
      %v4481 = vunpack.c.l.b16 %v4392
      %v4482 = vunpack.c.l.b16 %v4396
      %v4483 = vunpack.c.l.b16 %v4399
      %v4484 = vunpack.c.l.b16 %v4403
      %v4485 = vunpack.c.l.b16 %v4406
      %v4486 = vunpack.c.l.b16 %v4410
      %v4487 = vunpack.c.l.b16 %v4413
      %v4488 = vunpack.c.l.b16 %v4417
      %v4489 = vunpack.c.l.b16 %v4420
      %v4490 = vunpack.c.l.b16 %v4424
      %v4491 = vunpack.c.l.b16 %v4427
      %v4492 = vunpack.c.l.b16 %v4431
      %v4493 = vunpack.c.l.b16 %v4434
      %v4494 = vunpack.c.l.b16 %v4438
      %v4495 = vunpack.c.l.b16 %v4441
      %v4496 = vunpack.c.l.b16 %v4445
      %v4497 = vunpack.c.l.b16 %v4448
      %v4498 = vunpack.c.l.b16 %v4452
      %v4499 = vunpack.c.l.b16 %v4455
      %v4500 = vunpack.c.l.b16 %v4459
      %v4501 = vunpack.c.l.b16 %v4462
      %v4502 = vunpack.c.l.b16 %v4466
      %v4503 = vunpack.c.l.b16 %v4469
      %v4504 = vpack.c.b16 %v4473, %v4472
      %v4505 = vpack.c.b16 %v4475, %v4474
      %v4506 = vpack.c.b16 %v4477, %v4476
      %v4507 = vpack.c.b16 %v4479, %v4478
      %v4508 = vpack.c.b16 %v4481, %v4480
      %v4509 = vpack.c.b16 %v4483, %v4482
      %v4510 = vpack.c.b16 %v4485, %v4484
      %v4511 = vpack.c.b16 %v4487, %v4486
      %v4512 = vpack.c.b16 %v4489, %v4488
      %v4513 = vpack.c.b16 %v4491, %v4490
      %v4514 = vpack.c.b16 %v4493, %v4492
      %v4515 = vpack.c.b16 %v4495, %v4494
      %v4516 = vpack.c.b16 %v4497, %v4496
      %v4517 = vpack.c.b16 %v4499, %v4498
      %v4518 = vpack.c.b16 %v4501, %v4500
      %v4519 = vpack.c.b16 %v4503, %v4502
      %v4521 = vsel %vm685, %v4504, 0
      %v4524 = vsel %vm685, %v4505, 0
      %v4527 = vsel %vm685, %v4506, 0
      %v4530 = vsel %vm685, %v4507, 0
      %v4533 = vsel %vm685, %v4508, 0
      %v4536 = vsel %vm685, %v4509, 0
      %v4539 = vsel %vm685, %v4510, 0
      %v4542 = vsel %vm685, %v4511, 0
      %v4545 = vsel %vm685, %v4512, 0
      %v4548 = vsel %vm685, %v4513, 0
      %v4551 = vsel %vm685, %v4514, 0
      %v4554 = vsel %vm685, %v4515, 0
      %v4557 = vsel %vm685, %v4516, 0
      %v4560 = vsel %vm685, %v4517, 0
      %v4563 = vsel %vm685, %v4518, 0
      %v4566 = vsel %vm685, %v4519, 0
      %v4569 = vsel %vm734, %v4471, 0
      %4571 = vmatprep.subr.bf16.mxu0 0
      %4572 = vmatpush1.bf16.msra.mxu0 0
      %4573 = vmatprep.subr.bf16.mxu0 0
      %4574 = vmatpush1.bf16.msra.mxu0 0
      %4575 = vmatprep.subr.bf16.mxu0 0
      %4576 = vmatpush1.bf16.msra.mxu0 0
      %4577 = vmatprep.subr.bf16.mxu0 0
      %4578 = vmatpush1.bf16.msra.mxu0 0
      %4579 = vmatprep.subr.bf16.mxu0 0
      %4580 = vmatpush1.bf16.msra.mxu0 0
      %4581 = vmatprep.subr.bf16.mxu0 0
      %4582 = vmatpush1.bf16.msra.mxu0 0
      %4583 = vmatprep.subr.bf16.mxu0 0
      %4584 = vmatpush1.bf16.msra.mxu0 0
      %4585 = vmatprep.subr.bf16.mxu0 0
      %4586 = vmatpush1.bf16.msra.mxu0 %v4569
      %4587 = vmatprep.subr.bf16.mxu0 0
      %4588 = vmatpush2.bf16.msra.mxu0 0
      %4589 = vmatprep.subr.bf16.mxu0 0
      %4590 = vmatpush2.bf16.msra.mxu0 0
      %4591 = vmatprep.subr.bf16.mxu0 0
      %4592 = vmatpush2.bf16.msra.mxu0 0
      %4593 = vmatprep.subr.bf16.mxu0 0
      %4594 = vmatpush2.bf16.msra.mxu0 0
      %4595 = vmatprep.subr.bf16.mxu0 0
      %4596 = vmatpush2.bf16.msra.mxu0 0
      %4597 = vmatprep.subr.bf16.mxu0 0
      %4598 = vmatpush2.bf16.msra.mxu0 0
      %4599 = vmatprep.subr.bf16.mxu0 0
      %4600 = vmatpush2.bf16.msra.mxu0 0
      %4601 = vmatprep.subr.bf16.mxu0 0
      %4602 = vmatpush2.bf16.msra.mxu0 0
      %4603 = vmatprep.mubr.bf16.mxu0 0
      %4604 = vmatmul.mubr.bf16.gmra.mxu0 %v4521
      %v4605 = vpop.f32.mrf.mxu0
      %v4606 = vadd.f32 0.0, %v4605
      %v4607 = vpop.f32.mrf.mxu0
      %v4608 = vpop.f32.mrf.mxu0
      %v4609 = vadd.f32 0.0, %v4608
      %v4610 = vpop.f32.mrf.mxu0
      %4611 = vmatprep.mubr.bf16.mxu0 0
      %4612 = vmatmul.mubr.bf16.gmra.mxu0 %v4524
      %v4613 = vpop.f32.mrf.mxu0
      %v4614 = vadd.f32 0.0, %v4613
      %v4615 = vpop.f32.mrf.mxu0
      %v4616 = vpop.f32.mrf.mxu0
      %v4617 = vadd.f32 0.0, %v4616
      %v4618 = vpop.f32.mrf.mxu0
      %4619 = vmatprep.mubr.bf16.mxu0 0
      %4620 = vmatmul.mubr.bf16.gmra.mxu0 %v4527
      %v4621 = vpop.f32.mrf.mxu0
      %v4622 = vadd.f32 0.0, %v4621
      %v4623 = vpop.f32.mrf.mxu0
      %v4624 = vpop.f32.mrf.mxu0
      %v4625 = vadd.f32 0.0, %v4624
      %v4626 = vpop.f32.mrf.mxu0
      %4627 = vmatprep.mubr.bf16.mxu0 0
      %4628 = vmatmul.mubr.bf16.gmra.mxu0 %v4530
      %v4629 = vpop.f32.mrf.mxu0
      %v4630 = vadd.f32 0.0, %v4629
      %v4631 = vpop.f32.mrf.mxu0
      %v4632 = vpop.f32.mrf.mxu0
      %v4633 = vadd.f32 0.0, %v4632
      %v4634 = vpop.f32.mrf.mxu0
      %4635 = vmatprep.mubr.bf16.mxu0 0
      %4636 = vmatmul.mubr.bf16.gmra.mxu0 %v4533
      %v4637 = vpop.f32.mrf.mxu0
      %v4638 = vadd.f32 0.0, %v4637
      %v4639 = vpop.f32.mrf.mxu0
      %v4640 = vpop.f32.mrf.mxu0
      %v4641 = vadd.f32 0.0, %v4640
      %v4642 = vpop.f32.mrf.mxu0
      %4643 = vmatprep.mubr.bf16.mxu0 0
      %4644 = vmatmul.mubr.bf16.gmra.mxu0 %v4536
      %v4645 = vpop.f32.mrf.mxu0
      %v4646 = vadd.f32 0.0, %v4645
      %v4647 = vpop.f32.mrf.mxu0
      %v4648 = vpop.f32.mrf.mxu0
      %v4649 = vadd.f32 0.0, %v4648
      %v4650 = vpop.f32.mrf.mxu0
      %4651 = vmatprep.mubr.bf16.mxu0 0
      %4652 = vmatmul.mubr.bf16.gmra.mxu0 %v4539
      %v4653 = vpop.f32.mrf.mxu0
      %v4654 = vadd.f32 0.0, %v4653
      %v4655 = vpop.f32.mrf.mxu0
      %v4656 = vpop.f32.mrf.mxu0
      %v4657 = vadd.f32 0.0, %v4656
      %v4658 = vpop.f32.mrf.mxu0
      %4659 = vmatprep.mubr.bf16.mxu0 0
      %4660 = vmatmul.mubr.bf16.gmra.mxu0 %v4542
      %v4661 = vpop.f32.mrf.mxu0
      %v4662 = vadd.f32 0.0, %v4661
      %v4663 = vpop.f32.mrf.mxu0
      %v4664 = vpop.f32.mrf.mxu0
      %v4665 = vadd.f32 0.0, %v4664
      %v4666 = vpop.f32.mrf.mxu0
      %4667 = vmatprep.mubr.bf16.mxu0 0
      %4668 = vmatmul.mubr.bf16.gmra.mxu0 %v4545
      %v4669 = vpop.f32.mrf.mxu0
      %v4670 = vadd.f32 0.0, %v4669
      %v4671 = vpop.f32.mrf.mxu0
      %v4672 = vpop.f32.mrf.mxu0
      %v4673 = vadd.f32 0.0, %v4672
      %v4674 = vpop.f32.mrf.mxu0
      %4675 = vmatprep.mubr.bf16.mxu0 0
      %4676 = vmatmul.mubr.bf16.gmra.mxu0 %v4548
      %v4677 = vpop.f32.mrf.mxu0
      %v4678 = vadd.f32 0.0, %v4677
      %v4679 = vpop.f32.mrf.mxu0
      %v4680 = vpop.f32.mrf.mxu0
      %v4681 = vadd.f32 0.0, %v4680
      %v4682 = vpop.f32.mrf.mxu0
      %4683 = vmatprep.mubr.bf16.mxu0 0
      %4684 = vmatmul.mubr.bf16.gmra.mxu0 %v4551
      %v4685 = vpop.f32.mrf.mxu0
      %v4686 = vadd.f32 0.0, %v4685
      %v4687 = vpop.f32.mrf.mxu0
      %v4688 = vpop.f32.mrf.mxu0
      %v4689 = vadd.f32 0.0, %v4688
      %v4690 = vpop.f32.mrf.mxu0
      %4691 = vmatprep.mubr.bf16.mxu0 0
      %4692 = vmatmul.mubr.bf16.gmra.mxu0 %v4554
      %v4693 = vpop.f32.mrf.mxu0
      %v4694 = vadd.f32 0.0, %v4693
      %v4695 = vpop.f32.mrf.mxu0
      %v4696 = vpop.f32.mrf.mxu0
      %v4697 = vadd.f32 0.0, %v4696
      %v4698 = vpop.f32.mrf.mxu0
      %4699 = vmatprep.mubr.bf16.mxu0 0
      %4700 = vmatmul.mubr.bf16.gmra.mxu0 %v4557
      %v4701 = vpop.f32.mrf.mxu0
      %v4702 = vadd.f32 0.0, %v4701
      %v4703 = vpop.f32.mrf.mxu0
      %v4704 = vpop.f32.mrf.mxu0
      %v4705 = vadd.f32 0.0, %v4704
      %v4706 = vpop.f32.mrf.mxu0
      %4707 = vmatprep.mubr.bf16.mxu0 0
      %4708 = vmatmul.mubr.bf16.gmra.mxu0 %v4560
      %v4709 = vpop.f32.mrf.mxu0
      %v4710 = vadd.f32 0.0, %v4709
      %v4711 = vpop.f32.mrf.mxu0
      %v4712 = vpop.f32.mrf.mxu0
      %v4713 = vadd.f32 0.0, %v4712
      %v4714 = vpop.f32.mrf.mxu0
      %4715 = vmatprep.mubr.bf16.mxu0 0
      %4716 = vmatmul.mubr.bf16.gmra.mxu0 %v4563
      %v4717 = vpop.f32.mrf.mxu0
      %v4718 = vadd.f32 0.0, %v4717
      %v4719 = vpop.f32.mrf.mxu0
      %v4720 = vpop.f32.mrf.mxu0
      %v4721 = vadd.f32 0.0, %v4720
      %v4722 = vpop.f32.mrf.mxu0
      %4723 = vmatprep.mubr.bf16.mxu0 0
      %4724 = vmatmul.mubr.bf16.gmra.mxu0 %v4566
      %v4725 = vpop.f32.mrf.mxu0
      %v4726 = vadd.f32 0.0, %v4725
      %v4727 = vpop.f32.mrf.mxu0
      %v4728 = vpop.f32.mrf.mxu0
      %v4729 = vadd.f32 0.0, %v4728
      %v4730 = vpop.f32.mrf.mxu0
      %4731 = vdwg.mxu0
      %v4732 = vadd.f32 %v4262, %v4606
      %v4733 = vadd.f32 %v4263, %v4609
      %v4734 = vadd.f32 %v4264, %v4614
      %v4735 = vadd.f32 %v4265, %v4617
      %v4736 = vadd.f32 %v4266, %v4622
      %v4737 = vadd.f32 %v4267, %v4625
      %v4738 = vadd.f32 %v4268, %v4630
      %v4739 = vadd.f32 %v4269, %v4633
      %v4740 = vadd.f32 %v4270, %v4638
      %v4741 = vadd.f32 %v4271, %v4641
      %v4742 = vadd.f32 %v4272, %v4646
      %v4743 = vadd.f32 %v4273, %v4649
      %v4744 = vadd.f32 %v4274, %v4654
      %v4745 = vadd.f32 %v4275, %v4657
      %v4746 = vadd.f32 %v4276, %v4662
      %v4747 = vadd.f32 %v4277, %v4665
      %v4748 = vadd.f32 %v4278, %v4670
      %v4749 = vadd.f32 %v4279, %v4673
      %v4750 = vadd.f32 %v4280, %v4678
      %v4751 = vadd.f32 %v4281, %v4681
      %v4752 = vadd.f32 %v4282, %v4686
      %v4753 = vadd.f32 %v4283, %v4689
      %v4754 = vadd.f32 %v4284, %v4694
      %v4755 = vadd.f32 %v4285, %v4697
      %v4756 = vadd.f32 %v4286, %v4702
      %v4757 = vadd.f32 %v4287, %v4705
      %v4758 = vadd.f32 %v4288, %v4710
      %v4759 = vadd.f32 %v4289, %v4713
      %v4760 = vadd.f32 %v4290, %v4718
      %v4761 = vadd.f32 %v4291, %v4721
      %v4762 = vadd.f32 %v4292, %v4726
      %v4763 = vadd.f32 %v4293, %v4729
      %v4764 = vld [vmem:[%s2] sm:$0x1]
      %v4766 = vlaneseq
      %v4767 = vshrl.u32 %v4766, 7
      %v4768 = vsub.s32 0, %v4767
      %v4769 = vrot.slane %v4764, %v4768
      %v4771 = vadd.f32 %v4732, %v4769
      %v4772 = vadd.f32 %v4733, %v4769
      %v4773 = vadd.f32 %v4734, %v4769
      %v4774 = vadd.f32 %v4735, %v4769
      %v4775 = vadd.f32 %v4736, %v4769
      %v4776 = vadd.f32 %v4737, %v4769
      %v4777 = vadd.f32 %v4738, %v4769
      %v4778 = vadd.f32 %v4739, %v4769
      %v4779 = vadd.f32 %v4740, %v4769
      %v4780 = vadd.f32 %v4741, %v4769
      %v4781 = vadd.f32 %v4742, %v4769
      %v4782 = vadd.f32 %v4743, %v4769
      %v4783 = vadd.f32 %v4744, %v4769
      %v4784 = vadd.f32 %v4745, %v4769
      %v4785 = vadd.f32 %v4746, %v4769
      %v4786 = vadd.f32 %v4747, %v4769
      %v4787 = vadd.f32 %v4748, %v4769
      %v4788 = vadd.f32 %v4749, %v4769
      %v4789 = vadd.f32 %v4750, %v4769
      %v4790 = vadd.f32 %v4751, %v4769
      %v4791 = vadd.f32 %v4752, %v4769
      %v4792 = vadd.f32 %v4753, %v4769
      %v4793 = vadd.f32 %v4754, %v4769
      %v4794 = vadd.f32 %v4755, %v4769
      %v4795 = vadd.f32 %v4756, %v4769
      %v4796 = vadd.f32 %v4757, %v4769
      %v4797 = vadd.f32 %v4758, %v4769
      %v4798 = vadd.f32 %v4759, %v4769
      %v4799 = vadd.f32 %v4760, %v4769
      %v4800 = vadd.f32 %v4761, %v4769
      %v4801 = vadd.f32 %v4762, %v4769
      %v4802 = vadd.f32 %v4763, %v4769
      %v4803 = vmax.f32 %v4771, 0.0
      %v4804 = vmax.f32 %v4772, 0.0
      %v4805 = vmax.f32 %v4773, 0.0
      %v4806 = vmax.f32 %v4774, 0.0
      %v4807 = vmax.f32 %v4775, 0.0
      %v4808 = vmax.f32 %v4776, 0.0
      %v4809 = vmax.f32 %v4777, 0.0
      %v4810 = vmax.f32 %v4778, 0.0
      %v4811 = vmax.f32 %v4779, 0.0
      %v4812 = vmax.f32 %v4780, 0.0
      %v4813 = vmax.f32 %v4781, 0.0
      %v4814 = vmax.f32 %v4782, 0.0
      %v4815 = vmax.f32 %v4783, 0.0
      %v4816 = vmax.f32 %v4784, 0.0
      %v4817 = vmax.f32 %v4785, 0.0
      %v4818 = vmax.f32 %v4786, 0.0
      %v4819 = vmax.f32 %v4787, 0.0
      %v4820 = vmax.f32 %v4788, 0.0
      %v4821 = vmax.f32 %v4789, 0.0
      %v4822 = vmax.f32 %v4790, 0.0
      %v4823 = vmax.f32 %v4791, 0.0
      %v4824 = vmax.f32 %v4792, 0.0
      %v4825 = vmax.f32 %v4793, 0.0
      %v4826 = vmax.f32 %v4794, 0.0
      %v4827 = vmax.f32 %v4795, 0.0
      %v4828 = vmax.f32 %v4796, 0.0
      %v4829 = vmax.f32 %v4797, 0.0
      %v4830 = vmax.f32 %v4798, 0.0
      %v4831 = vmax.f32 %v4799, 0.0
      %v4832 = vmax.f32 %v4800, 0.0
      %v4833 = vmax.f32 %v4801, 0.0
      %v4834 = vmax.f32 %v4802, 0.0
      %vm4835 = vcmask 64512
      %4836 = vst.msk [vmem:[%s192] sm:$0xff] %vm4835, %v4803
      %4837 = vst.msk [vmem:[%s192 + $0x8] sm:$0xff] %vm4835, %v4804
      %4838 = vst.msk [vmem:[%s192 + $0x10] sm:$0xff] %vm4835, %v4805
      %4839 = vst.msk [vmem:[%s192 + $0x18] sm:$0xff] %vm4835, %v4806
      %4840 = vst.msk [vmem:[%s192 + $0x20] sm:$0xff] %vm4835, %v4807
      %4841 = vst.msk [vmem:[%s192 + $0x28] sm:$0xff] %vm4835, %v4808
      %4842 = vst.msk [vmem:[%s192 + $0x30] sm:$0xff] %vm4835, %v4809
      %4843 = vst.msk [vmem:[%s192 + $0x38] sm:$0xff] %vm4835, %v4810
      %4844 = vst.msk [vmem:[%s192 + $0x40] sm:$0xff] %vm4835, %v4811
      %4845 = vst.msk [vmem:[%s192 + $0x48] sm:$0xff] %vm4835, %v4812
      %4846 = vst.msk [vmem:[%s192 + $0x50] sm:$0xff] %vm4835, %v4813
      %4847 = vst.msk [vmem:[%s192 + $0x58] sm:$0xff] %vm4835, %v4814
      %4848 = vst.msk [vmem:[%s192 + $0x60] sm:$0xff] %vm4835, %v4815
      %4849 = vst.msk [vmem:[%s192 + $0x68] sm:$0xff] %vm4835, %v4816
      %4850 = vst.msk [vmem:[%s192 + $0x70] sm:$0xff] %vm4835, %v4817
      %4851 = vst.msk [vmem:[%s192 + $0x78] sm:$0xff] %vm4835, %v4818
      %4852 = vst.msk [vmem:[%s192 + $0x80] sm:$0xff] %vm4835, %v4819
      %4853 = vst.msk [vmem:[%s192 + $0x88] sm:$0xff] %vm4835, %v4820
      %4854 = vst.msk [vmem:[%s192 + $0x90] sm:$0xff] %vm4835, %v4821
      %4855 = vst.msk [vmem:[%s192 + $0x98] sm:$0xff] %vm4835, %v4822
      %4856 = vst.msk [vmem:[%s192 + $0xa0] sm:$0xff] %vm4835, %v4823
      %4857 = vst.msk [vmem:[%s192 + $0xa8] sm:$0xff] %vm4835, %v4824
      %4858 = vst.msk [vmem:[%s192 + $0xb0] sm:$0xff] %vm4835, %v4825
      %4859 = vst.msk [vmem:[%s192 + $0xb8] sm:$0xff] %vm4835, %v4826
      %4860 = vst.msk [vmem:[%s192 + $0xc0] sm:$0xff] %vm4835, %v4827
      %4861 = vst.msk [vmem:[%s192 + $0xc8] sm:$0xff] %vm4835, %v4828
      %4862 = vst.msk [vmem:[%s192 + $0xd0] sm:$0xff] %vm4835, %v4829
      %4863 = vst.msk [vmem:[%s192 + $0xd8] sm:$0xff] %vm4835, %v4830
      %4864 = vst.msk [vmem:[%s192 + $0xe0] sm:$0xff] %vm4835, %v4831
      %4865 = vst.msk [vmem:[%s192 + $0xe8] sm:$0xff] %vm4835, %v4832
      %4866 = vst.msk [vmem:[%s192 + $0xf0] sm:$0xff] %vm4835, %v4833
      %4867 = vst.msk [vmem:[%s192 + $0xf8] sm:$0xff] %vm4835, %v4834
      %s4868 = smul.u32 32, %s19
      %p4869 = scmp.lt.s32.totalorder %s18, 1
      %s4870 = scalar_select %p4869, %s18, 1
      %p4871 = scmp.lt.s32.totalorder %s4868, 31
      %s4872 = scalar_select %p4871, %s4868, 31
      %s4873 = smul.addr %s4870, 32
      %s4874 = sadd.s32 %s4872, %s4873
      %s4875 = smul.addr %s4874, 8
      %s4876 = scalar_lea.vmem %s3, %s4875
      // Predicated region
      $region33: #{mobilenetv1_block.1} parent=31 // pred_check
        %p4877 = pneg %p114
      $region34: #{mobilenetv1_block.1} parent=31 // pred_check_branch
        %4879 = sbr.rel (%p4877) target = $region36
      $region35: #{mobilenetv1_block.1} parent=31 // pred_region
        %s4880 = smul.u32 32, %s19
      $region36: #{mobilenetv1_block.1} parent=31 // pred_fallthru
        _
    $region32: #{mobilenetv1_block.1} parent=5 // pred_fallthru
      _
    %p4881 = scmp.le.s32.totalorder 2, %s9
    // Predicated region
    $region37: #{mobilenetv1_block.1} parent=5 // pred_check
      %p4882 = pneg %p4881
    $region38: #{mobilenetv1_block.1} parent=5 // pred_check_branch
      %4884 = sbr.rel (%p4882) target = $region40
    $region39: #{mobilenetv1_block.1} parent=5 // pred_region
      %s4885 = ssub.s32 %s9, 2
      // Predicated region
      $region41: #{mobilenetv1_block.1} parent=39 // pred_check
        %p4886 = pneg %p120
      $region42: #{mobilenetv1_block.1} parent=39 // pred_check_branch
        %4888 = sbr.rel (%p4886) target = $region44
      $region43: #{mobilenetv1_block.1} parent=39 // pred_region
        %s4889 = smul.u32 32, %s21
        %p4890 = scmp.lt.s32.totalorder %s20, 1
        %s4891 = scalar_select %p4890, %s20, 1
        %p4892 = scmp.lt.s32.totalorder %s4889, 31
        %s4893 = scalar_select %p4892, %s4889, 31
        %s4894 = smul.addr %s4891, 32
        %s4895 = sadd.s32 %s4893, %s4894
        %s4896 = smul.addr %s4895, 8
        %s4897 = scalar_lea.vmem %s3, %s4896
      $region44: #{mobilenetv1_block.1} parent=39 // pred_fallthru
        _
    $region40: #{mobilenetv1_block.1} parent=5 // pred_fallthru
      _
  $region6: #{mobilenetv1_block.1} parent=0 // loop_footer
    %s13 = sadd.s32 1, %s9
  $region7: #{mobilenetv1_block.1} parent=0 // loop_footer_branch
    %8 = sbr.rel target = $region3
  $region8: #{mobilenetv1_block.1} parent=0 // loop_exit
    _

</llo_original>
